<compile_context>
chip_gen: v6e
topology: v6e:2x2x1
jax: 0.10.0
libtpu: 0.0.40
codegen_flags: <defaults>
</compile_context>

<pallas_src>
import jax
import jax.numpy as jnp
from jax.experimental import pallas as pl
from jax.experimental.pallas import tpu as pltpu

NUM_CYLINDERS = 32
FEAT_IN = 512        # flattened 8x8x8 voxel grid
HIDDEN = 512         # encoder/decoder feature width (Linear(512, ...) in the module)
N_QUERY = 128        # query points (multiple of 128 keeps the SDF output lane-dense)
WIDE = 128           # lane width used to keep the tiny-batch MLP dots in standard tiles

# per-parameter affine, baked into the kernel as constants
MULT = (1.0, 1.0, 1.0, 2.0, 2.0, 2.0, 0.1, 0.1)
ADD = (-0.8, -0.8, -0.8, -1.0, -1.0, -1.0, 0.1, 0.1)


# ---------------------------------------------------------------------------
# Fused kernel: MLP -> sigmoid/affine -> cylinder params (32,8) + SDF (32,N)
# ---------------------------------------------------------------------------
def _fused_kernel(v_ref, q_ref, w1_ref, b1_ref, w2_ref, b2_ref, w3_ref, b3_ref,
                  sdf_ref, par_ref):
    f32 = jnp.float32
    bf16 = jnp.bfloat16
    K = NUM_CYLINDERS

    # ---- encoder / decoder stand-in MLP + feature_mapper (column oriented) ----
    # Activations are carried as (features, WIDE) with WIDE identical lane copies so
    # every matmul is a standard (*, 512) x (512, 128) MXU op; the extra lanes are free
    # at this scale and the params naturally come out with cylinders on sublanes.
    vb = jnp.broadcast_to(v_ref[...].astype(bf16), (FEAT_IN, WIDE))
    h = jnp.dot(w1_ref[...], vb, preferred_element_type=f32) + b1_ref[...]
    h = jnp.maximum(h, 0.0)
    h = jnp.dot(w2_ref[...], h.astype(bf16), preferred_element_type=f32) + b2_ref[...]
    h = jnp.maximum(h, 0.0)
    p = jnp.dot(w3_ref[...], h.astype(bf16), preferred_element_type=f32) + b3_ref[...]
    p = jax.nn.sigmoid(p)                       # (8*K, WIDE) f32, all lanes identical

    # sigmoid -> per-parameter affine with baked-in constants; one column per parameter.
    def group(j):
        return p[j * K:(j + 1) * K, 0:1] * MULT[j] + ADD[j]     # (K, 1)

    cx, cy, cz = group(0), group(1), group(2)
    ax, ay, az = group(3), group(4), group(5)
    rr, hh = group(6), group(7)

    # ---- cylinder parameter output (K, 8) assembled via lane-index selects ----
    lane = jax.lax.broadcasted_iota(jnp.int32, (K, 8), 1)
    pm = jnp.zeros((K, 8), f32)
    for j, col in enumerate((cx, cy, cz, ax, ay, az, rr, hh)):
        pm = jnp.where(lane == j, jnp.broadcast_to(col, (K, 8)), pm)
    par_ref[...] = pm

    # ---- capped-cylinder SDF, lane-dense: K on sublanes, N on lanes ----
    qx = q_ref[0:1, :]                          # (1, N)
    qy = q_ref[1:2, :]
    qz = q_ref[2:3, :]

    inv_norm = jax.lax.rsqrt(ax * ax + ay * ay + az * az + 1e-12)
    axn, ayn, azn = ax * inv_norm, ay * inv_norm, az * inv_norm

    vx = qx - cx                                # (K, N)
    vy = qy - cy
    vz = qz - cz
    proj = vx * axn + vy * ayn + vz * azn       # signed distance along axis
    px = vx - proj * axn
    py = vy - proj * ayn
    pz = vz - proj * azn
    ssq = px * px + py * py + pz * pz
    dist = ssq * jax.lax.rsqrt(ssq + 1e-12)     # sqrt via EUP rsqrt (free slot)

    sdf_ref[...] = jnp.maximum(dist - rr, jnp.abs(proj) - 0.5 * hh)


# ---------------------------------------------------------------------------
# Wrapper
# ---------------------------------------------------------------------------
def pack_params(params):
    """One-time repack of PyTorch-layout weights into kernel layout (bf16, transposed)."""
    w1, b1, w2, b2, w3, b3 = params
    k8 = 8 * NUM_CYLINDERS
    w1t = w1.T.astype(jnp.bfloat16)                              # (512, 512)
    w2t = w2.T.astype(jnp.bfloat16)                              # (512, 512)
    # reorder feature_mapper so row j*K + k  ->  original output unit k*8 + j
    w3c = (w3.T.reshape(NUM_CYLINDERS, 8, HIDDEN)
               .transpose(1, 0, 2)
               .reshape(k8, HIDDEN)
               .astype(jnp.bfloat16))                            # (256, 512)
    b1c = b1.reshape(HIDDEN, 1).astype(jnp.float32)
    b2c = b2.reshape(HIDDEN, 1).astype(jnp.float32)
    b3c = b3.reshape(NUM_CYLINDERS, 8).T.reshape(k8, 1).astype(jnp.float32)
    return (w1t, b1c, w2t, b2c, w3c, b3c)


def cylinder_net_forward(voxel_data, query_points, packed):
    """Pallas implementation of CylinderNet.forward (single fused kernel)."""
    w1t, b1c, w2t, b2c, w3c, b3c = packed
    n = query_points.shape[0]
    k8 = 8 * NUM_CYLINDERS

    v_col = voxel_data.reshape(FEAT_IN, 1).astype(jnp.float32)   # (512, 1)
    q_t = query_points.astype(jnp.float32).T                     # (3, N) -> N on lanes

    flops = 2 * WIDE * HIDDEN * (FEAT_IN + HIDDEN + k8) + 32 * NUM_CYLINDERS * n
    transcendentals = k8 * WIDE + 2 * NUM_CYLINDERS * n
    bytes_accessed = (w1t.size + w2t.size + w3c.size) * 2 \
        + (b1c.size + b2c.size + b3c.size + v_col.size + q_t.size) * 4 \
        + (NUM_CYLINDERS * n + NUM_CYLINDERS * 8) * 4
    cost = pl.CostEstimate(flops=flops, transcendentals=transcendentals,
                           bytes_accessed=bytes_accessed)

    vmem = pl.BlockSpec(memory_space=pltpu.MemorySpace.VMEM)
    sdf_kn, cyl_params = pl.pallas_call(
        _fused_kernel,
        out_shape=(jax.ShapeDtypeStruct((NUM_CYLINDERS, n), jnp.float32),
                   jax.ShapeDtypeStruct((NUM_CYLINDERS, 8), jnp.float32)),
        in_specs=[vmem] * 8,
        out_specs=(vmem, vmem),
        cost_estimate=cost,
    )(v_col, q_t, w1t, b1c, w2t, b2c, w3c, b3c)

    # keep the original (num_points, num_cylinders) convention for the returned SDF
    return sdf_kn.T, cyl_params


# ---------------------------------------------------------------------------
# Pure-JAX reference (mirrors the bf16 weight/activation casts of the kernel)
# ---------------------------------------------------------------------------
def _reference_forward(voxel_data, query_points, params):
    w1, b1, w2, b2, w3, b3 = params
    bf16 = jnp.bfloat16
    v = voxel_data.reshape(1, FEAT_IN)
    h = jnp.dot(v.astype(bf16), w1.astype(bf16), preferred_element_type=jnp.float32) + b1
    h = jnp.maximum(h, 0.0)
    h = jnp.dot(h.astype(bf16), w2.astype(bf16), preferred_element_type=jnp.float32) + b2
    h = jnp.maximum(h, 0.0)
    z = jnp.dot(h.astype(bf16), w3.astype(bf16), preferred_element_type=jnp.float32) + b3
    p = jax.nn.sigmoid(z).reshape(NUM_CYLINDERS, 8)
    p = p * jnp.array(MULT, jnp.float32) + jnp.array(ADD, jnp.float32)
    c, a, r, ht = p[:, :3], p[:, 3:6], p[:, 6], p[:, 7]
    a = a / jnp.sqrt(jnp.sum(a * a, axis=-1, keepdims=True) + 1e-12)
    v3 = query_points[:, None, :] - c[None, :, :]
    proj = jnp.sum(v3 * a[None, :, :], axis=-1)
    perp = v3 - proj[..., None] * a[None, :, :]
    dist = jnp.sqrt(jnp.sum(perp * perp, axis=-1))
    sdf = jnp.maximum(dist - r[None, :], jnp.abs(proj) - ht[None, :] * 0.5)
    return sdf, p


def _init_params(key):
    ks = jax.random.split(key, 6)
    k8 = NUM_CYLINDERS * 8
    w1 = jax.random.normal(ks[0], (FEAT_IN, HIDDEN), jnp.float32) / jnp.sqrt(FEAT_IN)
    b1 = jax.random.normal(ks[1], (1, HIDDEN), jnp.float32) * 0.01
    w2 = jax.random.normal(ks[2], (HIDDEN, HIDDEN), jnp.float32) / jnp.sqrt(HIDDEN)
    b2 = jax.random.normal(ks[3], (1, HIDDEN), jnp.float32) * 0.01
    w3 = jax.random.normal(ks[4], (HIDDEN, k8), jnp.float32) / jnp.sqrt(HIDDEN)
    b3 = jax.random.normal(ks[5], (1, k8), jnp.float32) * 0.01
    return (w1, b1, w2, b2, w3, b3)


if __name__ == "__main__":
    key = jax.random.PRNGKey(0)
    k_vox, k_pts, k_par = jax.random.split(key, 3)

    voxel_data = jax.random.uniform(k_vox, (1, 1, 8, 8, 8), jnp.float32)   # NCDHW
    query_points = jax.random.uniform(k_pts, (N_QUERY, 3), jnp.float32) * 2.0 - 1.0
    params = _init_params(k_par)
    packed = pack_params(params)     # one-time weight repack (bf16, kernel layout)

    fwd = jax.jit(cylinder_net_forward)
    sdf, cyl_params = jax.block_until_ready(fwd(voxel_data, query_points, packed))

    ref_sdf, ref_params = _reference_forward(voxel_data, query_points, params)
    assert sdf.shape == (N_QUERY, NUM_CYLINDERS)
    assert cyl_params.shape == (NUM_CYLINDERS, 8)
    assert jnp.allclose(cyl_params, ref_params, atol=1e-3, rtol=1e-3)
    assert jnp.allclose(sdf, ref_sdf, atol=1e-3, rtol=1e-3)

    print("KERNEL_OK")
</pallas_src>

<mosaic_0001>
module attributes {stable_mosaic.version = 11 : i64} {
  func.func @_fused_kernel(%arg0: memref<512x1xf32, #tpu.memory_space<vmem>>, %arg1: memref<3x128xf32, #tpu.memory_space<vmem>>, %arg2: memref<512x512xbf16, #tpu.memory_space<vmem>>, %arg3: memref<512x1xf32, #tpu.memory_space<vmem>>, %arg4: memref<512x512xbf16, #tpu.memory_space<vmem>>, %arg5: memref<512x1xf32, #tpu.memory_space<vmem>>, %arg6: memref<256x512xbf16, #tpu.memory_space<vmem>>, %arg7: memref<256x1xf32, #tpu.memory_space<vmem>>, %arg8: memref<32x128xf32, #tpu.memory_space<vmem>>, %arg9: memref<32x8xf32, #tpu.memory_space<vmem>>) attributes {dimension_semantics = [], scalar_prefetch = 0 : i64, scratch_operands = 0 : i64, tpu.core_type = #tpu.core_type<tc>} {
    %c0 = arith.constant 0 : index
    %c0_0 = arith.constant 0 : index
    %0 = vector.load %arg0[%c0, %c0_0] : memref<512x1xf32, #tpu.memory_space<vmem>>, vector<512x1xf32>
    %1 = arith.truncf %0 : vector<512x1xf32> to vector<512x1xbf16>
    %2 = vector.shape_cast %1 : vector<512x1xbf16> to vector<512x1xbf16>
    %3 = vector.broadcast %2 : vector<512x1xbf16> to vector<512x128xbf16>
    %c0_1 = arith.constant 0 : index
    %c0_2 = arith.constant 0 : index
    %4 = vector.load %arg2[%c0_1, %c0_2] : memref<512x512xbf16, #tpu.memory_space<vmem>>, vector<512x512xbf16>
    %cst = arith.constant dense<0.000000e+00> : vector<512x128xf32>
    %5 = tpu.matmul %4, %3, %cst {dimension_numbers = #tpu.dot_dimension_numbers<[1], [0], [0], [1], [0, 0, 1, 1], [], []>} : vector<512x512xbf16>, vector<512x128xbf16>, vector<512x128xf32> -> vector<512x128xf32>
    %c0_3 = arith.constant 0 : index
    %c0_4 = arith.constant 0 : index
    %6 = vector.load %arg3[%c0_3, %c0_4] : memref<512x1xf32, #tpu.memory_space<vmem>>, vector<512x1xf32>
    %7 = vector.broadcast %6 : vector<512x1xf32> to vector<512x128xf32>
    %8 = arith.addf %5, %7 : vector<512x128xf32>
    %cst_5 = arith.constant 0.000000e+00 : f32
    %9 = vector.broadcast %cst_5 : f32 to vector<512x128xf32>
    %10 = arith.maximumf %8, %9 : vector<512x128xf32>
    %c0_6 = arith.constant 0 : index
    %c0_7 = arith.constant 0 : index
    %11 = vector.load %arg4[%c0_6, %c0_7] : memref<512x512xbf16, #tpu.memory_space<vmem>>, vector<512x512xbf16>
    %12 = arith.truncf %10 : vector<512x128xf32> to vector<512x128xbf16>
    %cst_8 = arith.constant dense<0.000000e+00> : vector<512x128xf32>
    %13 = tpu.matmul %11, %12, %cst_8 {dimension_numbers = #tpu.dot_dimension_numbers<[1], [0], [0], [1], [0, 0, 1, 1], [], []>} : vector<512x512xbf16>, vector<512x128xbf16>, vector<512x128xf32> -> vector<512x128xf32>
    %c0_9 = arith.constant 0 : index
    %c0_10 = arith.constant 0 : index
    %14 = vector.load %arg5[%c0_9, %c0_10] : memref<512x1xf32, #tpu.memory_space<vmem>>, vector<512x1xf32>
    %15 = vector.broadcast %14 : vector<512x1xf32> to vector<512x128xf32>
    %16 = arith.addf %13, %15 : vector<512x128xf32>
    %cst_11 = arith.constant 0.000000e+00 : f32
    %17 = vector.broadcast %cst_11 : f32 to vector<512x128xf32>
    %18 = arith.maximumf %16, %17 : vector<512x128xf32>
    %c0_12 = arith.constant 0 : index
    %c0_13 = arith.constant 0 : index
    %19 = vector.load %arg6[%c0_12, %c0_13] : memref<256x512xbf16, #tpu.memory_space<vmem>>, vector<256x512xbf16>
    %20 = arith.truncf %18 : vector<512x128xf32> to vector<512x128xbf16>
    %cst_14 = arith.constant dense<0.000000e+00> : vector<256x128xf32>
    %21 = tpu.matmul %19, %20, %cst_14 {dimension_numbers = #tpu.dot_dimension_numbers<[1], [0], [0], [1], [0, 0, 1, 1], [], []>} : vector<256x512xbf16>, vector<512x128xbf16>, vector<256x128xf32> -> vector<256x128xf32>
    %c0_15 = arith.constant 0 : index
    %c0_16 = arith.constant 0 : index
    %22 = vector.load %arg7[%c0_15, %c0_16] : memref<256x1xf32, #tpu.memory_space<vmem>>, vector<256x1xf32>
    %23 = vector.broadcast %22 : vector<256x1xf32> to vector<256x128xf32>
    %24 = arith.addf %21, %23 : vector<256x128xf32>
    %25 = arith.negf %24 : vector<256x128xf32>
    %26 = math.exp %25 : vector<256x128xf32>
    %cst_17 = arith.constant 1.000000e+00 : f32
    %27 = vector.broadcast %cst_17 : f32 to vector<256x128xf32>
    %28 = arith.addf %27, %26 : vector<256x128xf32>
    %29 = arith.divf %27, %28 : vector<256x128xf32>
    %30 = vector.extract_strided_slice %29 {offsets = [0, 0], sizes = [32, 1], strides = [1, 1]} : vector<256x128xf32> to vector<32x1xf32>
    %cst_18 = arith.constant 1.000000e+00 : f32
    %31 = vector.broadcast %cst_18 : f32 to vector<32x1xf32>
    %32 = arith.mulf %30, %31 : vector<32x1xf32>
    %cst_19 = arith.constant -8.000000e-01 : f32
    %33 = vector.broadcast %cst_19 : f32 to vector<32x1xf32>
    %34 = arith.addf %32, %33 : vector<32x1xf32>
    %35 = vector.extract_strided_slice %29 {offsets = [32, 0], sizes = [32, 1], strides = [1, 1]} : vector<256x128xf32> to vector<32x1xf32>
    %cst_20 = arith.constant 1.000000e+00 : f32
    %36 = vector.broadcast %cst_20 : f32 to vector<32x1xf32>
    %37 = arith.mulf %35, %36 : vector<32x1xf32>
    %cst_21 = arith.constant -8.000000e-01 : f32
    %38 = vector.broadcast %cst_21 : f32 to vector<32x1xf32>
    %39 = arith.addf %37, %38 : vector<32x1xf32>
    %40 = vector.extract_strided_slice %29 {offsets = [64, 0], sizes = [32, 1], strides = [1, 1]} : vector<256x128xf32> to vector<32x1xf32>
    %cst_22 = arith.constant 1.000000e+00 : f32
    %41 = vector.broadcast %cst_22 : f32 to vector<32x1xf32>
    %42 = arith.mulf %40, %41 : vector<32x1xf32>
    %cst_23 = arith.constant -8.000000e-01 : f32
    %43 = vector.broadcast %cst_23 : f32 to vector<32x1xf32>
    %44 = arith.addf %42, %43 : vector<32x1xf32>
    %45 = vector.extract_strided_slice %29 {offsets = [96, 0], sizes = [32, 1], strides = [1, 1]} : vector<256x128xf32> to vector<32x1xf32>
    %cst_24 = arith.constant 2.000000e+00 : f32
    %46 = vector.broadcast %cst_24 : f32 to vector<32x1xf32>
    %47 = arith.mulf %45, %46 : vector<32x1xf32>
    %cst_25 = arith.constant -1.000000e+00 : f32
    %48 = vector.broadcast %cst_25 : f32 to vector<32x1xf32>
    %49 = arith.addf %47, %48 : vector<32x1xf32>
    %50 = vector.extract_strided_slice %29 {offsets = [128, 0], sizes = [32, 1], strides = [1, 1]} : vector<256x128xf32> to vector<32x1xf32>
    %cst_26 = arith.constant 2.000000e+00 : f32
    %51 = vector.broadcast %cst_26 : f32 to vector<32x1xf32>
    %52 = arith.mulf %50, %51 : vector<32x1xf32>
    %cst_27 = arith.constant -1.000000e+00 : f32
    %53 = vector.broadcast %cst_27 : f32 to vector<32x1xf32>
    %54 = arith.addf %52, %53 : vector<32x1xf32>
    %55 = vector.extract_strided_slice %29 {offsets = [160, 0], sizes = [32, 1], strides = [1, 1]} : vector<256x128xf32> to vector<32x1xf32>
    %cst_28 = arith.constant 2.000000e+00 : f32
    %56 = vector.broadcast %cst_28 : f32 to vector<32x1xf32>
    %57 = arith.mulf %55, %56 : vector<32x1xf32>
    %cst_29 = arith.constant -1.000000e+00 : f32
    %58 = vector.broadcast %cst_29 : f32 to vector<32x1xf32>
    %59 = arith.addf %57, %58 : vector<32x1xf32>
    %60 = vector.extract_strided_slice %29 {offsets = [192, 0], sizes = [32, 1], strides = [1, 1]} : vector<256x128xf32> to vector<32x1xf32>
    %cst_30 = arith.constant 1.000000e-01 : f32
    %61 = vector.broadcast %cst_30 : f32 to vector<32x1xf32>
    %62 = arith.mulf %60, %61 : vector<32x1xf32>
    %cst_31 = arith.constant 1.000000e-01 : f32
    %63 = vector.broadcast %cst_31 : f32 to vector<32x1xf32>
    %64 = arith.addf %62, %63 : vector<32x1xf32>
    %65 = vector.extract_strided_slice %29 {offsets = [224, 0], sizes = [32, 1], strides = [1, 1]} : vector<256x128xf32> to vector<32x1xf32>
    %cst_32 = arith.constant 1.000000e-01 : f32
    %66 = vector.broadcast %cst_32 : f32 to vector<32x1xf32>
    %67 = arith.mulf %65, %66 : vector<32x1xf32>
    %cst_33 = arith.constant 1.000000e-01 : f32
    %68 = vector.broadcast %cst_33 : f32 to vector<32x1xf32>
    %69 = arith.addf %67, %68 : vector<32x1xf32>
    %70 = tpu.iota {dimensions = array<i32: 1>} : vector<32x8xi32>
    %cst_34 = arith.constant 0.000000e+00 : f32
    %71 = vector.broadcast %cst_34 : f32 to vector<32x8xf32>
    %c0_i32 = arith.constant 0 : i32
    %72 = vector.broadcast %c0_i32 : i32 to vector<32x8xi32>
    %73 = arith.cmpi eq, %70, %72 : vector<32x8xi32>
    %74 = vector.shape_cast %34 : vector<32x1xf32> to vector<32x1xf32>
    %75 = vector.broadcast %74 : vector<32x1xf32> to vector<32x8xf32>
    %76 = arith.select %73, %75, %71 : vector<32x8xi1>, vector<32x8xf32>
    %c1_i32 = arith.constant 1 : i32
    %77 = vector.broadcast %c1_i32 : i32 to vector<32x8xi32>
    %78 = arith.cmpi eq, %70, %77 : vector<32x8xi32>
    %79 = vector.shape_cast %39 : vector<32x1xf32> to vector<32x1xf32>
    %80 = vector.broadcast %79 : vector<32x1xf32> to vector<32x8xf32>
    %81 = arith.select %78, %80, %76 : vector<32x8xi1>, vector<32x8xf32>
    %c2_i32 = arith.constant 2 : i32
    %82 = vector.broadcast %c2_i32 : i32 to vector<32x8xi32>
    %83 = arith.cmpi eq, %70, %82 : vector<32x8xi32>
    %84 = vector.shape_cast %44 : vector<32x1xf32> to vector<32x1xf32>
    %85 = vector.broadcast %84 : vector<32x1xf32> to vector<32x8xf32>
    %86 = arith.select %83, %85, %81 : vector<32x8xi1>, vector<32x8xf32>
    %c3_i32 = arith.constant 3 : i32
    %87 = vector.broadcast %c3_i32 : i32 to vector<32x8xi32>
    %88 = arith.cmpi eq, %70, %87 : vector<32x8xi32>
    %89 = vector.shape_cast %49 : vector<32x1xf32> to vector<32x1xf32>
    %90 = vector.broadcast %89 : vector<32x1xf32> to vector<32x8xf32>
    %91 = arith.select %88, %90, %86 : vector<32x8xi1>, vector<32x8xf32>
    %c4_i32 = arith.constant 4 : i32
    %92 = vector.broadcast %c4_i32 : i32 to vector<32x8xi32>
    %93 = arith.cmpi eq, %70, %92 : vector<32x8xi32>
    %94 = vector.shape_cast %54 : vector<32x1xf32> to vector<32x1xf32>
    %95 = vector.broadcast %94 : vector<32x1xf32> to vector<32x8xf32>
    %96 = arith.select %93, %95, %91 : vector<32x8xi1>, vector<32x8xf32>
    %c5_i32 = arith.constant 5 : i32
    %97 = vector.broadcast %c5_i32 : i32 to vector<32x8xi32>
    %98 = arith.cmpi eq, %70, %97 : vector<32x8xi32>
    %99 = vector.shape_cast %59 : vector<32x1xf32> to vector<32x1xf32>
    %100 = vector.broadcast %99 : vector<32x1xf32> to vector<32x8xf32>
    %101 = arith.select %98, %100, %96 : vector<32x8xi1>, vector<32x8xf32>
    %c6_i32 = arith.constant 6 : i32
    %102 = vector.broadcast %c6_i32 : i32 to vector<32x8xi32>
    %103 = arith.cmpi eq, %70, %102 : vector<32x8xi32>
    %104 = vector.shape_cast %64 : vector<32x1xf32> to vector<32x1xf32>
    %105 = vector.broadcast %104 : vector<32x1xf32> to vector<32x8xf32>
    %106 = arith.select %103, %105, %101 : vector<32x8xi1>, vector<32x8xf32>
    %c7_i32 = arith.constant 7 : i32
    %107 = vector.broadcast %c7_i32 : i32 to vector<32x8xi32>
    %108 = arith.cmpi eq, %70, %107 : vector<32x8xi32>
    %109 = vector.shape_cast %69 : vector<32x1xf32> to vector<32x1xf32>
    %110 = vector.broadcast %109 : vector<32x1xf32> to vector<32x8xf32>
    %111 = arith.select %108, %110, %106 : vector<32x8xi1>, vector<32x8xf32>
    %c0_35 = arith.constant 0 : index
    %c0_36 = arith.constant 0 : index
    %112 = vector.load %arg9[%c0_35, %c0_36] : memref<32x8xf32, #tpu.memory_space<vmem>>, vector<32x8xf32>
    tpu.vector_store %arg9[%c0_35, %c0_36], %111 {strides = array<i32>} : memref<32x8xf32, #tpu.memory_space<vmem>>, vector<32x8xf32>,
    %c0_37 = arith.constant 0 : index
    %c0_38 = arith.constant 0 : index
    %113 = vector.load %arg1[%c0_37, %c0_38] : memref<3x128xf32, #tpu.memory_space<vmem>>, vector<1x128xf32>
    %c1 = arith.constant 1 : index
    %c0_39 = arith.constant 0 : index
    %114 = vector.load %arg1[%c1, %c0_39] : memref<3x128xf32, #tpu.memory_space<vmem>>, vector<1x128xf32>
    %c2 = arith.constant 2 : index
    %c0_40 = arith.constant 0 : index
    %115 = vector.load %arg1[%c2, %c0_40] : memref<3x128xf32, #tpu.memory_space<vmem>>, vector<1x128xf32>
    %116 = arith.mulf %49, %49 : vector<32x1xf32>
    %117 = arith.mulf %54, %54 : vector<32x1xf32>
    %118 = arith.addf %116, %117 : vector<32x1xf32>
    %119 = arith.mulf %59, %59 : vector<32x1xf32>
    %120 = arith.addf %118, %119 : vector<32x1xf32>
    %cst_41 = arith.constant 9.99999996E-13 : f32
    %121 = vector.broadcast %cst_41 : f32 to vector<32x1xf32>
    %122 = arith.addf %120, %121 : vector<32x1xf32>
    %123 = math.rsqrt %122 : vector<32x1xf32>
    %124 = arith.mulf %49, %123 : vector<32x1xf32>
    %125 = arith.mulf %54, %123 : vector<32x1xf32>
    %126 = arith.mulf %59, %123 : vector<32x1xf32>
    %127 = vector.broadcast %113 : vector<1x128xf32> to vector<32x128xf32>
    %128 = vector.broadcast %34 : vector<32x1xf32> to vector<32x128xf32>
    %129 = arith.subf %127, %128 : vector<32x128xf32>
    %130 = vector.broadcast %114 : vector<1x128xf32> to vector<32x128xf32>
    %131 = vector.broadcast %39 : vector<32x1xf32> to vector<32x128xf32>
    %132 = arith.subf %130, %131 : vector<32x128xf32>
    %133 = vector.broadcast %115 : vector<1x128xf32> to vector<32x128xf32>
    %134 = vector.broadcast %44 : vector<32x1xf32> to vector<32x128xf32>
    %135 = arith.subf %133, %134 : vector<32x128xf32>
    %136 = vector.broadcast %124 : vector<32x1xf32> to vector<32x128xf32>
    %137 = arith.mulf %129, %136 : vector<32x128xf32>
    %138 = vector.broadcast %125 : vector<32x1xf32> to vector<32x128xf32>
    %139 = arith.mulf %132, %138 : vector<32x128xf32>
    %140 = arith.addf %137, %139 : vector<32x128xf32>
    %141 = vector.broadcast %126 : vector<32x1xf32> to vector<32x128xf32>
    %142 = arith.mulf %135, %141 : vector<32x128xf32>
    %143 = arith.addf %140, %142 : vector<32x128xf32>
    %144 = vector.broadcast %124 : vector<32x1xf32> to vector<32x128xf32>
    %145 = arith.mulf %143, %144 : vector<32x128xf32>
    %146 = arith.subf %129, %145 : vector<32x128xf32>
    %147 = vector.broadcast %125 : vector<32x1xf32> to vector<32x128xf32>
    %148 = arith.mulf %143, %147 : vector<32x128xf32>
    %149 = arith.subf %132, %148 : vector<32x128xf32>
    %150 = vector.broadcast %126 : vector<32x1xf32> to vector<32x128xf32>
    %151 = arith.mulf %143, %150 : vector<32x128xf32>
    %152 = arith.subf %135, %151 : vector<32x128xf32>
    %153 = arith.mulf %146, %146 : vector<32x128xf32>
    %154 = arith.mulf %149, %149 : vector<32x128xf32>
    %155 = arith.addf %153, %154 : vector<32x128xf32>
    %156 = arith.mulf %152, %152 : vector<32x128xf32>
    %157 = arith.addf %155, %156 : vector<32x128xf32>
    %cst_42 = arith.constant 9.99999996E-13 : f32
    %158 = vector.broadcast %cst_42 : f32 to vector<32x128xf32>
    %159 = arith.addf %157, %158 : vector<32x128xf32>
    %160 = math.rsqrt %159 : vector<32x128xf32>
    %161 = arith.mulf %157, %160 : vector<32x128xf32>
    %162 = vector.broadcast %64 : vector<32x1xf32> to vector<32x128xf32>
    %163 = arith.subf %161, %162 : vector<32x128xf32>
    %164 = math.absf %143 : vector<32x128xf32>
    %cst_43 = arith.constant 5.000000e-01 : f32
    %165 = vector.broadcast %cst_43 : f32 to vector<32x1xf32>
    %166 = arith.mulf %165, %69 : vector<32x1xf32>
    %167 = vector.broadcast %166 : vector<32x1xf32> to vector<32x128xf32>
    %168 = arith.subf %164, %167 : vector<32x128xf32>
    %169 = arith.maximumf %163, %168 : vector<32x128xf32>
    %c0_44 = arith.constant 0 : index
    %c0_45 = arith.constant 0 : index
    %170 = vector.load %arg8[%c0_44, %c0_45] : memref<32x128xf32, #tpu.memory_space<vmem>>, vector<32x128xf32>
    tpu.vector_store %arg8[%c0_44, %c0_45], %169 {strides = array<i32>} : memref<32x128xf32, #tpu.memory_space<vmem>>, vector<32x128xf32>,
    return
  }
}

</mosaic_0001>

<llo_original>
// kernel: cylinder_net_forward.1
$region0: #{cylinder_net_forward.1}
  #allocation0 [shape = 'u32[]', space=smem, size = 0x4, offset = 0x4, fixed_abs, tag = 'smem constant byte address 0x4 - core index']
  #allocation1 [shape = 'u32[144,128]{1,0:T(1,128)}', space=vmem, size = 0x12000, scoped, tag = 'internal scratch']
  %s0 = inlined_call_operand.vmem [shape: f32[512,1], index: 0, kind: input, shape index: {}]
  %s1 = inlined_call_operand.vmem [shape: f32[3,128], index: 1, kind: input, shape index: {}]
  %s2 = inlined_call_operand.vmem [shape: bf16[512,512], index: 2, kind: input, shape index: {}]
  %s3 = inlined_call_operand.vmem [shape: f32[512,1], index: 3, kind: input, shape index: {}]
  %s4 = inlined_call_operand.hbm [shape: bf16[512,512], index: 4, kind: input, shape index: {}]
  %s5 = inlined_call_operand.vmem [shape: f32[512,1], index: 5, kind: input, shape index: {}]
  %s6 = inlined_call_operand.vmem [shape: bf16[256,512], index: 6, kind: input, shape index: {}]
  %s7 = inlined_call_operand.vmem [shape: f32[256,1], index: 7, kind: input, shape index: {}]
  %s8 = inlined_call_operand.hbm [shape: f32[32,128], index: 8, kind: output, shape index: {0}]
  %s9 = inlined_call_operand.vmem [shape: f32[32,8], index: 9, kind: output, shape index: {1}]
  %10 = xla_tuple %s8, %s9
  %s11 = sld [smem:[#allocation0]]
  $region54: #{cylinder_net_forward.1} parent=0
    _
  %s13 = ssub.s32 1, %s11
  %s14 = scalar_select 0, %s13, %s11
  $region1: #{cylinder_net_forward.1} parent=0
    #allocation2 [shape = 'u8[524288]{0}', space=vmem, size = 0x80000, scoped, tag = 'input window, operand 4, single buffered']
    #allocation3 [shape = 's32[1]{0}', space=sflag, size = 0x4, scoped, tag = 'scoped memory for cylinder_net_forward.1']
    #allocation4 [shape = 's32[1]{0}', space=sflag, size = 0x4, scoped, tag = 'scoped memory for cylinder_net_forward.1']
    #allocation5 [shape = 'u8[16384]{0}', space=vmem, size = 0x4000, scoped, tag = 'output window, operand 0, single buffered']
    %15 = vsyncpa [#allocation3], 0
    %16 = vsyncpa [#allocation4], 0
    // Predicated region
    $region2: #{cylinder_net_forward.1} parent=1 // pred_check
      _
    $region3: #{cylinder_net_forward.1} parent=1 // pred_check_branch
      %18 = sbr.rel (0) target = $region5
    $region4: #{cylinder_net_forward.1} parent=1 // pred_region
      _
    $region5: #{cylinder_net_forward.1} parent=1 // pred_fallthru
      _
    // Predicated region
    $region6: #{cylinder_net_forward.1} parent=1 // pred_check
      _
    $region7: #{cylinder_net_forward.1} parent=1 // pred_check_branch
      %20 = sbr.rel (0) target = $region9
    $region8: #{cylinder_net_forward.1} parent=1 // pred_region
      _
    $region9: #{cylinder_net_forward.1} parent=1 // pred_fallthru
      _
    // Predicated region
    $region10: #{cylinder_net_forward.1} parent=1 // pred_check
      _
    $region11: #{cylinder_net_forward.1} parent=1 // pred_check_branch
      %22 = sbr.rel (0) target = $region13
    $region12: #{cylinder_net_forward.1} parent=1 // pred_region
      _
    $region13: #{cylinder_net_forward.1} parent=1 // pred_fallthru
      _
    // Predicated region
    $region14: #{cylinder_net_forward.1} parent=1 // pred_check
      _
    $region15: #{cylinder_net_forward.1} parent=1 // pred_check_branch
      %24 = sbr.rel (0) target = $region17
    $region16: #{cylinder_net_forward.1} parent=1 // pred_region
      _
    $region17: #{cylinder_net_forward.1} parent=1 // pred_fallthru
      _
    // Predicated region
    $region18: #{cylinder_net_forward.1} parent=1 // pred_check
      _
    $region19: #{cylinder_net_forward.1} parent=1 // pred_check_branch
      %26 = sbr.rel (0) target = $region21
    $region20: #{cylinder_net_forward.1} parent=1 // pred_region
      %s28 = ssub.s32 16384, 16384
      %29 = vsyncadd [#allocation3], %s28
      %s30 = sshll.u32 [#allocation2], 4
      %s31 = int_to_ptr.vmem [resolvable:$true] %s30
      %36 = dma.hbm_to_vmem [thread:$0]  %s4, 16384, %s31, [#allocation3], 256, 256, 16
    $region21: #{cylinder_net_forward.1} parent=1 // pred_fallthru
      _
    // Predicated region
    $region22: #{cylinder_net_forward.1} parent=1 // pred_check
      _
    $region23: #{cylinder_net_forward.1} parent=1 // pred_check_branch
      %38 = sbr.rel (0) target = $region25
    $region24: #{cylinder_net_forward.1} parent=1 // pred_region
      _
    $region25: #{cylinder_net_forward.1} parent=1 // pred_fallthru
      _
    // Predicated region
    $region26: #{cylinder_net_forward.1} parent=1 // pred_check
      _
    $region27: #{cylinder_net_forward.1} parent=1 // pred_check_branch
      %40 = sbr.rel (0) target = $region29
    $region28: #{cylinder_net_forward.1} parent=1 // pred_region
      _
    $region29: #{cylinder_net_forward.1} parent=1 // pred_fallthru
      _
    // Predicated region
    $region30: #{cylinder_net_forward.1} parent=1 // pred_check
      _
    $region31: #{cylinder_net_forward.1} parent=1 // pred_check_branch
      %42 = sbr.rel (0) target = $region33
    $region32: #{cylinder_net_forward.1} parent=1 // pred_region
      _
    $region33: #{cylinder_net_forward.1} parent=1 // pred_fallthru
      _
    // Predicated region
    $region34: #{cylinder_net_forward.1} parent=1 // pred_check
      _
    $region35: #{cylinder_net_forward.1} parent=1 // pred_check_branch
      %44 = sbr.rel (0) target = $region37
    $region36: #{cylinder_net_forward.1} parent=1 // pred_region
      %45 = dma.done [#allocation3], 16384
    $region37: #{cylinder_net_forward.1} parent=1 // pred_fallthru
      _
    %v47 = vld [vmem:[%s0] sm:$0xff]
    %v48 = vld [vmem:[%s0 + $0x8] sm:$0xff]
    %v49 = vld [vmem:[%s0 + $0x10] sm:$0xff]
    %v50 = vld [vmem:[%s0 + $0x18] sm:$0xff]
    %v51 = vld [vmem:[%s0 + $0x20] sm:$0xff]
    %v52 = vld [vmem:[%s0 + $0x28] sm:$0xff]
    %v53 = vld [vmem:[%s0 + $0x30] sm:$0xff]
    %v54 = vld [vmem:[%s0 + $0x38] sm:$0xff]
    %v55 = vld [vmem:[%s0 + $0x40] sm:$0xff]
    %v56 = vld [vmem:[%s0 + $0x48] sm:$0xff]
    %v57 = vld [vmem:[%s0 + $0x50] sm:$0xff]
    %v58 = vld [vmem:[%s0 + $0x58] sm:$0xff]
    %v59 = vld [vmem:[%s0 + $0x60] sm:$0xff]
    %v60 = vld [vmem:[%s0 + $0x68] sm:$0xff]
    %v61 = vld [vmem:[%s0 + $0x70] sm:$0xff]
    %v62 = vld [vmem:[%s0 + $0x78] sm:$0xff]
    %v63 = vld [vmem:[%s0 + $0x80] sm:$0xff]
    %v64 = vld [vmem:[%s0 + $0x88] sm:$0xff]
    %v65 = vld [vmem:[%s0 + $0x90] sm:$0xff]
    %v66 = vld [vmem:[%s0 + $0x98] sm:$0xff]
    %v67 = vld [vmem:[%s0 + $0xa0] sm:$0xff]
    %v68 = vld [vmem:[%s0 + $0xa8] sm:$0xff]
    %v69 = vld [vmem:[%s0 + $0xb0] sm:$0xff]
    %v70 = vld [vmem:[%s0 + $0xb8] sm:$0xff]
    %v71 = vld [vmem:[%s0 + $0xc0] sm:$0xff]
    %v72 = vld [vmem:[%s0 + $0xc8] sm:$0xff]
    %v73 = vld [vmem:[%s0 + $0xd0] sm:$0xff]
    %v74 = vld [vmem:[%s0 + $0xd8] sm:$0xff]
    %v75 = vld [vmem:[%s0 + $0xe0] sm:$0xff]
    %v76 = vld [vmem:[%s0 + $0xe8] sm:$0xff]
    %v77 = vld [vmem:[%s0 + $0xf0] sm:$0xff]
    %v78 = vld [vmem:[%s0 + $0xf8] sm:$0xff]
    %v79 = vld [vmem:[%s0 + $0x100] sm:$0xff]
    %v80 = vld [vmem:[%s0 + $0x108] sm:$0xff]
    %v81 = vld [vmem:[%s0 + $0x110] sm:$0xff]
    %v82 = vld [vmem:[%s0 + $0x118] sm:$0xff]
    %v83 = vld [vmem:[%s0 + $0x120] sm:$0xff]
    %v84 = vld [vmem:[%s0 + $0x128] sm:$0xff]
    %v85 = vld [vmem:[%s0 + $0x130] sm:$0xff]
    %v86 = vld [vmem:[%s0 + $0x138] sm:$0xff]
    %v87 = vld [vmem:[%s0 + $0x140] sm:$0xff]
    %v88 = vld [vmem:[%s0 + $0x148] sm:$0xff]
    %v89 = vld [vmem:[%s0 + $0x150] sm:$0xff]
    %v90 = vld [vmem:[%s0 + $0x158] sm:$0xff]
    %v91 = vld [vmem:[%s0 + $0x160] sm:$0xff]
    %v92 = vld [vmem:[%s0 + $0x168] sm:$0xff]
    %v93 = vld [vmem:[%s0 + $0x170] sm:$0xff]
    %v94 = vld [vmem:[%s0 + $0x178] sm:$0xff]
    %v95 = vld [vmem:[%s0 + $0x180] sm:$0xff]
    %v96 = vld [vmem:[%s0 + $0x188] sm:$0xff]
    %v97 = vld [vmem:[%s0 + $0x190] sm:$0xff]
    %v98 = vld [vmem:[%s0 + $0x198] sm:$0xff]
    %v99 = vld [vmem:[%s0 + $0x1a0] sm:$0xff]
    %v100 = vld [vmem:[%s0 + $0x1a8] sm:$0xff]
    %v101 = vld [vmem:[%s0 + $0x1b0] sm:$0xff]
    %v102 = vld [vmem:[%s0 + $0x1b8] sm:$0xff]
    %v103 = vld [vmem:[%s0 + $0x1c0] sm:$0xff]
    %v104 = vld [vmem:[%s0 + $0x1c8] sm:$0xff]
    %v105 = vld [vmem:[%s0 + $0x1d0] sm:$0xff]
    %v106 = vld [vmem:[%s0 + $0x1d8] sm:$0xff]
    %v107 = vld [vmem:[%s0 + $0x1e0] sm:$0xff]
    %v108 = vld [vmem:[%s0 + $0x1e8] sm:$0xff]
    %v109 = vld [vmem:[%s0 + $0x1f0] sm:$0xff]
    %v110 = vld [vmem:[%s0 + $0x1f8] sm:$0xff]
    %v111 = vpack.c.bf16 %v48, %v47
    %v112 = vpack.c.bf16 %v50, %v49
    %v113 = vpack.c.bf16 %v52, %v51
    %v114 = vpack.c.bf16 %v54, %v53
    %v115 = vpack.c.bf16 %v56, %v55
    %v116 = vpack.c.bf16 %v58, %v57
    %v117 = vpack.c.bf16 %v60, %v59
    %v118 = vpack.c.bf16 %v62, %v61
    %v119 = vpack.c.bf16 %v64, %v63
    %v120 = vpack.c.bf16 %v66, %v65
    %v121 = vpack.c.bf16 %v68, %v67
    %v122 = vpack.c.bf16 %v70, %v69
    %v123 = vpack.c.bf16 %v72, %v71
    %v124 = vpack.c.bf16 %v74, %v73
    %v125 = vpack.c.bf16 %v76, %v75
    %v126 = vpack.c.bf16 %v78, %v77
    %v127 = vpack.c.bf16 %v80, %v79
    %v128 = vpack.c.bf16 %v82, %v81
    %v129 = vpack.c.bf16 %v84, %v83
    %v130 = vpack.c.bf16 %v86, %v85
    %v131 = vpack.c.bf16 %v88, %v87
    %v132 = vpack.c.bf16 %v90, %v89
    %v133 = vpack.c.bf16 %v92, %v91
    %v134 = vpack.c.bf16 %v94, %v93
    %v135 = vpack.c.bf16 %v96, %v95
    %v136 = vpack.c.bf16 %v98, %v97
    %v137 = vpack.c.bf16 %v100, %v99
    %v138 = vpack.c.bf16 %v102, %v101
    %v139 = vpack.c.bf16 %v104, %v103
    %v140 = vpack.c.bf16 %v106, %v105
    %v141 = vpack.c.bf16 %v108, %v107
    %v142 = vpack.c.bf16 %v110, %v109
    %144 = vset.pattern.permute.xlu0 0
    %145 = vperm.xlu0 %144, %v111
    %v146 = vpop.permute.xlu0 %145
    %149 = vset.pattern.permute.xlu0 0
    %150 = vperm.xlu0 %149, %v112
    %v151 = vpop.permute.xlu0 %150
    %154 = vset.pattern.permute.xlu0 0
    %155 = vperm.xlu0 %154, %v113
    %v156 = vpop.permute.xlu0 %155
    %159 = vset.pattern.permute.xlu0 0
    %160 = vperm.xlu0 %159, %v114
    %v161 = vpop.permute.xlu0 %160
    %164 = vset.pattern.permute.xlu0 0
    %165 = vperm.xlu0 %164, %v115
    %v166 = vpop.permute.xlu0 %165
    %169 = vset.pattern.permute.xlu0 0
    %170 = vperm.xlu0 %169, %v116
    %v171 = vpop.permute.xlu0 %170
    %174 = vset.pattern.permute.xlu0 0
    %175 = vperm.xlu0 %174, %v117
    %v176 = vpop.permute.xlu0 %175
    %179 = vset.pattern.permute.xlu0 0
    %180 = vperm.xlu0 %179, %v118
    %v181 = vpop.permute.xlu0 %180
    %184 = vset.pattern.permute.xlu0 0
    %185 = vperm.xlu0 %184, %v119
    %v186 = vpop.permute.xlu0 %185
    %189 = vset.pattern.permute.xlu0 0
    %190 = vperm.xlu0 %189, %v120
    %v191 = vpop.permute.xlu0 %190
    %194 = vset.pattern.permute.xlu0 0
    %195 = vperm.xlu0 %194, %v121
    %v196 = vpop.permute.xlu0 %195
    %199 = vset.pattern.permute.xlu0 0
    %200 = vperm.xlu0 %199, %v122
    %v201 = vpop.permute.xlu0 %200
    %204 = vset.pattern.permute.xlu0 0
    %205 = vperm.xlu0 %204, %v123
    %v206 = vpop.permute.xlu0 %205
    %209 = vset.pattern.permute.xlu0 0
    %210 = vperm.xlu0 %209, %v124
    %v211 = vpop.permute.xlu0 %210
    %214 = vset.pattern.permute.xlu0 0
    %215 = vperm.xlu0 %214, %v125
    %v216 = vpop.permute.xlu0 %215
    %219 = vset.pattern.permute.xlu0 0
    %220 = vperm.xlu0 %219, %v126
    %v221 = vpop.permute.xlu0 %220
    %224 = vset.pattern.permute.xlu0 0
    %225 = vperm.xlu0 %224, %v127
    %v226 = vpop.permute.xlu0 %225
    %229 = vset.pattern.permute.xlu0 0
    %230 = vperm.xlu0 %229, %v128
    %v231 = vpop.permute.xlu0 %230
    %234 = vset.pattern.permute.xlu0 0
    %235 = vperm.xlu0 %234, %v129
    %v236 = vpop.permute.xlu0 %235
    %239 = vset.pattern.permute.xlu0 0
    %240 = vperm.xlu0 %239, %v130
    %v241 = vpop.permute.xlu0 %240
    %244 = vset.pattern.permute.xlu0 0
    %245 = vperm.xlu0 %244, %v131
    %v246 = vpop.permute.xlu0 %245
    %249 = vset.pattern.permute.xlu0 0
    %250 = vperm.xlu0 %249, %v132
    %v251 = vpop.permute.xlu0 %250
    %254 = vset.pattern.permute.xlu0 0
    %255 = vperm.xlu0 %254, %v133
    %v256 = vpop.permute.xlu0 %255
    %259 = vset.pattern.permute.xlu0 0
    %260 = vperm.xlu0 %259, %v134
    %v261 = vpop.permute.xlu0 %260
    %264 = vset.pattern.permute.xlu0 0
    %265 = vperm.xlu0 %264, %v135
    %v266 = vpop.permute.xlu0 %265
    %269 = vset.pattern.permute.xlu0 0
    %270 = vperm.xlu0 %269, %v136
    %v271 = vpop.permute.xlu0 %270
    %274 = vset.pattern.permute.xlu0 0
    %275 = vperm.xlu0 %274, %v137
    %v276 = vpop.permute.xlu0 %275
    %279 = vset.pattern.permute.xlu0 0
    %280 = vperm.xlu0 %279, %v138
    %v281 = vpop.permute.xlu0 %280
    %284 = vset.pattern.permute.xlu0 0
    %285 = vperm.xlu0 %284, %v139
    %v286 = vpop.permute.xlu0 %285
    %289 = vset.pattern.permute.xlu0 0
    %290 = vperm.xlu0 %289, %v140
    %v291 = vpop.permute.xlu0 %290
    %294 = vset.pattern.permute.xlu0 0
    %295 = vperm.xlu0 %294, %v141
    %v296 = vpop.permute.xlu0 %295
    %299 = vset.pattern.permute.xlu0 0
    %300 = vperm.xlu0 %299, %v142
    %v301 = vpop.permute.xlu0 %300
    %v303 = vld [vmem:[%s2] sm:$0xff]
    %v304 = vld [vmem:[%s2 + $0x8] sm:$0xff]
    %v305 = vld [vmem:[%s2 + $0x10] sm:$0xff]
    %v306 = vld [vmem:[%s2 + $0x18] sm:$0xff]
    %v307 = vld [vmem:[%s2 + $0x20] sm:$0xff]
    %v308 = vld [vmem:[%s2 + $0x28] sm:$0xff]
    %v309 = vld [vmem:[%s2 + $0x30] sm:$0xff]
    %v310 = vld [vmem:[%s2 + $0x38] sm:$0xff]
    %v311 = vld [vmem:[%s2 + $0x40] sm:$0xff]
    %v312 = vld [vmem:[%s2 + $0x48] sm:$0xff]
    %v313 = vld [vmem:[%s2 + $0x50] sm:$0xff]
    %v314 = vld [vmem:[%s2 + $0x58] sm:$0xff]
    %v315 = vld [vmem:[%s2 + $0x60] sm:$0xff]
    %v316 = vld [vmem:[%s2 + $0x68] sm:$0xff]
    %v317 = vld [vmem:[%s2 + $0x70] sm:$0xff]
    %v318 = vld [vmem:[%s2 + $0x78] sm:$0xff]
    %v319 = vld [vmem:[%s2 + $0x80] sm:$0xff]
    %v320 = vld [vmem:[%s2 + $0x88] sm:$0xff]
    %v321 = vld [vmem:[%s2 + $0x90] sm:$0xff]
    %v322 = vld [vmem:[%s2 + $0x98] sm:$0xff]
    %v323 = vld [vmem:[%s2 + $0xa0] sm:$0xff]
    %v324 = vld [vmem:[%s2 + $0xa8] sm:$0xff]
    %v325 = vld [vmem:[%s2 + $0xb0] sm:$0xff]
    %v326 = vld [vmem:[%s2 + $0xb8] sm:$0xff]
    %v327 = vld [vmem:[%s2 + $0xc0] sm:$0xff]
    %v328 = vld [vmem:[%s2 + $0xc8] sm:$0xff]
    %v329 = vld [vmem:[%s2 + $0xd0] sm:$0xff]
    %v330 = vld [vmem:[%s2 + $0xd8] sm:$0xff]
    %v331 = vld [vmem:[%s2 + $0xe0] sm:$0xff]
    %v332 = vld [vmem:[%s2 + $0xe8] sm:$0xff]
    %v333 = vld [vmem:[%s2 + $0xf0] sm:$0xff]
    %v334 = vld [vmem:[%s2 + $0xf8] sm:$0xff]
    %v335 = vld [vmem:[%s2 + $0x100] sm:$0xff]
    %v336 = vld [vmem:[%s2 + $0x108] sm:$0xff]
    %v337 = vld [vmem:[%s2 + $0x110] sm:$0xff]
    %v338 = vld [vmem:[%s2 + $0x118] sm:$0xff]
    %v339 = vld [vmem:[%s2 + $0x120] sm:$0xff]
    %v340 = vld [vmem:[%s2 + $0x128] sm:$0xff]
    %v341 = vld [vmem:[%s2 + $0x130] sm:$0xff]
    %v342 = vld [vmem:[%s2 + $0x138] sm:$0xff]
    %v343 = vld [vmem:[%s2 + $0x140] sm:$0xff]
    %v344 = vld [vmem:[%s2 + $0x148] sm:$0xff]
    %v345 = vld [vmem:[%s2 + $0x150] sm:$0xff]
    %v346 = vld [vmem:[%s2 + $0x158] sm:$0xff]
    %v347 = vld [vmem:[%s2 + $0x160] sm:$0xff]
    %v348 = vld [vmem:[%s2 + $0x168] sm:$0xff]
    %v349 = vld [vmem:[%s2 + $0x170] sm:$0xff]
    %v350 = vld [vmem:[%s2 + $0x178] sm:$0xff]
    %v351 = vld [vmem:[%s2 + $0x180] sm:$0xff]
    %v352 = vld [vmem:[%s2 + $0x188] sm:$0xff]
    %v353 = vld [vmem:[%s2 + $0x190] sm:$0xff]
    %v354 = vld [vmem:[%s2 + $0x198] sm:$0xff]
    %v355 = vld [vmem:[%s2 + $0x1a0] sm:$0xff]
    %v356 = vld [vmem:[%s2 + $0x1a8] sm:$0xff]
    %v357 = vld [vmem:[%s2 + $0x1b0] sm:$0xff]
    %v358 = vld [vmem:[%s2 + $0x1b8] sm:$0xff]
    %v359 = vld [vmem:[%s2 + $0x1c0] sm:$0xff]
    %v360 = vld [vmem:[%s2 + $0x1c8] sm:$0xff]
    %v361 = vld [vmem:[%s2 + $0x1d0] sm:$0xff]
    %v362 = vld [vmem:[%s2 + $0x1d8] sm:$0xff]
    %v363 = vld [vmem:[%s2 + $0x1e0] sm:$0xff]
    %v364 = vld [vmem:[%s2 + $0x1e8] sm:$0xff]
    %v365 = vld [vmem:[%s2 + $0x1f0] sm:$0xff]
    %v366 = vld [vmem:[%s2 + $0x1f8] sm:$0xff]
    %v367 = vld [vmem:[%s2 + $0x200] sm:$0xff]
    %v368 = vld [vmem:[%s2 + $0x208] sm:$0xff]
    %v369 = vld [vmem:[%s2 + $0x210] sm:$0xff]
    %v370 = vld [vmem:[%s2 + $0x218] sm:$0xff]
    %v371 = vld [vmem:[%s2 + $0x220] sm:$0xff]
    %v372 = vld [vmem:[%s2 + $0x228] sm:$0xff]
    %v373 = vld [vmem:[%s2 + $0x230] sm:$0xff]
    %v374 = vld [vmem:[%s2 + $0x238] sm:$0xff]
    %v375 = vld [vmem:[%s2 + $0x240] sm:$0xff]
    %v376 = vld [vmem:[%s2 + $0x248] sm:$0xff]
    %v377 = vld [vmem:[%s2 + $0x250] sm:$0xff]
    %v378 = vld [vmem:[%s2 + $0x258] sm:$0xff]
    %v379 = vld [vmem:[%s2 + $0x260] sm:$0xff]
    %v380 = vld [vmem:[%s2 + $0x268] sm:$0xff]
    %v381 = vld [vmem:[%s2 + $0x270] sm:$0xff]
    %v382 = vld [vmem:[%s2 + $0x278] sm:$0xff]
    %v383 = vld [vmem:[%s2 + $0x280] sm:$0xff]
    %v384 = vld [vmem:[%s2 + $0x288] sm:$0xff]
    %v385 = vld [vmem:[%s2 + $0x290] sm:$0xff]
    %v386 = vld [vmem:[%s2 + $0x298] sm:$0xff]
    %v387 = vld [vmem:[%s2 + $0x2a0] sm:$0xff]
    %v388 = vld [vmem:[%s2 + $0x2a8] sm:$0xff]
    %v389 = vld [vmem:[%s2 + $0x2b0] sm:$0xff]
    %v390 = vld [vmem:[%s2 + $0x2b8] sm:$0xff]
    %v391 = vld [vmem:[%s2 + $0x2c0] sm:$0xff]
    %v392 = vld [vmem:[%s2 + $0x2c8] sm:$0xff]
    %v393 = vld [vmem:[%s2 + $0x2d0] sm:$0xff]
    %v394 = vld [vmem:[%s2 + $0x2d8] sm:$0xff]
    %v395 = vld [vmem:[%s2 + $0x2e0] sm:$0xff]
    %v396 = vld [vmem:[%s2 + $0x2e8] sm:$0xff]
    %v397 = vld [vmem:[%s2 + $0x2f0] sm:$0xff]
    %v398 = vld [vmem:[%s2 + $0x2f8] sm:$0xff]
    %v399 = vld [vmem:[%s2 + $0x300] sm:$0xff]
    %v400 = vld [vmem:[%s2 + $0x308] sm:$0xff]
    %v401 = vld [vmem:[%s2 + $0x310] sm:$0xff]
    %v402 = vld [vmem:[%s2 + $0x318] sm:$0xff]
    %v403 = vld [vmem:[%s2 + $0x320] sm:$0xff]
    %v404 = vld [vmem:[%s2 + $0x328] sm:$0xff]
    %v405 = vld [vmem:[%s2 + $0x330] sm:$0xff]
    %v406 = vld [vmem:[%s2 + $0x338] sm:$0xff]
    %v407 = vld [vmem:[%s2 + $0x340] sm:$0xff]
    %v408 = vld [vmem:[%s2 + $0x348] sm:$0xff]
    %v409 = vld [vmem:[%s2 + $0x350] sm:$0xff]
    %v410 = vld [vmem:[%s2 + $0x358] sm:$0xff]
    %v411 = vld [vmem:[%s2 + $0x360] sm:$0xff]
    %v412 = vld [vmem:[%s2 + $0x368] sm:$0xff]
    %v413 = vld [vmem:[%s2 + $0x370] sm:$0xff]
    %v414 = vld [vmem:[%s2 + $0x378] sm:$0xff]
    %v415 = vld [vmem:[%s2 + $0x380] sm:$0xff]
    %v416 = vld [vmem:[%s2 + $0x388] sm:$0xff]
    %v417 = vld [vmem:[%s2 + $0x390] sm:$0xff]
    %v418 = vld [vmem:[%s2 + $0x398] sm:$0xff]
    %v419 = vld [vmem:[%s2 + $0x3a0] sm:$0xff]
    %v420 = vld [vmem:[%s2 + $0x3a8] sm:$0xff]
    %v421 = vld [vmem:[%s2 + $0x3b0] sm:$0xff]
    %v422 = vld [vmem:[%s2 + $0x3b8] sm:$0xff]
    %v423 = vld [vmem:[%s2 + $0x3c0] sm:$0xff]
    %v424 = vld [vmem:[%s2 + $0x3c8] sm:$0xff]
    %v425 = vld [vmem:[%s2 + $0x3d0] sm:$0xff]
    %v426 = vld [vmem:[%s2 + $0x3d8] sm:$0xff]
    %v427 = vld [vmem:[%s2 + $0x3e0] sm:$0xff]
    %v428 = vld [vmem:[%s2 + $0x3e8] sm:$0xff]
    %v429 = vld [vmem:[%s2 + $0x3f0] sm:$0xff]
    %v430 = vld [vmem:[%s2 + $0x3f8] sm:$0xff]
    %v431 = vld [vmem:[%s3] sm:$0xff]
    %v432 = vld [vmem:[%s3 + $0x8] sm:$0xff]
    %v433 = vld [vmem:[%s3 + $0x10] sm:$0xff]
    %v434 = vld [vmem:[%s3 + $0x18] sm:$0xff]
    %v435 = vld [vmem:[%s3 + $0x20] sm:$0xff]
    %v436 = vld [vmem:[%s3 + $0x28] sm:$0xff]
    %v437 = vld [vmem:[%s3 + $0x30] sm:$0xff]
    %v438 = vld [vmem:[%s3 + $0x38] sm:$0xff]
    %v439 = vld [vmem:[%s3 + $0x40] sm:$0xff]
    %v440 = vld [vmem:[%s3 + $0x48] sm:$0xff]
    %v441 = vld [vmem:[%s3 + $0x50] sm:$0xff]
    %v442 = vld [vmem:[%s3 + $0x58] sm:$0xff]
    %v443 = vld [vmem:[%s3 + $0x60] sm:$0xff]
    %v444 = vld [vmem:[%s3 + $0x68] sm:$0xff]
    %v445 = vld [vmem:[%s3 + $0x70] sm:$0xff]
    %v446 = vld [vmem:[%s3 + $0x78] sm:$0xff]
    %v447 = vld [vmem:[%s3 + $0x80] sm:$0xff]
    %v448 = vld [vmem:[%s3 + $0x88] sm:$0xff]
    %v449 = vld [vmem:[%s3 + $0x90] sm:$0xff]
    %v450 = vld [vmem:[%s3 + $0x98] sm:$0xff]
    %v451 = vld [vmem:[%s3 + $0xa0] sm:$0xff]
    %v452 = vld [vmem:[%s3 + $0xa8] sm:$0xff]
    %v453 = vld [vmem:[%s3 + $0xb0] sm:$0xff]
    %v454 = vld [vmem:[%s3 + $0xb8] sm:$0xff]
    %v455 = vld [vmem:[%s3 + $0xc0] sm:$0xff]
    %v456 = vld [vmem:[%s3 + $0xc8] sm:$0xff]
    %v457 = vld [vmem:[%s3 + $0xd0] sm:$0xff]
    %v458 = vld [vmem:[%s3 + $0xd8] sm:$0xff]
    %v459 = vld [vmem:[%s3 + $0xe0] sm:$0xff]
    %v460 = vld [vmem:[%s3 + $0xe8] sm:$0xff]
    %v461 = vld [vmem:[%s3 + $0xf0] sm:$0xff]
    %v462 = vld [vmem:[%s3 + $0xf8] sm:$0xff]
    %v463 = vld [vmem:[%s3 + $0x100] sm:$0xff]
    %v464 = vld [vmem:[%s3 + $0x108] sm:$0xff]
    %v465 = vld [vmem:[%s3 + $0x110] sm:$0xff]
    %v466 = vld [vmem:[%s3 + $0x118] sm:$0xff]
    %v467 = vld [vmem:[%s3 + $0x120] sm:$0xff]
    %v468 = vld [vmem:[%s3 + $0x128] sm:$0xff]
    %v469 = vld [vmem:[%s3 + $0x130] sm:$0xff]
    %v470 = vld [vmem:[%s3 + $0x138] sm:$0xff]
    %v471 = vld [vmem:[%s3 + $0x140] sm:$0xff]
    %v472 = vld [vmem:[%s3 + $0x148] sm:$0xff]
    %v473 = vld [vmem:[%s3 + $0x150] sm:$0xff]
    %v474 = vld [vmem:[%s3 + $0x158] sm:$0xff]
    %v475 = vld [vmem:[%s3 + $0x160] sm:$0xff]
    %v476 = vld [vmem:[%s3 + $0x168] sm:$0xff]
    %v477 = vld [vmem:[%s3 + $0x170] sm:$0xff]
    %v478 = vld [vmem:[%s3 + $0x178] sm:$0xff]
    %v479 = vld [vmem:[%s3 + $0x180] sm:$0xff]
    %v480 = vld [vmem:[%s3 + $0x188] sm:$0xff]
    %v481 = vld [vmem:[%s3 + $0x190] sm:$0xff]
    %v482 = vld [vmem:[%s3 + $0x198] sm:$0xff]
    %v483 = vld [vmem:[%s3 + $0x1a0] sm:$0xff]
    %v484 = vld [vmem:[%s3 + $0x1a8] sm:$0xff]
    %v485 = vld [vmem:[%s3 + $0x1b0] sm:$0xff]
    %v486 = vld [vmem:[%s3 + $0x1b8] sm:$0xff]
    %v487 = vld [vmem:[%s3 + $0x1c0] sm:$0xff]
    %v488 = vld [vmem:[%s3 + $0x1c8] sm:$0xff]
    %v489 = vld [vmem:[%s3 + $0x1d0] sm:$0xff]
    %v490 = vld [vmem:[%s3 + $0x1d8] sm:$0xff]
    %v491 = vld [vmem:[%s3 + $0x1e0] sm:$0xff]
    %v492 = vld [vmem:[%s3 + $0x1e8] sm:$0xff]
    %v493 = vld [vmem:[%s3 + $0x1f0] sm:$0xff]
    %v494 = vld [vmem:[%s3 + $0x1f8] sm:$0xff]
    %496 = vset.pattern.permute.xlu0 0
    %497 = vperm.xlu0 %496, %v431
    %v498 = vpop.permute.xlu0 %497
    %501 = vset.pattern.permute.xlu0 0
    %502 = vperm.xlu0 %501, %v432
    %v503 = vpop.permute.xlu0 %502
    %506 = vset.pattern.permute.xlu0 0
    %507 = vperm.xlu0 %506, %v433
    %v508 = vpop.permute.xlu0 %507
    %511 = vset.pattern.permute.xlu0 0
    %512 = vperm.xlu0 %511, %v434
    %v513 = vpop.permute.xlu0 %512
    %516 = vset.pattern.permute.xlu0 0
    %517 = vperm.xlu0 %516, %v435
    %v518 = vpop.permute.xlu0 %517
    %521 = vset.pattern.permute.xlu0 0
    %522 = vperm.xlu0 %521, %v436
    %v523 = vpop.permute.xlu0 %522
    %526 = vset.pattern.permute.xlu0 0
    %527 = vperm.xlu0 %526, %v437
    %v528 = vpop.permute.xlu0 %527
    %531 = vset.pattern.permute.xlu0 0
    %532 = vperm.xlu0 %531, %v438
    %v533 = vpop.permute.xlu0 %532
    %536 = vset.pattern.permute.xlu0 0
    %537 = vperm.xlu0 %536, %v439
    %v538 = vpop.permute.xlu0 %537
    %541 = vset.pattern.permute.xlu0 0
    %542 = vperm.xlu0 %541, %v440
    %v543 = vpop.permute.xlu0 %542
    %546 = vset.pattern.permute.xlu0 0
    %547 = vperm.xlu0 %546, %v441
    %v548 = vpop.permute.xlu0 %547
    %551 = vset.pattern.permute.xlu0 0
    %552 = vperm.xlu0 %551, %v442
    %v553 = vpop.permute.xlu0 %552
    %556 = vset.pattern.permute.xlu0 0
    %557 = vperm.xlu0 %556, %v443
    %v558 = vpop.permute.xlu0 %557
    %561 = vset.pattern.permute.xlu0 0
    %562 = vperm.xlu0 %561, %v444
    %v563 = vpop.permute.xlu0 %562
    %566 = vset.pattern.permute.xlu0 0
    %567 = vperm.xlu0 %566, %v445
    %v568 = vpop.permute.xlu0 %567
    %571 = vset.pattern.permute.xlu0 0
    %572 = vperm.xlu0 %571, %v446
    %v573 = vpop.permute.xlu0 %572
    %576 = vset.pattern.permute.xlu0 0
    %577 = vperm.xlu0 %576, %v447
    %v578 = vpop.permute.xlu0 %577
    %581 = vset.pattern.permute.xlu0 0
    %582 = vperm.xlu0 %581, %v448
    %v583 = vpop.permute.xlu0 %582
    %586 = vset.pattern.permute.xlu0 0
    %587 = vperm.xlu0 %586, %v449
    %v588 = vpop.permute.xlu0 %587
    %591 = vset.pattern.permute.xlu0 0
    %592 = vperm.xlu0 %591, %v450
    %v593 = vpop.permute.xlu0 %592
    %596 = vset.pattern.permute.xlu0 0
    %597 = vperm.xlu0 %596, %v451
    %v598 = vpop.permute.xlu0 %597
    %601 = vset.pattern.permute.xlu0 0
    %602 = vperm.xlu0 %601, %v452
    %v603 = vpop.permute.xlu0 %602
    %606 = vset.pattern.permute.xlu0 0
    %607 = vperm.xlu0 %606, %v453
    %v608 = vpop.permute.xlu0 %607
    %611 = vset.pattern.permute.xlu0 0
    %612 = vperm.xlu0 %611, %v454
    %v613 = vpop.permute.xlu0 %612
    %616 = vset.pattern.permute.xlu0 0
    %617 = vperm.xlu0 %616, %v455
    %v618 = vpop.permute.xlu0 %617
    %621 = vset.pattern.permute.xlu0 0
    %622 = vperm.xlu0 %621, %v456
    %v623 = vpop.permute.xlu0 %622
    %626 = vset.pattern.permute.xlu0 0
    %627 = vperm.xlu0 %626, %v457
    %v628 = vpop.permute.xlu0 %627
    %631 = vset.pattern.permute.xlu0 0
    %632 = vperm.xlu0 %631, %v458
    %v633 = vpop.permute.xlu0 %632
    %636 = vset.pattern.permute.xlu0 0
    %637 = vperm.xlu0 %636, %v459
    %v638 = vpop.permute.xlu0 %637
    %641 = vset.pattern.permute.xlu0 0
    %642 = vperm.xlu0 %641, %v460
    %v643 = vpop.permute.xlu0 %642
    %646 = vset.pattern.permute.xlu0 0
    %647 = vperm.xlu0 %646, %v461
    %v648 = vpop.permute.xlu0 %647
    %651 = vset.pattern.permute.xlu0 0
    %652 = vperm.xlu0 %651, %v462
    %v653 = vpop.permute.xlu0 %652
    %656 = vset.pattern.permute.xlu0 0
    %657 = vperm.xlu0 %656, %v463
    %v658 = vpop.permute.xlu0 %657
    %661 = vset.pattern.permute.xlu0 0
    %662 = vperm.xlu0 %661, %v464
    %v663 = vpop.permute.xlu0 %662
    %666 = vset.pattern.permute.xlu0 0
    %667 = vperm.xlu0 %666, %v465
    %v668 = vpop.permute.xlu0 %667
    %671 = vset.pattern.permute.xlu0 0
    %672 = vperm.xlu0 %671, %v466
    %v673 = vpop.permute.xlu0 %672
    %676 = vset.pattern.permute.xlu0 0
    %677 = vperm.xlu0 %676, %v467
    %v678 = vpop.permute.xlu0 %677
    %681 = vset.pattern.permute.xlu0 0
    %682 = vperm.xlu0 %681, %v468
    %v683 = vpop.permute.xlu0 %682
    %686 = vset.pattern.permute.xlu0 0
    %687 = vperm.xlu0 %686, %v469
    %v688 = vpop.permute.xlu0 %687
    %691 = vset.pattern.permute.xlu0 0
    %692 = vperm.xlu0 %691, %v470
    %v693 = vpop.permute.xlu0 %692
    %696 = vset.pattern.permute.xlu0 0
    %697 = vperm.xlu0 %696, %v471
    %v698 = vpop.permute.xlu0 %697
    %701 = vset.pattern.permute.xlu0 0
    %702 = vperm.xlu0 %701, %v472
    %v703 = vpop.permute.xlu0 %702
    %706 = vset.pattern.permute.xlu0 0
    %707 = vperm.xlu0 %706, %v473
    %v708 = vpop.permute.xlu0 %707
    %711 = vset.pattern.permute.xlu0 0
    %712 = vperm.xlu0 %711, %v474
    %v713 = vpop.permute.xlu0 %712
    %716 = vset.pattern.permute.xlu0 0
    %717 = vperm.xlu0 %716, %v475
    %v718 = vpop.permute.xlu0 %717
    %721 = vset.pattern.permute.xlu0 0
    %722 = vperm.xlu0 %721, %v476
    %v723 = vpop.permute.xlu0 %722
    %726 = vset.pattern.permute.xlu0 0
    %727 = vperm.xlu0 %726, %v477
    %v728 = vpop.permute.xlu0 %727
    %731 = vset.pattern.permute.xlu0 0
    %732 = vperm.xlu0 %731, %v478
    %v733 = vpop.permute.xlu0 %732
    %736 = vset.pattern.permute.xlu0 0
    %737 = vperm.xlu0 %736, %v479
    %v738 = vpop.permute.xlu0 %737
    %741 = vset.pattern.permute.xlu0 0
    %742 = vperm.xlu0 %741, %v480
    %v743 = vpop.permute.xlu0 %742
    %746 = vset.pattern.permute.xlu0 0
    %747 = vperm.xlu0 %746, %v481
    %v748 = vpop.permute.xlu0 %747
    %751 = vset.pattern.permute.xlu0 0
    %752 = vperm.xlu0 %751, %v482
    %v753 = vpop.permute.xlu0 %752
    %756 = vset.pattern.permute.xlu0 0
    %757 = vperm.xlu0 %756, %v483
    %v758 = vpop.permute.xlu0 %757
    %761 = vset.pattern.permute.xlu0 0
    %762 = vperm.xlu0 %761, %v484
    %v763 = vpop.permute.xlu0 %762
    %766 = vset.pattern.permute.xlu0 0
    %767 = vperm.xlu0 %766, %v485
    %v768 = vpop.permute.xlu0 %767
    %771 = vset.pattern.permute.xlu0 0
    %772 = vperm.xlu0 %771, %v486
    %v773 = vpop.permute.xlu0 %772
    %776 = vset.pattern.permute.xlu0 0
    %777 = vperm.xlu0 %776, %v487
    %v778 = vpop.permute.xlu0 %777
    %781 = vset.pattern.permute.xlu0 0
    %782 = vperm.xlu0 %781, %v488
    %v783 = vpop.permute.xlu0 %782
    %786 = vset.pattern.permute.xlu0 0
    %787 = vperm.xlu0 %786, %v489
    %v788 = vpop.permute.xlu0 %787
    %791 = vset.pattern.permute.xlu0 0
    %792 = vperm.xlu0 %791, %v490
    %v793 = vpop.permute.xlu0 %792
    %796 = vset.pattern.permute.xlu0 0
    %797 = vperm.xlu0 %796, %v491
    %v798 = vpop.permute.xlu0 %797
    %801 = vset.pattern.permute.xlu0 0
    %802 = vperm.xlu0 %801, %v492
    %v803 = vpop.permute.xlu0 %802
    %806 = vset.pattern.permute.xlu0 0
    %807 = vperm.xlu0 %806, %v493
    %v808 = vpop.permute.xlu0 %807
    %811 = vset.pattern.permute.xlu0 0
    %812 = vperm.xlu0 %811, %v494
    %v813 = vpop.permute.xlu0 %812
    %v943 = vunpack.c.l.b16 %v303
    %v944 = vunpack.c.h.b16 %v303
    %v945 = vunpack.c.l.b16 %v304
    %v946 = vunpack.c.h.b16 %v304
    %v947 = vunpack.c.l.b16 %v305
    %v948 = vunpack.c.h.b16 %v305
    %v949 = vunpack.c.l.b16 %v306
    %v950 = vunpack.c.h.b16 %v306
    %v951 = vunpack.c.l.b16 %v307
    %v952 = vunpack.c.h.b16 %v307
    %v953 = vunpack.c.l.b16 %v308
    %v954 = vunpack.c.h.b16 %v308
    %v955 = vunpack.c.l.b16 %v309
    %v956 = vunpack.c.h.b16 %v309
    %v957 = vunpack.c.l.b16 %v310
    %v958 = vunpack.c.h.b16 %v310
    %v959 = vunpack.c.l.b16 %v311
    %v960 = vunpack.c.h.b16 %v311
    %v961 = vunpack.c.l.b16 %v312
    %v962 = vunpack.c.h.b16 %v312
    %v963 = vunpack.c.l.b16 %v313
    %v964 = vunpack.c.h.b16 %v313
    %v965 = vunpack.c.l.b16 %v314
    %v966 = vunpack.c.h.b16 %v314
    %v967 = vunpack.c.l.b16 %v315
    %v968 = vunpack.c.h.b16 %v315
    %v969 = vunpack.c.l.b16 %v316
    %v970 = vunpack.c.h.b16 %v316
    %v971 = vunpack.c.l.b16 %v317
    %v972 = vunpack.c.h.b16 %v317
    %v973 = vunpack.c.l.b16 %v318
    %v974 = vunpack.c.h.b16 %v318
    %v975 = vunpack.c.l.b16 %v319
    %v976 = vunpack.c.h.b16 %v319
    %v977 = vunpack.c.l.b16 %v320
    %v978 = vunpack.c.h.b16 %v320
    %v979 = vunpack.c.l.b16 %v321
    %v980 = vunpack.c.h.b16 %v321
    %v981 = vunpack.c.l.b16 %v322
    %v982 = vunpack.c.h.b16 %v322
    %v983 = vunpack.c.l.b16 %v323
    %v984 = vunpack.c.h.b16 %v323
    %v985 = vunpack.c.l.b16 %v324
    %v986 = vunpack.c.h.b16 %v324
    %v987 = vunpack.c.l.b16 %v325
    %v988 = vunpack.c.h.b16 %v325
    %v989 = vunpack.c.l.b16 %v326
    %v990 = vunpack.c.h.b16 %v326
    %v991 = vunpack.c.l.b16 %v327
    %v992 = vunpack.c.h.b16 %v327
    %v993 = vunpack.c.l.b16 %v328
    %v994 = vunpack.c.h.b16 %v328
    %v995 = vunpack.c.l.b16 %v329
    %v996 = vunpack.c.h.b16 %v329
    %v997 = vunpack.c.l.b16 %v330
    %v998 = vunpack.c.h.b16 %v330
    %v999 = vunpack.c.l.b16 %v331
    %v1000 = vunpack.c.h.b16 %v331
    %v1001 = vunpack.c.l.b16 %v332
    %v1002 = vunpack.c.h.b16 %v332
    %v1003 = vunpack.c.l.b16 %v333
    %v1004 = vunpack.c.h.b16 %v333
    %v1005 = vunpack.c.l.b16 %v334
    %v1006 = vunpack.c.h.b16 %v334
    %v1007 = vunpack.c.l.b16 %v335
    %v1008 = vunpack.c.h.b16 %v335
    %v1009 = vunpack.c.l.b16 %v336
    %v1010 = vunpack.c.h.b16 %v336
    %v1011 = vunpack.c.l.b16 %v337
    %v1012 = vunpack.c.h.b16 %v337
    %v1013 = vunpack.c.l.b16 %v338
    %v1014 = vunpack.c.h.b16 %v338
    %v1015 = vunpack.c.l.b16 %v339
    %v1016 = vunpack.c.h.b16 %v339
    %v1017 = vunpack.c.l.b16 %v340
    %v1018 = vunpack.c.h.b16 %v340
    %v1019 = vunpack.c.l.b16 %v341
    %v1020 = vunpack.c.h.b16 %v341
    %v1021 = vunpack.c.l.b16 %v342
    %v1022 = vunpack.c.h.b16 %v342
    %v1023 = vunpack.c.l.b16 %v343
    %v1024 = vunpack.c.h.b16 %v343
    %v1025 = vunpack.c.l.b16 %v344
    %v1026 = vunpack.c.h.b16 %v344
    %v1027 = vunpack.c.l.b16 %v345
    %v1028 = vunpack.c.h.b16 %v345
    %v1029 = vunpack.c.l.b16 %v346
    %v1030 = vunpack.c.h.b16 %v346
    %v1031 = vunpack.c.l.b16 %v347
    %v1032 = vunpack.c.h.b16 %v347
    %v1033 = vunpack.c.l.b16 %v348
    %v1034 = vunpack.c.h.b16 %v348
    %v1035 = vunpack.c.l.b16 %v349
    %v1036 = vunpack.c.h.b16 %v349
    %v1037 = vunpack.c.l.b16 %v350
    %v1038 = vunpack.c.h.b16 %v350
    %v1039 = vunpack.c.l.b16 %v351
    %v1040 = vunpack.c.h.b16 %v351
    %v1041 = vunpack.c.l.b16 %v352
    %v1042 = vunpack.c.h.b16 %v352
    %v1043 = vunpack.c.l.b16 %v353
    %v1044 = vunpack.c.h.b16 %v353
    %v1045 = vunpack.c.l.b16 %v354
    %v1046 = vunpack.c.h.b16 %v354
    %v1047 = vunpack.c.l.b16 %v355
    %v1048 = vunpack.c.h.b16 %v355
    %v1049 = vunpack.c.l.b16 %v356
    %v1050 = vunpack.c.h.b16 %v356
    %v1051 = vunpack.c.l.b16 %v357
    %v1052 = vunpack.c.h.b16 %v357
    %v1053 = vunpack.c.l.b16 %v358
    %v1054 = vunpack.c.h.b16 %v358
    %v1055 = vunpack.c.l.b16 %v359
    %v1056 = vunpack.c.h.b16 %v359
    %v1057 = vunpack.c.l.b16 %v360
    %v1058 = vunpack.c.h.b16 %v360
    %v1059 = vunpack.c.l.b16 %v361
    %v1060 = vunpack.c.h.b16 %v361
    %v1061 = vunpack.c.l.b16 %v362
    %v1062 = vunpack.c.h.b16 %v362
    %v1063 = vunpack.c.l.b16 %v363
    %v1064 = vunpack.c.h.b16 %v363
    %v1065 = vunpack.c.l.b16 %v364
    %v1066 = vunpack.c.h.b16 %v364
    %v1067 = vunpack.c.l.b16 %v365
    %v1068 = vunpack.c.h.b16 %v365
    %v1069 = vunpack.c.l.b16 %v366
    %v1070 = vunpack.c.h.b16 %v366
    %v1071 = vunpack.c.l.b16 %v367
    %v1072 = vunpack.c.h.b16 %v367
    %v1073 = vunpack.c.l.b16 %v368
    %v1074 = vunpack.c.h.b16 %v368
    %v1075 = vunpack.c.l.b16 %v369
    %v1076 = vunpack.c.h.b16 %v369
    %v1077 = vunpack.c.l.b16 %v370
    %v1078 = vunpack.c.h.b16 %v370
    %v1079 = vunpack.c.l.b16 %v371
    %v1080 = vunpack.c.h.b16 %v371
    %v1081 = vunpack.c.l.b16 %v372
    %v1082 = vunpack.c.h.b16 %v372
    %v1083 = vunpack.c.l.b16 %v373
    %v1084 = vunpack.c.h.b16 %v373
    %v1085 = vunpack.c.l.b16 %v374
    %v1086 = vunpack.c.h.b16 %v374
    %v1087 = vunpack.c.l.b16 %v375
    %v1088 = vunpack.c.h.b16 %v375
    %v1089 = vunpack.c.l.b16 %v376
    %v1090 = vunpack.c.h.b16 %v376
    %v1091 = vunpack.c.l.b16 %v377
    %v1092 = vunpack.c.h.b16 %v377
    %v1093 = vunpack.c.l.b16 %v378
    %v1094 = vunpack.c.h.b16 %v378
    %v1095 = vunpack.c.l.b16 %v379
    %v1096 = vunpack.c.h.b16 %v379
    %v1097 = vunpack.c.l.b16 %v380
    %v1098 = vunpack.c.h.b16 %v380
    %v1099 = vunpack.c.l.b16 %v381
    %v1100 = vunpack.c.h.b16 %v381
    %v1101 = vunpack.c.l.b16 %v382
    %v1102 = vunpack.c.h.b16 %v382
    %v1103 = vunpack.c.l.b16 %v383
    %v1104 = vunpack.c.h.b16 %v383
    %v1105 = vunpack.c.l.b16 %v384
    %v1106 = vunpack.c.h.b16 %v384
    %v1107 = vunpack.c.l.b16 %v385
    %v1108 = vunpack.c.h.b16 %v385
    %v1109 = vunpack.c.l.b16 %v386
    %v1110 = vunpack.c.h.b16 %v386
    %v1111 = vunpack.c.l.b16 %v387
    %v1112 = vunpack.c.h.b16 %v387
    %v1113 = vunpack.c.l.b16 %v388
    %v1114 = vunpack.c.h.b16 %v388
    %v1115 = vunpack.c.l.b16 %v389
    %v1116 = vunpack.c.h.b16 %v389
    %v1117 = vunpack.c.l.b16 %v390
    %v1118 = vunpack.c.h.b16 %v390
    %v1119 = vunpack.c.l.b16 %v391
    %v1120 = vunpack.c.h.b16 %v391
    %v1121 = vunpack.c.l.b16 %v392
    %v1122 = vunpack.c.h.b16 %v392
    %v1123 = vunpack.c.l.b16 %v393
    %v1124 = vunpack.c.h.b16 %v393
    %v1125 = vunpack.c.l.b16 %v394
    %v1126 = vunpack.c.h.b16 %v394
    %v1127 = vunpack.c.l.b16 %v395
    %v1128 = vunpack.c.h.b16 %v395
    %v1129 = vunpack.c.l.b16 %v396
    %v1130 = vunpack.c.h.b16 %v396
    %v1131 = vunpack.c.l.b16 %v397
    %v1132 = vunpack.c.h.b16 %v397
    %v1133 = vunpack.c.l.b16 %v398
    %v1134 = vunpack.c.h.b16 %v398
    %v1135 = vunpack.c.l.b16 %v399
    %v1136 = vunpack.c.h.b16 %v399
    %v1137 = vunpack.c.l.b16 %v400
    %v1138 = vunpack.c.h.b16 %v400
    %v1139 = vunpack.c.l.b16 %v401
    %v1140 = vunpack.c.h.b16 %v401
    %v1141 = vunpack.c.l.b16 %v402
    %v1142 = vunpack.c.h.b16 %v402
    %v1143 = vunpack.c.l.b16 %v403
    %v1144 = vunpack.c.h.b16 %v403
    %v1145 = vunpack.c.l.b16 %v404
    %v1146 = vunpack.c.h.b16 %v404
    %v1147 = vunpack.c.l.b16 %v405
    %v1148 = vunpack.c.h.b16 %v405
    %v1149 = vunpack.c.l.b16 %v406
    %v1150 = vunpack.c.h.b16 %v406
    %v1151 = vunpack.c.l.b16 %v407
    %v1152 = vunpack.c.h.b16 %v407
    %v1153 = vunpack.c.l.b16 %v408
    %v1154 = vunpack.c.h.b16 %v408
    %v1155 = vunpack.c.l.b16 %v409
    %v1156 = vunpack.c.h.b16 %v409
    %v1157 = vunpack.c.l.b16 %v410
    %v1158 = vunpack.c.h.b16 %v410
    %v1159 = vunpack.c.l.b16 %v411
    %v1160 = vunpack.c.h.b16 %v411
    %v1161 = vunpack.c.l.b16 %v412
    %v1162 = vunpack.c.h.b16 %v412
    %v1163 = vunpack.c.l.b16 %v413
    %v1164 = vunpack.c.h.b16 %v413
    %v1165 = vunpack.c.l.b16 %v414
    %v1166 = vunpack.c.h.b16 %v414
    %v1167 = vunpack.c.l.b16 %v415
    %v1168 = vunpack.c.h.b16 %v415
    %v1169 = vunpack.c.l.b16 %v416
    %v1170 = vunpack.c.h.b16 %v416
    %v1171 = vunpack.c.l.b16 %v417
    %v1172 = vunpack.c.h.b16 %v417
    %v1173 = vunpack.c.l.b16 %v418
    %v1174 = vunpack.c.h.b16 %v418
    %v1175 = vunpack.c.l.b16 %v419
    %v1176 = vunpack.c.h.b16 %v419
    %v1177 = vunpack.c.l.b16 %v420
    %v1178 = vunpack.c.h.b16 %v420
    %v1179 = vunpack.c.l.b16 %v421
    %v1180 = vunpack.c.h.b16 %v421
    %v1181 = vunpack.c.l.b16 %v422
    %v1182 = vunpack.c.h.b16 %v422
    %v1183 = vunpack.c.l.b16 %v423
    %v1184 = vunpack.c.h.b16 %v423
    %v1185 = vunpack.c.l.b16 %v424
    %v1186 = vunpack.c.h.b16 %v424
    %v1187 = vunpack.c.l.b16 %v425
    %v1188 = vunpack.c.h.b16 %v425
    %v1189 = vunpack.c.l.b16 %v426
    %v1190 = vunpack.c.h.b16 %v426
    %v1191 = vunpack.c.l.b16 %v427
    %v1192 = vunpack.c.h.b16 %v427
    %v1193 = vunpack.c.l.b16 %v428
    %v1194 = vunpack.c.h.b16 %v428
    %v1195 = vunpack.c.l.b16 %v429
    %v1196 = vunpack.c.h.b16 %v429
    %v1197 = vunpack.c.l.b16 %v430
    %v1198 = vunpack.c.h.b16 %v430
    %v1199 = vpack.c.b16 %v947, %v943
    %v1200 = vpack.c.b16 %v948, %v944
    %v1201 = vpack.c.b16 %v949, %v945
    %v1202 = vpack.c.b16 %v950, %v946
    %v1203 = vpack.c.b16 %v955, %v951
    %v1204 = vpack.c.b16 %v956, %v952
    %v1205 = vpack.c.b16 %v957, %v953
    %v1206 = vpack.c.b16 %v958, %v954
    %v1207 = vpack.c.b16 %v963, %v959
    %v1208 = vpack.c.b16 %v964, %v960
    %v1209 = vpack.c.b16 %v965, %v961
    %v1210 = vpack.c.b16 %v966, %v962
    %v1211 = vpack.c.b16 %v971, %v967
    %v1212 = vpack.c.b16 %v972, %v968
    %v1213 = vpack.c.b16 %v973, %v969
    %v1214 = vpack.c.b16 %v974, %v970
    %v1215 = vpack.c.b16 %v979, %v975
    %v1216 = vpack.c.b16 %v980, %v976
    %v1217 = vpack.c.b16 %v981, %v977
    %v1218 = vpack.c.b16 %v982, %v978
    %v1219 = vpack.c.b16 %v987, %v983
    %v1220 = vpack.c.b16 %v988, %v984
    %v1221 = vpack.c.b16 %v989, %v985
    %v1222 = vpack.c.b16 %v990, %v986
    %v1223 = vpack.c.b16 %v995, %v991
    %v1224 = vpack.c.b16 %v996, %v992
    %v1225 = vpack.c.b16 %v997, %v993
    %v1226 = vpack.c.b16 %v998, %v994
    %v1227 = vpack.c.b16 %v1003, %v999
    %v1228 = vpack.c.b16 %v1004, %v1000
    %v1229 = vpack.c.b16 %v1005, %v1001
    %v1230 = vpack.c.b16 %v1006, %v1002
    %v1231 = vpack.c.b16 %v1011, %v1007
    %v1232 = vpack.c.b16 %v1012, %v1008
    %v1233 = vpack.c.b16 %v1013, %v1009
    %v1234 = vpack.c.b16 %v1014, %v1010
    %v1235 = vpack.c.b16 %v1019, %v1015
    %v1236 = vpack.c.b16 %v1020, %v1016
    %v1237 = vpack.c.b16 %v1021, %v1017
    %v1238 = vpack.c.b16 %v1022, %v1018
    %v1239 = vpack.c.b16 %v1027, %v1023
    %v1240 = vpack.c.b16 %v1028, %v1024
    %v1241 = vpack.c.b16 %v1029, %v1025
    %v1242 = vpack.c.b16 %v1030, %v1026
    %v1243 = vpack.c.b16 %v1035, %v1031
    %v1244 = vpack.c.b16 %v1036, %v1032
    %v1245 = vpack.c.b16 %v1037, %v1033
    %v1246 = vpack.c.b16 %v1038, %v1034
    %v1247 = vpack.c.b16 %v1043, %v1039
    %v1248 = vpack.c.b16 %v1044, %v1040
    %v1249 = vpack.c.b16 %v1045, %v1041
    %v1250 = vpack.c.b16 %v1046, %v1042
    %v1251 = vpack.c.b16 %v1051, %v1047
    %v1252 = vpack.c.b16 %v1052, %v1048
    %v1253 = vpack.c.b16 %v1053, %v1049
    %v1254 = vpack.c.b16 %v1054, %v1050
    %v1255 = vpack.c.b16 %v1059, %v1055
    %v1256 = vpack.c.b16 %v1060, %v1056
    %v1257 = vpack.c.b16 %v1061, %v1057
    %v1258 = vpack.c.b16 %v1062, %v1058
    %v1259 = vpack.c.b16 %v1067, %v1063
    %v1260 = vpack.c.b16 %v1068, %v1064
    %v1261 = vpack.c.b16 %v1069, %v1065
    %v1262 = vpack.c.b16 %v1070, %v1066
    %v1263 = vpack.c.b16 %v1075, %v1071
    %v1264 = vpack.c.b16 %v1076, %v1072
    %v1265 = vpack.c.b16 %v1077, %v1073
    %v1266 = vpack.c.b16 %v1078, %v1074
    %v1267 = vpack.c.b16 %v1083, %v1079
    %v1268 = vpack.c.b16 %v1084, %v1080
    %v1269 = vpack.c.b16 %v1085, %v1081
    %v1270 = vpack.c.b16 %v1086, %v1082
    %v1271 = vpack.c.b16 %v1091, %v1087
    %v1272 = vpack.c.b16 %v1092, %v1088
    %v1273 = vpack.c.b16 %v1093, %v1089
    %v1274 = vpack.c.b16 %v1094, %v1090
    %v1275 = vpack.c.b16 %v1099, %v1095
    %v1276 = vpack.c.b16 %v1100, %v1096
    %v1277 = vpack.c.b16 %v1101, %v1097
    %v1278 = vpack.c.b16 %v1102, %v1098
    %v1279 = vpack.c.b16 %v1107, %v1103
    %v1280 = vpack.c.b16 %v1108, %v1104
    %v1281 = vpack.c.b16 %v1109, %v1105
    %v1282 = vpack.c.b16 %v1110, %v1106
    %v1283 = vpack.c.b16 %v1115, %v1111
    %v1284 = vpack.c.b16 %v1116, %v1112
    %v1285 = vpack.c.b16 %v1117, %v1113
    %v1286 = vpack.c.b16 %v1118, %v1114
    %v1287 = vpack.c.b16 %v1123, %v1119
    %v1288 = vpack.c.b16 %v1124, %v1120
    %v1289 = vpack.c.b16 %v1125, %v1121
    %v1290 = vpack.c.b16 %v1126, %v1122
    %v1291 = vpack.c.b16 %v1131, %v1127
    %v1292 = vpack.c.b16 %v1132, %v1128
    %v1293 = vpack.c.b16 %v1133, %v1129
    %v1294 = vpack.c.b16 %v1134, %v1130
    %v1295 = vpack.c.b16 %v1139, %v1135
    %v1296 = vpack.c.b16 %v1140, %v1136
    %v1297 = vpack.c.b16 %v1141, %v1137
    %v1298 = vpack.c.b16 %v1142, %v1138
    %v1299 = vpack.c.b16 %v1147, %v1143
    %v1300 = vpack.c.b16 %v1148, %v1144
    %v1301 = vpack.c.b16 %v1149, %v1145
    %v1302 = vpack.c.b16 %v1150, %v1146
    %v1303 = vpack.c.b16 %v1155, %v1151
    %v1304 = vpack.c.b16 %v1156, %v1152
    %v1305 = vpack.c.b16 %v1157, %v1153
    %v1306 = vpack.c.b16 %v1158, %v1154
    %v1307 = vpack.c.b16 %v1163, %v1159
    %v1308 = vpack.c.b16 %v1164, %v1160
    %v1309 = vpack.c.b16 %v1165, %v1161
    %v1310 = vpack.c.b16 %v1166, %v1162
    %v1311 = vpack.c.b16 %v1171, %v1167
    %v1312 = vpack.c.b16 %v1172, %v1168
    %v1313 = vpack.c.b16 %v1173, %v1169
    %v1314 = vpack.c.b16 %v1174, %v1170
    %v1315 = vpack.c.b16 %v1179, %v1175
    %v1316 = vpack.c.b16 %v1180, %v1176
    %v1317 = vpack.c.b16 %v1181, %v1177
    %v1318 = vpack.c.b16 %v1182, %v1178
    %v1319 = vpack.c.b16 %v1187, %v1183
    %v1320 = vpack.c.b16 %v1188, %v1184
    %v1321 = vpack.c.b16 %v1189, %v1185
    %v1322 = vpack.c.b16 %v1190, %v1186
    %v1323 = vpack.c.b16 %v1195, %v1191
    %v1324 = vpack.c.b16 %v1196, %v1192
    %v1325 = vpack.c.b16 %v1197, %v1193
    %v1326 = vpack.c.b16 %v1198, %v1194
    %1455 = vmatprep.subr.bf16.mxu0 0
    %1456 = vmatpush1.bf16.msra.mxu0 %v181
    %1457 = vmatprep.subr.bf16.mxu0 0
    %1458 = vmatpush1.bf16.msra.mxu0 %v176
    %1459 = vmatprep.subr.bf16.mxu0 0
    %1460 = vmatpush1.bf16.msra.mxu0 %v171
    %1461 = vmatprep.subr.bf16.mxu0 0
    %1462 = vmatpush1.bf16.msra.mxu0 %v166
    %1463 = vmatprep.subr.bf16.mxu0 0
    %1464 = vmatpush1.bf16.msra.mxu0 %v161
    %1465 = vmatprep.subr.bf16.mxu0 0
    %1466 = vmatpush1.bf16.msra.mxu0 %v156
    %1467 = vmatprep.subr.bf16.mxu0 0
    %1468 = vmatpush1.bf16.msra.mxu0 %v151
    %1469 = vmatprep.subr.bf16.mxu0 0
    %1470 = vmatpush1.bf16.msra.mxu0 %v146
    %1471 = vmatprep.subr.bf16.mxu0 0
    %1472 = vmatpush2.bf16.msra.mxu0 %v221
    %1473 = vmatprep.subr.bf16.mxu0 0
    %1474 = vmatpush2.bf16.msra.mxu0 %v216
    %1475 = vmatprep.subr.bf16.mxu0 0
    %1476 = vmatpush2.bf16.msra.mxu0 %v211
    %1477 = vmatprep.subr.bf16.mxu0 0
    %1478 = vmatpush2.bf16.msra.mxu0 %v206
    %1479 = vmatprep.subr.bf16.mxu0 0
    %1480 = vmatpush2.bf16.msra.mxu0 %v201
    %1481 = vmatprep.subr.bf16.mxu0 0
    %1482 = vmatpush2.bf16.msra.mxu0 %v196
    %1483 = vmatprep.subr.bf16.mxu0 0
    %1484 = vmatpush2.bf16.msra.mxu0 %v191
    %1485 = vmatprep.subr.bf16.mxu0 0
    %1486 = vmatpush2.bf16.msra.mxu0 %v186
    %1487 = vmatprep.mubr.bf16.mxu0 %v1200
    %1488 = vmatmul.mubr.bf16.gmra.mxu0 %v1199
    %v1489 = vpop.f32.mrf.mxu0
    %v1490 = vadd.f32 %v498, %v1489
    %v1491 = vpop.f32.mrf.mxu0
    %v1492 = vpop.f32.mrf.mxu0
    %v1493 = vadd.f32 %v503, %v1492
    %v1494 = vpop.f32.mrf.mxu0
    %1495 = vmatprep.mubr.bf16.mxu0 %v1204
    %1496 = vmatmul.mubr.bf16.gmra.mxu0 %v1203
    %v1497 = vpop.f32.mrf.mxu0
    %v1498 = vadd.f32 %v508, %v1497
    %v1499 = vpop.f32.mrf.mxu0
    %v1500 = vpop.f32.mrf.mxu0
    %v1501 = vadd.f32 %v513, %v1500
    %v1502 = vpop.f32.mrf.mxu0
    %1503 = vmatprep.mubr.bf16.mxu0 %v1208
    %1504 = vmatmul.mubr.bf16.gmra.mxu0 %v1207
    %v1505 = vpop.f32.mrf.mxu0
    %v1506 = vadd.f32 %v518, %v1505
    %v1507 = vpop.f32.mrf.mxu0
    %v1508 = vpop.f32.mrf.mxu0
    %v1509 = vadd.f32 %v523, %v1508
    %v1510 = vpop.f32.mrf.mxu0
    %1511 = vmatprep.mubr.bf16.mxu0 %v1212
    %1512 = vmatmul.mubr.bf16.gmra.mxu0 %v1211
    %v1513 = vpop.f32.mrf.mxu0
    %v1514 = vadd.f32 %v528, %v1513
    %v1515 = vpop.f32.mrf.mxu0
    %v1516 = vpop.f32.mrf.mxu0
    %v1517 = vadd.f32 %v533, %v1516
    %v1518 = vpop.f32.mrf.mxu0
    %1519 = vmatprep.mubr.bf16.mxu0 %v1216
    %1520 = vmatmul.mubr.bf16.gmra.mxu0 %v1215
    %v1521 = vpop.f32.mrf.mxu0
    %v1522 = vadd.f32 %v538, %v1521
    %v1523 = vpop.f32.mrf.mxu0
    %v1524 = vpop.f32.mrf.mxu0
    %v1525 = vadd.f32 %v543, %v1524
    %v1526 = vpop.f32.mrf.mxu0
    %1527 = vmatprep.mubr.bf16.mxu0 %v1220
    %1528 = vmatmul.mubr.bf16.gmra.mxu0 %v1219
    %v1529 = vpop.f32.mrf.mxu0
    %v1530 = vadd.f32 %v548, %v1529
    %v1531 = vpop.f32.mrf.mxu0
    %v1532 = vpop.f32.mrf.mxu0
    %v1533 = vadd.f32 %v553, %v1532
    %v1534 = vpop.f32.mrf.mxu0
    %1535 = vmatprep.mubr.bf16.mxu0 %v1224
    %1536 = vmatmul.mubr.bf16.gmra.mxu0 %v1223
    %v1537 = vpop.f32.mrf.mxu0
    %v1538 = vadd.f32 %v558, %v1537
    %v1539 = vpop.f32.mrf.mxu0
    %v1540 = vpop.f32.mrf.mxu0
    %v1541 = vadd.f32 %v563, %v1540
    %v1542 = vpop.f32.mrf.mxu0
    %1543 = vmatprep.mubr.bf16.mxu0 %v1228
    %1544 = vmatmul.mubr.bf16.gmra.mxu0 %v1227
    %v1545 = vpop.f32.mrf.mxu0
    %v1546 = vadd.f32 %v568, %v1545
    %v1547 = vpop.f32.mrf.mxu0
    %v1548 = vpop.f32.mrf.mxu0
    %v1549 = vadd.f32 %v573, %v1548
    %v1550 = vpop.f32.mrf.mxu0
    %1551 = vmatprep.mubr.bf16.mxu0 %v1232
    %1552 = vmatmul.mubr.bf16.gmra.mxu0 %v1231
    %v1553 = vpop.f32.mrf.mxu0
    %v1554 = vadd.f32 %v578, %v1553
    %v1555 = vpop.f32.mrf.mxu0
    %v1556 = vpop.f32.mrf.mxu0
    %v1557 = vadd.f32 %v583, %v1556
    %v1558 = vpop.f32.mrf.mxu0
    %1559 = vmatprep.mubr.bf16.mxu0 %v1236
    %1560 = vmatmul.mubr.bf16.gmra.mxu0 %v1235
    %v1561 = vpop.f32.mrf.mxu0
    %v1562 = vadd.f32 %v588, %v1561
    %v1563 = vpop.f32.mrf.mxu0
    %v1564 = vpop.f32.mrf.mxu0
    %v1565 = vadd.f32 %v593, %v1564
    %v1566 = vpop.f32.mrf.mxu0
    %1567 = vmatprep.mubr.bf16.mxu0 %v1240
    %1568 = vmatmul.mubr.bf16.gmra.mxu0 %v1239
    %v1569 = vpop.f32.mrf.mxu0
    %v1570 = vadd.f32 %v598, %v1569
    %v1571 = vpop.f32.mrf.mxu0
    %v1572 = vpop.f32.mrf.mxu0
    %v1573 = vadd.f32 %v603, %v1572
    %v1574 = vpop.f32.mrf.mxu0
    %1575 = vmatprep.mubr.bf16.mxu0 %v1244
    %1576 = vmatmul.mubr.bf16.gmra.mxu0 %v1243
    %v1577 = vpop.f32.mrf.mxu0
    %v1578 = vadd.f32 %v608, %v1577
    %v1579 = vpop.f32.mrf.mxu0
    %v1580 = vpop.f32.mrf.mxu0
    %v1581 = vadd.f32 %v613, %v1580
    %v1582 = vpop.f32.mrf.mxu0
    %1583 = vmatprep.mubr.bf16.mxu0 %v1248
    %1584 = vmatmul.mubr.bf16.gmra.mxu0 %v1247
    %v1585 = vpop.f32.mrf.mxu0
    %v1586 = vadd.f32 %v618, %v1585
    %v1587 = vpop.f32.mrf.mxu0
    %v1588 = vpop.f32.mrf.mxu0
    %v1589 = vadd.f32 %v623, %v1588
    %v1590 = vpop.f32.mrf.mxu0
    %1591 = vmatprep.mubr.bf16.mxu0 %v1252
    %1592 = vmatmul.mubr.bf16.gmra.mxu0 %v1251
    %v1593 = vpop.f32.mrf.mxu0
    %v1594 = vadd.f32 %v628, %v1593
    %v1595 = vpop.f32.mrf.mxu0
    %v1596 = vpop.f32.mrf.mxu0
    %v1597 = vadd.f32 %v633, %v1596
    %v1598 = vpop.f32.mrf.mxu0
    %1599 = vmatprep.mubr.bf16.mxu0 %v1256
    %1600 = vmatmul.mubr.bf16.gmra.mxu0 %v1255
    %v1601 = vpop.f32.mrf.mxu0
    %v1602 = vadd.f32 %v638, %v1601
    %v1603 = vpop.f32.mrf.mxu0
    %v1604 = vpop.f32.mrf.mxu0
    %v1605 = vadd.f32 %v643, %v1604
    %v1606 = vpop.f32.mrf.mxu0
    %1607 = vmatprep.mubr.bf16.mxu0 %v1260
    %1608 = vmatmul.mubr.bf16.gmra.mxu0 %v1259
    %v1609 = vpop.f32.mrf.mxu0
    %v1610 = vadd.f32 %v648, %v1609
    %v1611 = vpop.f32.mrf.mxu0
    %v1612 = vpop.f32.mrf.mxu0
    %v1613 = vadd.f32 %v653, %v1612
    %v1614 = vpop.f32.mrf.mxu0
    %1615 = vmatprep.mubr.bf16.mxu0 %v1264
    %1616 = vmatmul.mubr.bf16.gmra.mxu0 %v1263
    %v1617 = vpop.f32.mrf.mxu0
    %v1618 = vadd.f32 %v658, %v1617
    %v1619 = vpop.f32.mrf.mxu0
    %v1620 = vpop.f32.mrf.mxu0
    %v1621 = vadd.f32 %v663, %v1620
    %v1622 = vpop.f32.mrf.mxu0
    %1623 = vmatprep.mubr.bf16.mxu0 %v1268
    %1624 = vmatmul.mubr.bf16.gmra.mxu0 %v1267
    %v1625 = vpop.f32.mrf.mxu0
    %v1626 = vadd.f32 %v668, %v1625
    %v1627 = vpop.f32.mrf.mxu0
    %v1628 = vpop.f32.mrf.mxu0
    %v1629 = vadd.f32 %v673, %v1628
    %v1630 = vpop.f32.mrf.mxu0
    %1631 = vmatprep.mubr.bf16.mxu0 %v1272
    %1632 = vmatmul.mubr.bf16.gmra.mxu0 %v1271
    %v1633 = vpop.f32.mrf.mxu0
    %v1634 = vadd.f32 %v678, %v1633
    %v1635 = vpop.f32.mrf.mxu0
    %v1636 = vpop.f32.mrf.mxu0
    %v1637 = vadd.f32 %v683, %v1636
    %v1638 = vpop.f32.mrf.mxu0
    %1639 = vmatprep.mubr.bf16.mxu0 %v1276
    %1640 = vmatmul.mubr.bf16.gmra.mxu0 %v1275
    %v1641 = vpop.f32.mrf.mxu0
    %v1642 = vadd.f32 %v688, %v1641
    %v1643 = vpop.f32.mrf.mxu0
    %v1644 = vpop.f32.mrf.mxu0
    %v1645 = vadd.f32 %v693, %v1644
    %v1646 = vpop.f32.mrf.mxu0
    %1647 = vmatprep.mubr.bf16.mxu0 %v1280
    %1648 = vmatmul.mubr.bf16.gmra.mxu0 %v1279
    %v1649 = vpop.f32.mrf.mxu0
    %v1650 = vadd.f32 %v698, %v1649
    %v1651 = vpop.f32.mrf.mxu0
    %v1652 = vpop.f32.mrf.mxu0
    %v1653 = vadd.f32 %v703, %v1652
    %v1654 = vpop.f32.mrf.mxu0
    %1655 = vmatprep.mubr.bf16.mxu0 %v1284
    %1656 = vmatmul.mubr.bf16.gmra.mxu0 %v1283
    %v1657 = vpop.f32.mrf.mxu0
    %v1658 = vadd.f32 %v708, %v1657
    %v1659 = vpop.f32.mrf.mxu0
    %v1660 = vpop.f32.mrf.mxu0
    %v1661 = vadd.f32 %v713, %v1660
    %v1662 = vpop.f32.mrf.mxu0
    %1663 = vmatprep.mubr.bf16.mxu0 %v1288
    %1664 = vmatmul.mubr.bf16.gmra.mxu0 %v1287
    %v1665 = vpop.f32.mrf.mxu0
    %v1666 = vadd.f32 %v718, %v1665
    %v1667 = vpop.f32.mrf.mxu0
    %v1668 = vpop.f32.mrf.mxu0
    %v1669 = vadd.f32 %v723, %v1668
    %v1670 = vpop.f32.mrf.mxu0
    %1671 = vmatprep.mubr.bf16.mxu0 %v1292
    %1672 = vmatmul.mubr.bf16.gmra.mxu0 %v1291
    %v1673 = vpop.f32.mrf.mxu0
    %v1674 = vadd.f32 %v728, %v1673
    %v1675 = vpop.f32.mrf.mxu0
    %v1676 = vpop.f32.mrf.mxu0
    %v1677 = vadd.f32 %v733, %v1676
    %v1678 = vpop.f32.mrf.mxu0
    %1679 = vmatprep.mubr.bf16.mxu0 %v1296
    %1680 = vmatmul.mubr.bf16.gmra.mxu0 %v1295
    %v1681 = vpop.f32.mrf.mxu0
    %v1682 = vadd.f32 %v738, %v1681
    %v1683 = vpop.f32.mrf.mxu0
    %v1684 = vpop.f32.mrf.mxu0
    %v1685 = vadd.f32 %v743, %v1684
    %v1686 = vpop.f32.mrf.mxu0
    %1687 = vmatprep.mubr.bf16.mxu0 %v1300
    %1688 = vmatmul.mubr.bf16.gmra.mxu0 %v1299
    %v1689 = vpop.f32.mrf.mxu0
    %v1690 = vadd.f32 %v748, %v1689
    %v1691 = vpop.f32.mrf.mxu0
    %v1692 = vpop.f32.mrf.mxu0
    %v1693 = vadd.f32 %v753, %v1692
    %v1694 = vpop.f32.mrf.mxu0
    %1695 = vmatprep.mubr.bf16.mxu0 %v1304
    %1696 = vmatmul.mubr.bf16.gmra.mxu0 %v1303
    %v1697 = vpop.f32.mrf.mxu0
    %v1698 = vadd.f32 %v758, %v1697
    %v1699 = vpop.f32.mrf.mxu0
    %v1700 = vpop.f32.mrf.mxu0
    %v1701 = vadd.f32 %v763, %v1700
    %v1702 = vpop.f32.mrf.mxu0
    %1703 = vmatprep.mubr.bf16.mxu0 %v1308
    %1704 = vmatmul.mubr.bf16.gmra.mxu0 %v1307
    %v1705 = vpop.f32.mrf.mxu0
    %v1706 = vadd.f32 %v768, %v1705
    %v1707 = vpop.f32.mrf.mxu0
    %v1708 = vpop.f32.mrf.mxu0
    %v1709 = vadd.f32 %v773, %v1708
    %v1710 = vpop.f32.mrf.mxu0
    %1711 = vmatprep.mubr.bf16.mxu0 %v1312
    %1712 = vmatmul.mubr.bf16.gmra.mxu0 %v1311
    %v1713 = vpop.f32.mrf.mxu0
    %v1714 = vadd.f32 %v778, %v1713
    %v1715 = vpop.f32.mrf.mxu0
    %v1716 = vpop.f32.mrf.mxu0
    %v1717 = vadd.f32 %v783, %v1716
    %v1718 = vpop.f32.mrf.mxu0
    %1719 = vmatprep.mubr.bf16.mxu0 %v1316
    %1720 = vmatmul.mubr.bf16.gmra.mxu0 %v1315
    %v1721 = vpop.f32.mrf.mxu0
    %v1722 = vadd.f32 %v788, %v1721
    %v1723 = vpop.f32.mrf.mxu0
    %v1724 = vpop.f32.mrf.mxu0
    %v1725 = vadd.f32 %v793, %v1724
    %v1726 = vpop.f32.mrf.mxu0
    %1727 = vmatprep.mubr.bf16.mxu0 %v1320
    %1728 = vmatmul.mubr.bf16.gmra.mxu0 %v1319
    %v1729 = vpop.f32.mrf.mxu0
    %v1730 = vadd.f32 %v798, %v1729
    %v1731 = vpop.f32.mrf.mxu0
    %v1732 = vpop.f32.mrf.mxu0
    %v1733 = vadd.f32 %v803, %v1732
    %v1734 = vpop.f32.mrf.mxu0
    %1735 = vmatprep.mubr.bf16.mxu0 %v1324
    %1736 = vmatmul.mubr.bf16.gmra.mxu0 %v1323
    %v1737 = vpop.f32.mrf.mxu0
    %v1738 = vadd.f32 %v808, %v1737
    %v1739 = vpop.f32.mrf.mxu0
    %v1740 = vpop.f32.mrf.mxu0
    %v1741 = vadd.f32 %v813, %v1740
    %v1742 = vpop.f32.mrf.mxu0
    %1743 = vdwg.mxu0
    %1744 = vmatprep.subr.bf16.mxu0 0
    %1745 = vmatpush1.bf16.msra.mxu0 %v261
    %1746 = vmatprep.subr.bf16.mxu0 0
    %1747 = vmatpush1.bf16.msra.mxu0 %v256
    %1748 = vmatprep.subr.bf16.mxu0 0
    %1749 = vmatpush1.bf16.msra.mxu0 %v251
    %1750 = vmatprep.subr.bf16.mxu0 0
    %1751 = vmatpush1.bf16.msra.mxu0 %v246
    %1752 = vmatprep.subr.bf16.mxu0 0
    %1753 = vmatpush1.bf16.msra.mxu0 %v241
    %1754 = vmatprep.subr.bf16.mxu0 0
    %1755 = vmatpush1.bf16.msra.mxu0 %v236
    %1756 = vmatprep.subr.bf16.mxu0 0
    %1757 = vmatpush1.bf16.msra.mxu0 %v231
    %1758 = vmatprep.subr.bf16.mxu0 0
    %1759 = vmatpush1.bf16.msra.mxu0 %v226
    %1760 = vmatprep.subr.bf16.mxu0 0
    %1761 = vmatpush2.bf16.msra.mxu0 %v301
    %1762 = vmatprep.subr.bf16.mxu0 0
    %1763 = vmatpush2.bf16.msra.mxu0 %v296
    %1764 = vmatprep.subr.bf16.mxu0 0
    %1765 = vmatpush2.bf16.msra.mxu0 %v291
    %1766 = vmatprep.subr.bf16.mxu0 0
    %1767 = vmatpush2.bf16.msra.mxu0 %v286
    %1768 = vmatprep.subr.bf16.mxu0 0
    %1769 = vmatpush2.bf16.msra.mxu0 %v281
    %1770 = vmatprep.subr.bf16.mxu0 0
    %1771 = vmatpush2.bf16.msra.mxu0 %v276
    %1772 = vmatprep.subr.bf16.mxu0 0
    %1773 = vmatpush2.bf16.msra.mxu0 %v271
    %1774 = vmatprep.subr.bf16.mxu0 0
    %1775 = vmatpush2.bf16.msra.mxu0 %v266
    %1776 = vmatprep.mubr.bf16.mxu0 %v1202
    %1777 = vmatmul.mubr.bf16.gmra.mxu0 %v1201
    %v1778 = vpop.f32.mrf.mxu0
    %v1779 = vadd.f32 %v1490, %v1778
    %v1780 = vpop.f32.mrf.mxu0
    %v1781 = vpop.f32.mrf.mxu0
    %v1782 = vadd.f32 %v1493, %v1781
    %v1783 = vpop.f32.mrf.mxu0
    %1784 = vmatprep.mubr.bf16.mxu0 %v1206
    %1785 = vmatmul.mubr.bf16.gmra.mxu0 %v1205
    %v1786 = vpop.f32.mrf.mxu0
    %v1787 = vadd.f32 %v1498, %v1786
    %v1788 = vpop.f32.mrf.mxu0
    %v1789 = vpop.f32.mrf.mxu0
    %v1790 = vadd.f32 %v1501, %v1789
    %v1791 = vpop.f32.mrf.mxu0
    %1792 = vmatprep.mubr.bf16.mxu0 %v1210
    %1793 = vmatmul.mubr.bf16.gmra.mxu0 %v1209
    %v1794 = vpop.f32.mrf.mxu0
    %v1795 = vadd.f32 %v1506, %v1794
    %v1796 = vpop.f32.mrf.mxu0
    %v1797 = vpop.f32.mrf.mxu0
    %v1798 = vadd.f32 %v1509, %v1797
    %v1799 = vpop.f32.mrf.mxu0
    %1800 = vmatprep.mubr.bf16.mxu0 %v1214
    %1801 = vmatmul.mubr.bf16.gmra.mxu0 %v1213
    %v1802 = vpop.f32.mrf.mxu0
    %v1803 = vadd.f32 %v1514, %v1802
    %v1804 = vpop.f32.mrf.mxu0
    %v1805 = vpop.f32.mrf.mxu0
    %v1806 = vadd.f32 %v1517, %v1805
    %v1807 = vpop.f32.mrf.mxu0
    %1808 = vmatprep.mubr.bf16.mxu0 %v1218
    %1809 = vmatmul.mubr.bf16.gmra.mxu0 %v1217
    %v1810 = vpop.f32.mrf.mxu0
    %v1811 = vadd.f32 %v1522, %v1810
    %v1812 = vpop.f32.mrf.mxu0
    %v1813 = vpop.f32.mrf.mxu0
    %v1814 = vadd.f32 %v1525, %v1813
    %v1815 = vpop.f32.mrf.mxu0
    %1816 = vmatprep.mubr.bf16.mxu0 %v1222
    %1817 = vmatmul.mubr.bf16.gmra.mxu0 %v1221
    %v1818 = vpop.f32.mrf.mxu0
    %v1819 = vadd.f32 %v1530, %v1818
    %v1820 = vpop.f32.mrf.mxu0
    %v1821 = vpop.f32.mrf.mxu0
    %v1822 = vadd.f32 %v1533, %v1821
    %v1823 = vpop.f32.mrf.mxu0
    %1824 = vmatprep.mubr.bf16.mxu0 %v1226
    %1825 = vmatmul.mubr.bf16.gmra.mxu0 %v1225
    %v1826 = vpop.f32.mrf.mxu0
    %v1827 = vadd.f32 %v1538, %v1826
    %v1828 = vpop.f32.mrf.mxu0
    %v1829 = vpop.f32.mrf.mxu0
    %v1830 = vadd.f32 %v1541, %v1829
    %v1831 = vpop.f32.mrf.mxu0
    %1832 = vmatprep.mubr.bf16.mxu0 %v1230
    %1833 = vmatmul.mubr.bf16.gmra.mxu0 %v1229
    %v1834 = vpop.f32.mrf.mxu0
    %v1835 = vadd.f32 %v1546, %v1834
    %v1836 = vpop.f32.mrf.mxu0
    %v1837 = vpop.f32.mrf.mxu0
    %v1838 = vadd.f32 %v1549, %v1837
    %v1839 = vpop.f32.mrf.mxu0
    %1840 = vmatprep.mubr.bf16.mxu0 %v1234
    %1841 = vmatmul.mubr.bf16.gmra.mxu0 %v1233
    %v1842 = vpop.f32.mrf.mxu0
    %v1843 = vadd.f32 %v1554, %v1842
    %v1844 = vpop.f32.mrf.mxu0
    %v1845 = vpop.f32.mrf.mxu0
    %v1846 = vadd.f32 %v1557, %v1845
    %v1847 = vpop.f32.mrf.mxu0
    %1848 = vmatprep.mubr.bf16.mxu0 %v1238
    %1849 = vmatmul.mubr.bf16.gmra.mxu0 %v1237
    %v1850 = vpop.f32.mrf.mxu0
    %v1851 = vadd.f32 %v1562, %v1850
    %v1852 = vpop.f32.mrf.mxu0
    %v1853 = vpop.f32.mrf.mxu0
    %v1854 = vadd.f32 %v1565, %v1853
    %v1855 = vpop.f32.mrf.mxu0
    %1856 = vmatprep.mubr.bf16.mxu0 %v1242
    %1857 = vmatmul.mubr.bf16.gmra.mxu0 %v1241
    %v1858 = vpop.f32.mrf.mxu0
    %v1859 = vadd.f32 %v1570, %v1858
    %v1860 = vpop.f32.mrf.mxu0
    %v1861 = vpop.f32.mrf.mxu0
    %v1862 = vadd.f32 %v1573, %v1861
    %v1863 = vpop.f32.mrf.mxu0
    %1864 = vmatprep.mubr.bf16.mxu0 %v1246
    %1865 = vmatmul.mubr.bf16.gmra.mxu0 %v1245
    %v1866 = vpop.f32.mrf.mxu0
    %v1867 = vadd.f32 %v1578, %v1866
    %v1868 = vpop.f32.mrf.mxu0
    %v1869 = vpop.f32.mrf.mxu0
    %v1870 = vadd.f32 %v1581, %v1869
    %v1871 = vpop.f32.mrf.mxu0
    %1872 = vmatprep.mubr.bf16.mxu0 %v1250
    %1873 = vmatmul.mubr.bf16.gmra.mxu0 %v1249
    %v1874 = vpop.f32.mrf.mxu0
    %v1875 = vadd.f32 %v1586, %v1874
    %v1876 = vpop.f32.mrf.mxu0
    %v1877 = vpop.f32.mrf.mxu0
    %v1878 = vadd.f32 %v1589, %v1877
    %v1879 = vpop.f32.mrf.mxu0
    %1880 = vmatprep.mubr.bf16.mxu0 %v1254
    %1881 = vmatmul.mubr.bf16.gmra.mxu0 %v1253
    %v1882 = vpop.f32.mrf.mxu0
    %v1883 = vadd.f32 %v1594, %v1882
    %v1884 = vpop.f32.mrf.mxu0
    %v1885 = vpop.f32.mrf.mxu0
    %v1886 = vadd.f32 %v1597, %v1885
    %v1887 = vpop.f32.mrf.mxu0
    %1888 = vmatprep.mubr.bf16.mxu0 %v1258
    %1889 = vmatmul.mubr.bf16.gmra.mxu0 %v1257
    %v1890 = vpop.f32.mrf.mxu0
    %v1891 = vadd.f32 %v1602, %v1890
    %v1892 = vpop.f32.mrf.mxu0
    %v1893 = vpop.f32.mrf.mxu0
    %v1894 = vadd.f32 %v1605, %v1893
    %v1895 = vpop.f32.mrf.mxu0
    %1896 = vmatprep.mubr.bf16.mxu0 %v1262
    %1897 = vmatmul.mubr.bf16.gmra.mxu0 %v1261
    %v1898 = vpop.f32.mrf.mxu0
    %v1899 = vadd.f32 %v1610, %v1898
    %v1900 = vpop.f32.mrf.mxu0
    %v1901 = vpop.f32.mrf.mxu0
    %v1902 = vadd.f32 %v1613, %v1901
    %v1903 = vpop.f32.mrf.mxu0
    %1904 = vmatprep.mubr.bf16.mxu0 %v1266
    %1905 = vmatmul.mubr.bf16.gmra.mxu0 %v1265
    %v1906 = vpop.f32.mrf.mxu0
    %v1907 = vadd.f32 %v1618, %v1906
    %v1908 = vpop.f32.mrf.mxu0
    %v1909 = vpop.f32.mrf.mxu0
    %v1910 = vadd.f32 %v1621, %v1909
    %v1911 = vpop.f32.mrf.mxu0
    %1912 = vmatprep.mubr.bf16.mxu0 %v1270
    %1913 = vmatmul.mubr.bf16.gmra.mxu0 %v1269
    %v1914 = vpop.f32.mrf.mxu0
    %v1915 = vadd.f32 %v1626, %v1914
    %v1916 = vpop.f32.mrf.mxu0
    %v1917 = vpop.f32.mrf.mxu0
    %v1918 = vadd.f32 %v1629, %v1917
    %v1919 = vpop.f32.mrf.mxu0
    %1920 = vmatprep.mubr.bf16.mxu0 %v1274
    %1921 = vmatmul.mubr.bf16.gmra.mxu0 %v1273
    %v1922 = vpop.f32.mrf.mxu0
    %v1923 = vadd.f32 %v1634, %v1922
    %v1924 = vpop.f32.mrf.mxu0
    %v1925 = vpop.f32.mrf.mxu0
    %v1926 = vadd.f32 %v1637, %v1925
    %v1927 = vpop.f32.mrf.mxu0
    %1928 = vmatprep.mubr.bf16.mxu0 %v1278
    %1929 = vmatmul.mubr.bf16.gmra.mxu0 %v1277
    %v1930 = vpop.f32.mrf.mxu0
    %v1931 = vadd.f32 %v1642, %v1930
    %v1932 = vpop.f32.mrf.mxu0
    %v1933 = vpop.f32.mrf.mxu0
    %v1934 = vadd.f32 %v1645, %v1933
    %v1935 = vpop.f32.mrf.mxu0
    %1936 = vmatprep.mubr.bf16.mxu0 %v1282
    %1937 = vmatmul.mubr.bf16.gmra.mxu0 %v1281
    %v1938 = vpop.f32.mrf.mxu0
    %v1939 = vadd.f32 %v1650, %v1938
    %v1940 = vpop.f32.mrf.mxu0
    %v1941 = vpop.f32.mrf.mxu0
    %v1942 = vadd.f32 %v1653, %v1941
    %v1943 = vpop.f32.mrf.mxu0
    %1944 = vmatprep.mubr.bf16.mxu0 %v1286
    %1945 = vmatmul.mubr.bf16.gmra.mxu0 %v1285
    %v1946 = vpop.f32.mrf.mxu0
    %v1947 = vadd.f32 %v1658, %v1946
    %v1948 = vpop.f32.mrf.mxu0
    %v1949 = vpop.f32.mrf.mxu0
    %v1950 = vadd.f32 %v1661, %v1949
    %v1951 = vpop.f32.mrf.mxu0
    %1952 = vmatprep.mubr.bf16.mxu0 %v1290
    %1953 = vmatmul.mubr.bf16.gmra.mxu0 %v1289
    %v1954 = vpop.f32.mrf.mxu0
    %v1955 = vadd.f32 %v1666, %v1954
    %v1956 = vpop.f32.mrf.mxu0
    %v1957 = vpop.f32.mrf.mxu0
    %v1958 = vadd.f32 %v1669, %v1957
    %v1959 = vpop.f32.mrf.mxu0
    %1960 = vmatprep.mubr.bf16.mxu0 %v1294
    %1961 = vmatmul.mubr.bf16.gmra.mxu0 %v1293
    %v1962 = vpop.f32.mrf.mxu0
    %v1963 = vadd.f32 %v1674, %v1962
    %v1964 = vpop.f32.mrf.mxu0
    %v1965 = vpop.f32.mrf.mxu0
    %v1966 = vadd.f32 %v1677, %v1965
    %v1967 = vpop.f32.mrf.mxu0
    %1968 = vmatprep.mubr.bf16.mxu0 %v1298
    %1969 = vmatmul.mubr.bf16.gmra.mxu0 %v1297
    %v1970 = vpop.f32.mrf.mxu0
    %v1971 = vadd.f32 %v1682, %v1970
    %v1972 = vpop.f32.mrf.mxu0
    %v1973 = vpop.f32.mrf.mxu0
    %v1974 = vadd.f32 %v1685, %v1973
    %v1975 = vpop.f32.mrf.mxu0
    %1976 = vmatprep.mubr.bf16.mxu0 %v1302
    %1977 = vmatmul.mubr.bf16.gmra.mxu0 %v1301
    %v1978 = vpop.f32.mrf.mxu0
    %v1979 = vadd.f32 %v1690, %v1978
    %v1980 = vpop.f32.mrf.mxu0
    %v1981 = vpop.f32.mrf.mxu0
    %v1982 = vadd.f32 %v1693, %v1981
    %v1983 = vpop.f32.mrf.mxu0
    %1984 = vmatprep.mubr.bf16.mxu0 %v1306
    %1985 = vmatmul.mubr.bf16.gmra.mxu0 %v1305
    %v1986 = vpop.f32.mrf.mxu0
    %v1987 = vadd.f32 %v1698, %v1986
    %v1988 = vpop.f32.mrf.mxu0
    %v1989 = vpop.f32.mrf.mxu0
    %v1990 = vadd.f32 %v1701, %v1989
    %v1991 = vpop.f32.mrf.mxu0
    %1992 = vmatprep.mubr.bf16.mxu0 %v1310
    %1993 = vmatmul.mubr.bf16.gmra.mxu0 %v1309
    %v1994 = vpop.f32.mrf.mxu0
    %v1995 = vadd.f32 %v1706, %v1994
    %v1996 = vpop.f32.mrf.mxu0
    %v1997 = vpop.f32.mrf.mxu0
    %v1998 = vadd.f32 %v1709, %v1997
    %v1999 = vpop.f32.mrf.mxu0
    %2000 = vmatprep.mubr.bf16.mxu0 %v1314
    %2001 = vmatmul.mubr.bf16.gmra.mxu0 %v1313
    %v2002 = vpop.f32.mrf.mxu0
    %v2003 = vadd.f32 %v1714, %v2002
    %v2004 = vpop.f32.mrf.mxu0
    %v2005 = vpop.f32.mrf.mxu0
    %v2006 = vadd.f32 %v1717, %v2005
    %v2007 = vpop.f32.mrf.mxu0
    %2008 = vmatprep.mubr.bf16.mxu0 %v1318
    %2009 = vmatmul.mubr.bf16.gmra.mxu0 %v1317
    %v2010 = vpop.f32.mrf.mxu0
    %v2011 = vadd.f32 %v1722, %v2010
    %v2012 = vpop.f32.mrf.mxu0
    %v2013 = vpop.f32.mrf.mxu0
    %v2014 = vadd.f32 %v1725, %v2013
    %v2015 = vpop.f32.mrf.mxu0
    %2016 = vmatprep.mubr.bf16.mxu0 %v1322
    %2017 = vmatmul.mubr.bf16.gmra.mxu0 %v1321
    %v2018 = vpop.f32.mrf.mxu0
    %v2019 = vadd.f32 %v1730, %v2018
    %v2020 = vpop.f32.mrf.mxu0
    %v2021 = vpop.f32.mrf.mxu0
    %v2022 = vadd.f32 %v1733, %v2021
    %v2023 = vpop.f32.mrf.mxu0
    %2024 = vmatprep.mubr.bf16.mxu0 %v1326
    %2025 = vmatmul.mubr.bf16.gmra.mxu0 %v1325
    %v2026 = vpop.f32.mrf.mxu0
    %v2027 = vadd.f32 %v1738, %v2026
    %v2028 = vpop.f32.mrf.mxu0
    %v2029 = vpop.f32.mrf.mxu0
    %v2030 = vadd.f32 %v1741, %v2029
    %v2031 = vpop.f32.mrf.mxu0
    %2032 = vdwg.mxu0
    %v2033 = vmax.f32 %v1779, 0.0
    %v2034 = vmax.f32 %v1782, 0.0
    %v2035 = vmax.f32 %v1787, 0.0
    %v2036 = vmax.f32 %v1790, 0.0
    %v2037 = vmax.f32 %v1795, 0.0
    %v2038 = vmax.f32 %v1798, 0.0
    %v2039 = vmax.f32 %v1803, 0.0
    %v2040 = vmax.f32 %v1806, 0.0
    %v2041 = vmax.f32 %v1811, 0.0
    %v2042 = vmax.f32 %v1814, 0.0
    %v2043 = vmax.f32 %v1819, 0.0
    %v2044 = vmax.f32 %v1822, 0.0
    %v2045 = vmax.f32 %v1827, 0.0
    %v2046 = vmax.f32 %v1830, 0.0
    %v2047 = vmax.f32 %v1835, 0.0
    %v2048 = vmax.f32 %v1838, 0.0
    %v2049 = vmax.f32 %v1843, 0.0
    %v2050 = vmax.f32 %v1846, 0.0
    %v2051 = vmax.f32 %v1851, 0.0
    %v2052 = vmax.f32 %v1854, 0.0
    %v2053 = vmax.f32 %v1859, 0.0
    %v2054 = vmax.f32 %v1862, 0.0
    %v2055 = vmax.f32 %v1867, 0.0
    %v2056 = vmax.f32 %v1870, 0.0
    %v2057 = vmax.f32 %v1875, 0.0
    %v2058 = vmax.f32 %v1878, 0.0
    %v2059 = vmax.f32 %v1883, 0.0
    %v2060 = vmax.f32 %v1886, 0.0
    %v2061 = vmax.f32 %v1891, 0.0
    %v2062 = vmax.f32 %v1894, 0.0
    %v2063 = vmax.f32 %v1899, 0.0
    %v2064 = vmax.f32 %v1902, 0.0
    %v2065 = vmax.f32 %v1907, 0.0
    %v2066 = vmax.f32 %v1910, 0.0
    %v2067 = vmax.f32 %v1915, 0.0
    %v2068 = vmax.f32 %v1918, 0.0
    %v2069 = vmax.f32 %v1923, 0.0
    %v2070 = vmax.f32 %v1926, 0.0
    %v2071 = vmax.f32 %v1931, 0.0
    %v2072 = vmax.f32 %v1934, 0.0
    %v2073 = vmax.f32 %v1939, 0.0
    %v2074 = vmax.f32 %v1942, 0.0
    %v2075 = vmax.f32 %v1947, 0.0
    %v2076 = vmax.f32 %v1950, 0.0
    %v2077 = vmax.f32 %v1955, 0.0
    %v2078 = vmax.f32 %v1958, 0.0
    %v2079 = vmax.f32 %v1963, 0.0
    %v2080 = vmax.f32 %v1966, 0.0
    %v2081 = vmax.f32 %v1971, 0.0
    %v2082 = vmax.f32 %v1974, 0.0
    %v2083 = vmax.f32 %v1979, 0.0
    %v2084 = vmax.f32 %v1982, 0.0
    %v2085 = vmax.f32 %v1987, 0.0
    %v2086 = vmax.f32 %v1990, 0.0
    %v2087 = vmax.f32 %v1995, 0.0
    %v2088 = vmax.f32 %v1998, 0.0
    %v2089 = vmax.f32 %v2003, 0.0
    %v2090 = vmax.f32 %v2006, 0.0
    %v2091 = vmax.f32 %v2011, 0.0
    %v2092 = vmax.f32 %v2014, 0.0
    %v2093 = vmax.f32 %v2019, 0.0
    %v2094 = vmax.f32 %v2022, 0.0
    %v2095 = vmax.f32 %v2027, 0.0
    %v2096 = vmax.f32 %v2030, 0.0
    %v2097 = vld [vmem:[#allocation2] sm:$0xff]
    %v2098 = vld [vmem:[#allocation2 + $0x8] sm:$0xff]
    %v2099 = vld [vmem:[#allocation2 + $0x10] sm:$0xff]
    %v2100 = vld [vmem:[#allocation2 + $0x18] sm:$0xff]
    %v2101 = vld [vmem:[#allocation2 + $0x20] sm:$0xff]
    %v2102 = vld [vmem:[#allocation2 + $0x28] sm:$0xff]
    %v2103 = vld [vmem:[#allocation2 + $0x30] sm:$0xff]
    %v2104 = vld [vmem:[#allocation2 + $0x38] sm:$0xff]
    %v2105 = vld [vmem:[#allocation2 + $0x40] sm:$0xff]
    %v2106 = vld [vmem:[#allocation2 + $0x48] sm:$0xff]
    %v2107 = vld [vmem:[#allocation2 + $0x50] sm:$0xff]
    %v2108 = vld [vmem:[#allocation2 + $0x58] sm:$0xff]
    %v2109 = vld [vmem:[#allocation2 + $0x60] sm:$0xff]
    %v2110 = vld [vmem:[#allocation2 + $0x68] sm:$0xff]
    %v2111 = vld [vmem:[#allocation2 + $0x70] sm:$0xff]
    %v2112 = vld [vmem:[#allocation2 + $0x78] sm:$0xff]
    %v2113 = vld [vmem:[#allocation2 + $0x80] sm:$0xff]
    %v2114 = vld [vmem:[#allocation2 + $0x88] sm:$0xff]
    %v2115 = vld [vmem:[#allocation2 + $0x90] sm:$0xff]
    %v2116 = vld [vmem:[#allocation2 + $0x98] sm:$0xff]
    %v2117 = vld [vmem:[#allocation2 + $0xa0] sm:$0xff]
    %v2118 = vld [vmem:[#allocation2 + $0xa8] sm:$0xff]
    %v2119 = vld [vmem:[#allocation2 + $0xb0] sm:$0xff]
    %v2120 = vld [vmem:[#allocation2 + $0xb8] sm:$0xff]
    %v2121 = vld [vmem:[#allocation2 + $0xc0] sm:$0xff]
    %v2122 = vld [vmem:[#allocation2 + $0xc8] sm:$0xff]
    %v2123 = vld [vmem:[#allocation2 + $0xd0] sm:$0xff]
    %v2124 = vld [vmem:[#allocation2 + $0xd8] sm:$0xff]
    %v2125 = vld [vmem:[#allocation2 + $0xe0] sm:$0xff]
    %v2126 = vld [vmem:[#allocation2 + $0xe8] sm:$0xff]
    %v2127 = vld [vmem:[#allocation2 + $0xf0] sm:$0xff]
    %v2128 = vld [vmem:[#allocation2 + $0xf8] sm:$0xff]
    %v2129 = vld [vmem:[#allocation2 + $0x100] sm:$0xff]
    %v2130 = vld [vmem:[#allocation2 + $0x108] sm:$0xff]
    %v2131 = vld [vmem:[#allocation2 + $0x110] sm:$0xff]
    %v2132 = vld [vmem:[#allocation2 + $0x118] sm:$0xff]
    %v2133 = vld [vmem:[#allocation2 + $0x120] sm:$0xff]
    %v2134 = vld [vmem:[#allocation2 + $0x128] sm:$0xff]
    %v2135 = vld [vmem:[#allocation2 + $0x130] sm:$0xff]
    %v2136 = vld [vmem:[#allocation2 + $0x138] sm:$0xff]
    %v2137 = vld [vmem:[#allocation2 + $0x140] sm:$0xff]
    %v2138 = vld [vmem:[#allocation2 + $0x148] sm:$0xff]
    %v2139 = vld [vmem:[#allocation2 + $0x150] sm:$0xff]
    %v2140 = vld [vmem:[#allocation2 + $0x158] sm:$0xff]
    %v2141 = vld [vmem:[#allocation2 + $0x160] sm:$0xff]
    %v2142 = vld [vmem:[#allocation2 + $0x168] sm:$0xff]
    %v2143 = vld [vmem:[#allocation2 + $0x170] sm:$0xff]
    %v2144 = vld [vmem:[#allocation2 + $0x178] sm:$0xff]
    %v2145 = vld [vmem:[#allocation2 + $0x180] sm:$0xff]
    %v2146 = vld [vmem:[#allocation2 + $0x188] sm:$0xff]
    %v2147 = vld [vmem:[#allocation2 + $0x190] sm:$0xff]
    %v2148 = vld [vmem:[#allocation2 + $0x198] sm:$0xff]
    %v2149 = vld [vmem:[#allocation2 + $0x1a0] sm:$0xff]
    %v2150 = vld [vmem:[#allocation2 + $0x1a8] sm:$0xff]
    %v2151 = vld [vmem:[#allocation2 + $0x1b0] sm:$0xff]
    %v2152 = vld [vmem:[#allocation2 + $0x1b8] sm:$0xff]
    %v2153 = vld [vmem:[#allocation2 + $0x1c0] sm:$0xff]
    %v2154 = vld [vmem:[#allocation2 + $0x1c8] sm:$0xff]
    %v2155 = vld [vmem:[#allocation2 + $0x1d0] sm:$0xff]
    %v2156 = vld [vmem:[#allocation2 + $0x1d8] sm:$0xff]
    %v2157 = vld [vmem:[#allocation2 + $0x1e0] sm:$0xff]
    %v2158 = vld [vmem:[#allocation2 + $0x1e8] sm:$0xff]
    %v2159 = vld [vmem:[#allocation2 + $0x1f0] sm:$0xff]
    %v2160 = vld [vmem:[#allocation2 + $0x1f8] sm:$0xff]
    %v2161 = vld [vmem:[#allocation2 + $0x200] sm:$0xff]
    %v2162 = vld [vmem:[#allocation2 + $0x208] sm:$0xff]
    %v2163 = vld [vmem:[#allocation2 + $0x210] sm:$0xff]
    %v2164 = vld [vmem:[#allocation2 + $0x218] sm:$0xff]
    %v2165 = vld [vmem:[#allocation2 + $0x220] sm:$0xff]
    %v2166 = vld [vmem:[#allocation2 + $0x228] sm:$0xff]
    %v2167 = vld [vmem:[#allocation2 + $0x230] sm:$0xff]
    %v2168 = vld [vmem:[#allocation2 + $0x238] sm:$0xff]
    %v2169 = vld [vmem:[#allocation2 + $0x240] sm:$0xff]
    %v2170 = vld [vmem:[#allocation2 + $0x248] sm:$0xff]
    %v2171 = vld [vmem:[#allocation2 + $0x250] sm:$0xff]
    %v2172 = vld [vmem:[#allocation2 + $0x258] sm:$0xff]
    %v2173 = vld [vmem:[#allocation2 + $0x260] sm:$0xff]
    %v2174 = vld [vmem:[#allocation2 + $0x268] sm:$0xff]
    %v2175 = vld [vmem:[#allocation2 + $0x270] sm:$0xff]
    %v2176 = vld [vmem:[#allocation2 + $0x278] sm:$0xff]
    %v2177 = vld [vmem:[#allocation2 + $0x280] sm:$0xff]
    %v2178 = vld [vmem:[#allocation2 + $0x288] sm:$0xff]
    %v2179 = vld [vmem:[#allocation2 + $0x290] sm:$0xff]
    %v2180 = vld [vmem:[#allocation2 + $0x298] sm:$0xff]
    %v2181 = vld [vmem:[#allocation2 + $0x2a0] sm:$0xff]
    %v2182 = vld [vmem:[#allocation2 + $0x2a8] sm:$0xff]
    %v2183 = vld [vmem:[#allocation2 + $0x2b0] sm:$0xff]
    %v2184 = vld [vmem:[#allocation2 + $0x2b8] sm:$0xff]
    %v2185 = vld [vmem:[#allocation2 + $0x2c0] sm:$0xff]
    %v2186 = vld [vmem:[#allocation2 + $0x2c8] sm:$0xff]
    %v2187 = vld [vmem:[#allocation2 + $0x2d0] sm:$0xff]
    %v2188 = vld [vmem:[#allocation2 + $0x2d8] sm:$0xff]
    %v2189 = vld [vmem:[#allocation2 + $0x2e0] sm:$0xff]
    %v2190 = vld [vmem:[#allocation2 + $0x2e8] sm:$0xff]
    %v2191 = vld [vmem:[#allocation2 + $0x2f0] sm:$0xff]
    %v2192 = vld [vmem:[#allocation2 + $0x2f8] sm:$0xff]
    %v2193 = vld [vmem:[#allocation2 + $0x300] sm:$0xff]
    %v2194 = vld [vmem:[#allocation2 + $0x308] sm:$0xff]
    %v2195 = vld [vmem:[#allocation2 + $0x310] sm:$0xff]
    %v2196 = vld [vmem:[#allocation2 + $0x318] sm:$0xff]
    %v2197 = vld [vmem:[#allocation2 + $0x320] sm:$0xff]
    %v2198 = vld [vmem:[#allocation2 + $0x328] sm:$0xff]
    %v2199 = vld [vmem:[#allocation2 + $0x330] sm:$0xff]
    %v2200 = vld [vmem:[#allocation2 + $0x338] sm:$0xff]
    %v2201 = vld [vmem:[#allocation2 + $0x340] sm:$0xff]
    %v2202 = vld [vmem:[#allocation2 + $0x348] sm:$0xff]
    %v2203 = vld [vmem:[#allocation2 + $0x350] sm:$0xff]
    %v2204 = vld [vmem:[#allocation2 + $0x358] sm:$0xff]
    %v2205 = vld [vmem:[#allocation2 + $0x360] sm:$0xff]
    %v2206 = vld [vmem:[#allocation2 + $0x368] sm:$0xff]
    %v2207 = vld [vmem:[#allocation2 + $0x370] sm:$0xff]
    %v2208 = vld [vmem:[#allocation2 + $0x378] sm:$0xff]
    %v2209 = vld [vmem:[#allocation2 + $0x380] sm:$0xff]
    %v2210 = vld [vmem:[#allocation2 + $0x388] sm:$0xff]
    %v2211 = vld [vmem:[#allocation2 + $0x390] sm:$0xff]
    %v2212 = vld [vmem:[#allocation2 + $0x398] sm:$0xff]
    %v2213 = vld [vmem:[#allocation2 + $0x3a0] sm:$0xff]
    %v2214 = vld [vmem:[#allocation2 + $0x3a8] sm:$0xff]
    %v2215 = vld [vmem:[#allocation2 + $0x3b0] sm:$0xff]
    %v2216 = vld [vmem:[#allocation2 + $0x3b8] sm:$0xff]
    %v2217 = vld [vmem:[#allocation2 + $0x3c0] sm:$0xff]
    %v2218 = vld [vmem:[#allocation2 + $0x3c8] sm:$0xff]
    %v2219 = vld [vmem:[#allocation2 + $0x3d0] sm:$0xff]
    %v2220 = vld [vmem:[#allocation2 + $0x3d8] sm:$0xff]
    %v2221 = vld [vmem:[#allocation2 + $0x3e0] sm:$0xff]
    %v2222 = vld [vmem:[#allocation2 + $0x3e8] sm:$0xff]
    %v2223 = vld [vmem:[#allocation2 + $0x3f0] sm:$0xff]
    %v2224 = vld [vmem:[#allocation2 + $0x3f8] sm:$0xff]
    %v2225 = vpack.c.bf16 %v2034, %v2033
    %v2226 = vpack.c.bf16 %v2036, %v2035
    %v2227 = vpack.c.bf16 %v2038, %v2037
    %v2228 = vpack.c.bf16 %v2040, %v2039
    %v2229 = vpack.c.bf16 %v2042, %v2041
    %v2230 = vpack.c.bf16 %v2044, %v2043
    %v2231 = vpack.c.bf16 %v2046, %v2045
    %v2232 = vpack.c.bf16 %v2048, %v2047
    %v2233 = vpack.c.bf16 %v2050, %v2049
    %v2234 = vpack.c.bf16 %v2052, %v2051
    %v2235 = vpack.c.bf16 %v2054, %v2053
    %v2236 = vpack.c.bf16 %v2056, %v2055
    %v2237 = vpack.c.bf16 %v2058, %v2057
    %v2238 = vpack.c.bf16 %v2060, %v2059
    %v2239 = vpack.c.bf16 %v2062, %v2061
    %v2240 = vpack.c.bf16 %v2064, %v2063
    %v2241 = vpack.c.bf16 %v2066, %v2065
    %v2242 = vpack.c.bf16 %v2068, %v2067
    %v2243 = vpack.c.bf16 %v2070, %v2069
    %v2244 = vpack.c.bf16 %v2072, %v2071
    %v2245 = vpack.c.bf16 %v2074, %v2073
    %v2246 = vpack.c.bf16 %v2076, %v2075
    %v2247 = vpack.c.bf16 %v2078, %v2077
    %v2248 = vpack.c.bf16 %v2080, %v2079
    %v2249 = vpack.c.bf16 %v2082, %v2081
    %v2250 = vpack.c.bf16 %v2084, %v2083
    %v2251 = vpack.c.bf16 %v2086, %v2085
    %v2252 = vpack.c.bf16 %v2088, %v2087
    %v2253 = vpack.c.bf16 %v2090, %v2089
    %v2254 = vpack.c.bf16 %v2092, %v2091
    %v2255 = vpack.c.bf16 %v2094, %v2093
    %v2256 = vpack.c.bf16 %v2096, %v2095
    %v2257 = vld [vmem:[%s5] sm:$0xff]
    %v2258 = vld [vmem:[%s5 + $0x8] sm:$0xff]
    %v2259 = vld [vmem:[%s5 + $0x10] sm:$0xff]
    %v2260 = vld [vmem:[%s5 + $0x18] sm:$0xff]
    %v2261 = vld [vmem:[%s5 + $0x20] sm:$0xff]
    %v2262 = vld [vmem:[%s5 + $0x28] sm:$0xff]
    %v2263 = vld [vmem:[%s5 + $0x30] sm:$0xff]
    %v2264 = vld [vmem:[%s5 + $0x38] sm:$0xff]
    %v2265 = vld [vmem:[%s5 + $0x40] sm:$0xff]
    %v2266 = vld [vmem:[%s5 + $0x48] sm:$0xff]
    %v2267 = vld [vmem:[%s5 + $0x50] sm:$0xff]
    %v2268 = vld [vmem:[%s5 + $0x58] sm:$0xff]
    %v2269 = vld [vmem:[%s5 + $0x60] sm:$0xff]
    %v2270 = vld [vmem:[%s5 + $0x68] sm:$0xff]
    %v2271 = vld [vmem:[%s5 + $0x70] sm:$0xff]
    %v2272 = vld [vmem:[%s5 + $0x78] sm:$0xff]
    %v2273 = vld [vmem:[%s5 + $0x80] sm:$0xff]
    %v2274 = vld [vmem:[%s5 + $0x88] sm:$0xff]
    %v2275 = vld [vmem:[%s5 + $0x90] sm:$0xff]
    %v2276 = vld [vmem:[%s5 + $0x98] sm:$0xff]
    %v2277 = vld [vmem:[%s5 + $0xa0] sm:$0xff]
    %v2278 = vld [vmem:[%s5 + $0xa8] sm:$0xff]
    %v2279 = vld [vmem:[%s5 + $0xb0] sm:$0xff]
    %v2280 = vld [vmem:[%s5 + $0xb8] sm:$0xff]
    %v2281 = vld [vmem:[%s5 + $0xc0] sm:$0xff]
    %v2282 = vld [vmem:[%s5 + $0xc8] sm:$0xff]
    %v2283 = vld [vmem:[%s5 + $0xd0] sm:$0xff]
    %v2284 = vld [vmem:[%s5 + $0xd8] sm:$0xff]
    %v2285 = vld [vmem:[%s5 + $0xe0] sm:$0xff]
    %v2286 = vld [vmem:[%s5 + $0xe8] sm:$0xff]
    %v2287 = vld [vmem:[%s5 + $0xf0] sm:$0xff]
    %v2288 = vld [vmem:[%s5 + $0xf8] sm:$0xff]
    %v2289 = vld [vmem:[%s5 + $0x100] sm:$0xff]
    %v2290 = vld [vmem:[%s5 + $0x108] sm:$0xff]
    %v2291 = vld [vmem:[%s5 + $0x110] sm:$0xff]
    %v2292 = vld [vmem:[%s5 + $0x118] sm:$0xff]
    %v2293 = vld [vmem:[%s5 + $0x120] sm:$0xff]
    %v2294 = vld [vmem:[%s5 + $0x128] sm:$0xff]
    %v2295 = vld [vmem:[%s5 + $0x130] sm:$0xff]
    %v2296 = vld [vmem:[%s5 + $0x138] sm:$0xff]
    %v2297 = vld [vmem:[%s5 + $0x140] sm:$0xff]
    %v2298 = vld [vmem:[%s5 + $0x148] sm:$0xff]
    %v2299 = vld [vmem:[%s5 + $0x150] sm:$0xff]
    %v2300 = vld [vmem:[%s5 + $0x158] sm:$0xff]
    %v2301 = vld [vmem:[%s5 + $0x160] sm:$0xff]
    %v2302 = vld [vmem:[%s5 + $0x168] sm:$0xff]
    %v2303 = vld [vmem:[%s5 + $0x170] sm:$0xff]
    %v2304 = vld [vmem:[%s5 + $0x178] sm:$0xff]
    %v2305 = vld [vmem:[%s5 + $0x180] sm:$0xff]
    %v2306 = vld [vmem:[%s5 + $0x188] sm:$0xff]
    %v2307 = vld [vmem:[%s5 + $0x190] sm:$0xff]
    %v2308 = vld [vmem:[%s5 + $0x198] sm:$0xff]
    %v2309 = vld [vmem:[%s5 + $0x1a0] sm:$0xff]
    %v2310 = vld [vmem:[%s5 + $0x1a8] sm:$0xff]
    %v2311 = vld [vmem:[%s5 + $0x1b0] sm:$0xff]
    %v2312 = vld [vmem:[%s5 + $0x1b8] sm:$0xff]
    %v2313 = vld [vmem:[%s5 + $0x1c0] sm:$0xff]
    %v2314 = vld [vmem:[%s5 + $0x1c8] sm:$0xff]
    %v2315 = vld [vmem:[%s5 + $0x1d0] sm:$0xff]
    %v2316 = vld [vmem:[%s5 + $0x1d8] sm:$0xff]
    %v2317 = vld [vmem:[%s5 + $0x1e0] sm:$0xff]
    %v2318 = vld [vmem:[%s5 + $0x1e8] sm:$0xff]
    %v2319 = vld [vmem:[%s5 + $0x1f0] sm:$0xff]
    %v2320 = vld [vmem:[%s5 + $0x1f8] sm:$0xff]
    %2322 = vset.pattern.permute.xlu0 0
    %2323 = vperm.xlu0 %2322, %v2257
    %v2324 = vpop.permute.xlu0 %2323
    %2327 = vset.pattern.permute.xlu0 0
    %2328 = vperm.xlu0 %2327, %v2258
    %v2329 = vpop.permute.xlu0 %2328
    %2332 = vset.pattern.permute.xlu0 0
    %2333 = vperm.xlu0 %2332, %v2259
    %v2334 = vpop.permute.xlu0 %2333
    %2337 = vset.pattern.permute.xlu0 0
    %2338 = vperm.xlu0 %2337, %v2260
    %v2339 = vpop.permute.xlu0 %2338
    %2342 = vset.pattern.permute.xlu0 0
    %2343 = vperm.xlu0 %2342, %v2261
    %v2344 = vpop.permute.xlu0 %2343
    %2347 = vset.pattern.permute.xlu0 0
    %2348 = vperm.xlu0 %2347, %v2262
    %v2349 = vpop.permute.xlu0 %2348
    %2352 = vset.pattern.permute.xlu0 0
    %2353 = vperm.xlu0 %2352, %v2263
    %v2354 = vpop.permute.xlu0 %2353
    %2357 = vset.pattern.permute.xlu0 0
    %2358 = vperm.xlu0 %2357, %v2264
    %v2359 = vpop.permute.xlu0 %2358
    %2362 = vset.pattern.permute.xlu0 0
    %2363 = vperm.xlu0 %2362, %v2265
    %v2364 = vpop.permute.xlu0 %2363
    %2367 = vset.pattern.permute.xlu0 0
    %2368 = vperm.xlu0 %2367, %v2266
    %v2369 = vpop.permute.xlu0 %2368
    %2372 = vset.pattern.permute.xlu0 0
    %2373 = vperm.xlu0 %2372, %v2267
    %v2374 = vpop.permute.xlu0 %2373
    %2377 = vset.pattern.permute.xlu0 0
    %2378 = vperm.xlu0 %2377, %v2268
    %v2379 = vpop.permute.xlu0 %2378
    %2382 = vset.pattern.permute.xlu0 0
    %2383 = vperm.xlu0 %2382, %v2269
    %v2384 = vpop.permute.xlu0 %2383
    %2387 = vset.pattern.permute.xlu0 0
    %2388 = vperm.xlu0 %2387, %v2270
    %v2389 = vpop.permute.xlu0 %2388
    %2392 = vset.pattern.permute.xlu0 0
    %2393 = vperm.xlu0 %2392, %v2271
    %v2394 = vpop.permute.xlu0 %2393
    %2397 = vset.pattern.permute.xlu0 0
    %2398 = vperm.xlu0 %2397, %v2272
    %v2399 = vpop.permute.xlu0 %2398
    %2402 = vset.pattern.permute.xlu0 0
    %2403 = vperm.xlu0 %2402, %v2273
    %v2404 = vpop.permute.xlu0 %2403
    %2407 = vset.pattern.permute.xlu0 0
    %2408 = vperm.xlu0 %2407, %v2274
    %v2409 = vpop.permute.xlu0 %2408
    %2412 = vset.pattern.permute.xlu0 0
    %2413 = vperm.xlu0 %2412, %v2275
    %v2414 = vpop.permute.xlu0 %2413
    %2417 = vset.pattern.permute.xlu0 0
    %2418 = vperm.xlu0 %2417, %v2276
    %v2419 = vpop.permute.xlu0 %2418
    %2422 = vset.pattern.permute.xlu0 0
    %2423 = vperm.xlu0 %2422, %v2277
    %v2424 = vpop.permute.xlu0 %2423
    %2427 = vset.pattern.permute.xlu0 0
    %2428 = vperm.xlu0 %2427, %v2278
    %v2429 = vpop.permute.xlu0 %2428
    %2432 = vset.pattern.permute.xlu0 0
    %2433 = vperm.xlu0 %2432, %v2279
    %v2434 = vpop.permute.xlu0 %2433
    %2437 = vset.pattern.permute.xlu0 0
    %2438 = vperm.xlu0 %2437, %v2280
    %v2439 = vpop.permute.xlu0 %2438
    %2442 = vset.pattern.permute.xlu0 0
    %2443 = vperm.xlu0 %2442, %v2281
    %v2444 = vpop.permute.xlu0 %2443
    %2447 = vset.pattern.permute.xlu0 0
    %2448 = vperm.xlu0 %2447, %v2282
    %v2449 = vpop.permute.xlu0 %2448
    %2452 = vset.pattern.permute.xlu0 0
    %2453 = vperm.xlu0 %2452, %v2283
    %v2454 = vpop.permute.xlu0 %2453
    %2457 = vset.pattern.permute.xlu0 0
    %2458 = vperm.xlu0 %2457, %v2284
    %v2459 = vpop.permute.xlu0 %2458
    %2462 = vset.pattern.permute.xlu0 0
    %2463 = vperm.xlu0 %2462, %v2285
    %v2464 = vpop.permute.xlu0 %2463
    %2467 = vset.pattern.permute.xlu0 0
    %2468 = vperm.xlu0 %2467, %v2286
    %v2469 = vpop.permute.xlu0 %2468
    %2472 = vset.pattern.permute.xlu0 0
    %2473 = vperm.xlu0 %2472, %v2287
    %v2474 = vpop.permute.xlu0 %2473
    %2477 = vset.pattern.permute.xlu0 0
    %2478 = vperm.xlu0 %2477, %v2288
    %v2479 = vpop.permute.xlu0 %2478
    %2482 = vset.pattern.permute.xlu0 0
    %2483 = vperm.xlu0 %2482, %v2289
    %v2484 = vpop.permute.xlu0 %2483
    %2487 = vset.pattern.permute.xlu0 0
    %2488 = vperm.xlu0 %2487, %v2290
    %v2489 = vpop.permute.xlu0 %2488
    %2492 = vset.pattern.permute.xlu0 0
    %2493 = vperm.xlu0 %2492, %v2291
    %v2494 = vpop.permute.xlu0 %2493
    %2497 = vset.pattern.permute.xlu0 0
    %2498 = vperm.xlu0 %2497, %v2292
    %v2499 = vpop.permute.xlu0 %2498
    %2502 = vset.pattern.permute.xlu0 0
    %2503 = vperm.xlu0 %2502, %v2293
    %v2504 = vpop.permute.xlu0 %2503
    %2507 = vset.pattern.permute.xlu0 0
    %2508 = vperm.xlu0 %2507, %v2294
    %v2509 = vpop.permute.xlu0 %2508
    %2512 = vset.pattern.permute.xlu0 0
    %2513 = vperm.xlu0 %2512, %v2295
    %v2514 = vpop.permute.xlu0 %2513
    %2517 = vset.pattern.permute.xlu0 0
    %2518 = vperm.xlu0 %2517, %v2296
    %v2519 = vpop.permute.xlu0 %2518
    %2522 = vset.pattern.permute.xlu0 0
    %2523 = vperm.xlu0 %2522, %v2297
    %v2524 = vpop.permute.xlu0 %2523
    %2527 = vset.pattern.permute.xlu0 0
    %2528 = vperm.xlu0 %2527, %v2298
    %v2529 = vpop.permute.xlu0 %2528
    %2532 = vset.pattern.permute.xlu0 0
    %2533 = vperm.xlu0 %2532, %v2299
    %v2534 = vpop.permute.xlu0 %2533
    %2537 = vset.pattern.permute.xlu0 0
    %2538 = vperm.xlu0 %2537, %v2300
    %v2539 = vpop.permute.xlu0 %2538
    %2542 = vset.pattern.permute.xlu0 0
    %2543 = vperm.xlu0 %2542, %v2301
    %v2544 = vpop.permute.xlu0 %2543
    %2547 = vset.pattern.permute.xlu0 0
    %2548 = vperm.xlu0 %2547, %v2302
    %v2549 = vpop.permute.xlu0 %2548
    %2552 = vset.pattern.permute.xlu0 0
    %2553 = vperm.xlu0 %2552, %v2303
    %v2554 = vpop.permute.xlu0 %2553
    %2557 = vset.pattern.permute.xlu0 0
    %2558 = vperm.xlu0 %2557, %v2304
    %v2559 = vpop.permute.xlu0 %2558
    %2562 = vset.pattern.permute.xlu0 0
    %2563 = vperm.xlu0 %2562, %v2305
    %v2564 = vpop.permute.xlu0 %2563
    %2567 = vset.pattern.permute.xlu0 0
    %2568 = vperm.xlu0 %2567, %v2306
    %v2569 = vpop.permute.xlu0 %2568
    %2572 = vset.pattern.permute.xlu0 0
    %2573 = vperm.xlu0 %2572, %v2307
    %v2574 = vpop.permute.xlu0 %2573
    %2577 = vset.pattern.permute.xlu0 0
    %2578 = vperm.xlu0 %2577, %v2308
    %v2579 = vpop.permute.xlu0 %2578
    %2582 = vset.pattern.permute.xlu0 0
    %2583 = vperm.xlu0 %2582, %v2309
    %v2584 = vpop.permute.xlu0 %2583
    %2587 = vset.pattern.permute.xlu0 0
    %2588 = vperm.xlu0 %2587, %v2310
    %v2589 = vpop.permute.xlu0 %2588
    %2592 = vset.pattern.permute.xlu0 0
    %2593 = vperm.xlu0 %2592, %v2311
    %v2594 = vpop.permute.xlu0 %2593
    %2597 = vset.pattern.permute.xlu0 0
    %2598 = vperm.xlu0 %2597, %v2312
    %v2599 = vpop.permute.xlu0 %2598
    %2602 = vset.pattern.permute.xlu0 0
    %2603 = vperm.xlu0 %2602, %v2313
    %v2604 = vpop.permute.xlu0 %2603
    %2607 = vset.pattern.permute.xlu0 0
    %2608 = vperm.xlu0 %2607, %v2314
    %v2609 = vpop.permute.xlu0 %2608
    %2612 = vset.pattern.permute.xlu0 0
    %2613 = vperm.xlu0 %2612, %v2315
    %v2614 = vpop.permute.xlu0 %2613
    %2617 = vset.pattern.permute.xlu0 0
    %2618 = vperm.xlu0 %2617, %v2316
    %v2619 = vpop.permute.xlu0 %2618
    %2622 = vset.pattern.permute.xlu0 0
    %2623 = vperm.xlu0 %2622, %v2317
    %v2624 = vpop.permute.xlu0 %2623
    %2627 = vset.pattern.permute.xlu0 0
    %2628 = vperm.xlu0 %2627, %v2318
    %v2629 = vpop.permute.xlu0 %2628
    %2632 = vset.pattern.permute.xlu0 0
    %2633 = vperm.xlu0 %2632, %v2319
    %v2634 = vpop.permute.xlu0 %2633
    %2637 = vset.pattern.permute.xlu0 0
    %2638 = vperm.xlu0 %2637, %v2320
    %v2639 = vpop.permute.xlu0 %2638
    %v2769 = vunpack.c.l.b16 %v2097
    %v2770 = vunpack.c.h.b16 %v2097
    %v2771 = vunpack.c.l.b16 %v2098
    %v2772 = vunpack.c.h.b16 %v2098
    %v2773 = vunpack.c.l.b16 %v2099
    %v2774 = vunpack.c.h.b16 %v2099
    %v2775 = vunpack.c.l.b16 %v2100
    %v2776 = vunpack.c.h.b16 %v2100
    %v2777 = vunpack.c.l.b16 %v2101
    %v2778 = vunpack.c.h.b16 %v2101
    %v2779 = vunpack.c.l.b16 %v2102
    %v2780 = vunpack.c.h.b16 %v2102
    %v2781 = vunpack.c.l.b16 %v2103
    %v2782 = vunpack.c.h.b16 %v2103
    %v2783 = vunpack.c.l.b16 %v2104
    %v2784 = vunpack.c.h.b16 %v2104
    %v2785 = vunpack.c.l.b16 %v2105
    %v2786 = vunpack.c.h.b16 %v2105
    %v2787 = vunpack.c.l.b16 %v2106
    %v2788 = vunpack.c.h.b16 %v2106
    %v2789 = vunpack.c.l.b16 %v2107
    %v2790 = vunpack.c.h.b16 %v2107
    %v2791 = vunpack.c.l.b16 %v2108
    %v2792 = vunpack.c.h.b16 %v2108
    %v2793 = vunpack.c.l.b16 %v2109
    %v2794 = vunpack.c.h.b16 %v2109
    %v2795 = vunpack.c.l.b16 %v2110
    %v2796 = vunpack.c.h.b16 %v2110
    %v2797 = vunpack.c.l.b16 %v2111
    %v2798 = vunpack.c.h.b16 %v2111
    %v2799 = vunpack.c.l.b16 %v2112
    %v2800 = vunpack.c.h.b16 %v2112
    %v2801 = vunpack.c.l.b16 %v2113
    %v2802 = vunpack.c.h.b16 %v2113
    %v2803 = vunpack.c.l.b16 %v2114
    %v2804 = vunpack.c.h.b16 %v2114
    %v2805 = vunpack.c.l.b16 %v2115
    %v2806 = vunpack.c.h.b16 %v2115
    %v2807 = vunpack.c.l.b16 %v2116
    %v2808 = vunpack.c.h.b16 %v2116
    %v2809 = vunpack.c.l.b16 %v2117
    %v2810 = vunpack.c.h.b16 %v2117
    %v2811 = vunpack.c.l.b16 %v2118
    %v2812 = vunpack.c.h.b16 %v2118
    %v2813 = vunpack.c.l.b16 %v2119
    %v2814 = vunpack.c.h.b16 %v2119
    %v2815 = vunpack.c.l.b16 %v2120
    %v2816 = vunpack.c.h.b16 %v2120
    %v2817 = vunpack.c.l.b16 %v2121
    %v2818 = vunpack.c.h.b16 %v2121
    %v2819 = vunpack.c.l.b16 %v2122
    %v2820 = vunpack.c.h.b16 %v2122
    %v2821 = vunpack.c.l.b16 %v2123
    %v2822 = vunpack.c.h.b16 %v2123
    %v2823 = vunpack.c.l.b16 %v2124
    %v2824 = vunpack.c.h.b16 %v2124
    %v2825 = vunpack.c.l.b16 %v2125
    %v2826 = vunpack.c.h.b16 %v2125
    %v2827 = vunpack.c.l.b16 %v2126
    %v2828 = vunpack.c.h.b16 %v2126
    %v2829 = vunpack.c.l.b16 %v2127
    %v2830 = vunpack.c.h.b16 %v2127
    %v2831 = vunpack.c.l.b16 %v2128
    %v2832 = vunpack.c.h.b16 %v2128
    %v2833 = vunpack.c.l.b16 %v2129
    %v2834 = vunpack.c.h.b16 %v2129
    %v2835 = vunpack.c.l.b16 %v2130
    %v2836 = vunpack.c.h.b16 %v2130
    %v2837 = vunpack.c.l.b16 %v2131
    %v2838 = vunpack.c.h.b16 %v2131
    %v2839 = vunpack.c.l.b16 %v2132
    %v2840 = vunpack.c.h.b16 %v2132
    %v2841 = vunpack.c.l.b16 %v2133
    %v2842 = vunpack.c.h.b16 %v2133
    %v2843 = vunpack.c.l.b16 %v2134
    %v2844 = vunpack.c.h.b16 %v2134
    %v2845 = vunpack.c.l.b16 %v2135
    %v2846 = vunpack.c.h.b16 %v2135
    %v2847 = vunpack.c.l.b16 %v2136
    %v2848 = vunpack.c.h.b16 %v2136
    %v2849 = vunpack.c.l.b16 %v2137
    %v2850 = vunpack.c.h.b16 %v2137
    %v2851 = vunpack.c.l.b16 %v2138
    %v2852 = vunpack.c.h.b16 %v2138
    %v2853 = vunpack.c.l.b16 %v2139
    %v2854 = vunpack.c.h.b16 %v2139
    %v2855 = vunpack.c.l.b16 %v2140
    %v2856 = vunpack.c.h.b16 %v2140
    %v2857 = vunpack.c.l.b16 %v2141
    %v2858 = vunpack.c.h.b16 %v2141
    %v2859 = vunpack.c.l.b16 %v2142
    %v2860 = vunpack.c.h.b16 %v2142
    %v2861 = vunpack.c.l.b16 %v2143
    %v2862 = vunpack.c.h.b16 %v2143
    %v2863 = vunpack.c.l.b16 %v2144
    %v2864 = vunpack.c.h.b16 %v2144
    %v2865 = vunpack.c.l.b16 %v2145
    %v2866 = vunpack.c.h.b16 %v2145
    %v2867 = vunpack.c.l.b16 %v2146
    %v2868 = vunpack.c.h.b16 %v2146
    %v2869 = vunpack.c.l.b16 %v2147
    %v2870 = vunpack.c.h.b16 %v2147
    %v2871 = vunpack.c.l.b16 %v2148
    %v2872 = vunpack.c.h.b16 %v2148
    %v2873 = vunpack.c.l.b16 %v2149
    %v2874 = vunpack.c.h.b16 %v2149
    %v2875 = vunpack.c.l.b16 %v2150
    %v2876 = vunpack.c.h.b16 %v2150
    %v2877 = vunpack.c.l.b16 %v2151
    %v2878 = vunpack.c.h.b16 %v2151
    %v2879 = vunpack.c.l.b16 %v2152
    %v2880 = vunpack.c.h.b16 %v2152
    %v2881 = vunpack.c.l.b16 %v2153
    %v2882 = vunpack.c.h.b16 %v2153
    %v2883 = vunpack.c.l.b16 %v2154
    %v2884 = vunpack.c.h.b16 %v2154
    %v2885 = vunpack.c.l.b16 %v2155
    %v2886 = vunpack.c.h.b16 %v2155
    %v2887 = vunpack.c.l.b16 %v2156
    %v2888 = vunpack.c.h.b16 %v2156
    %v2889 = vunpack.c.l.b16 %v2157
    %v2890 = vunpack.c.h.b16 %v2157
    %v2891 = vunpack.c.l.b16 %v2158
    %v2892 = vunpack.c.h.b16 %v2158
    %v2893 = vunpack.c.l.b16 %v2159
    %v2894 = vunpack.c.h.b16 %v2159
    %v2895 = vunpack.c.l.b16 %v2160
    %v2896 = vunpack.c.h.b16 %v2160
    %v2897 = vunpack.c.l.b16 %v2161
    %v2898 = vunpack.c.h.b16 %v2161
    %v2899 = vunpack.c.l.b16 %v2162
    %v2900 = vunpack.c.h.b16 %v2162
    %v2901 = vunpack.c.l.b16 %v2163
    %v2902 = vunpack.c.h.b16 %v2163
    %v2903 = vunpack.c.l.b16 %v2164
    %v2904 = vunpack.c.h.b16 %v2164
    %v2905 = vunpack.c.l.b16 %v2165
    %v2906 = vunpack.c.h.b16 %v2165
    %v2907 = vunpack.c.l.b16 %v2166
    %v2908 = vunpack.c.h.b16 %v2166
    %v2909 = vunpack.c.l.b16 %v2167
    %v2910 = vunpack.c.h.b16 %v2167
    %v2911 = vunpack.c.l.b16 %v2168
    %v2912 = vunpack.c.h.b16 %v2168
    %v2913 = vunpack.c.l.b16 %v2169
    %v2914 = vunpack.c.h.b16 %v2169
    %v2915 = vunpack.c.l.b16 %v2170
    %v2916 = vunpack.c.h.b16 %v2170
    %v2917 = vunpack.c.l.b16 %v2171
    %v2918 = vunpack.c.h.b16 %v2171
    %v2919 = vunpack.c.l.b16 %v2172
    %v2920 = vunpack.c.h.b16 %v2172
    %v2921 = vunpack.c.l.b16 %v2173
    %v2922 = vunpack.c.h.b16 %v2173
    %v2923 = vunpack.c.l.b16 %v2174
    %v2924 = vunpack.c.h.b16 %v2174
    %v2925 = vunpack.c.l.b16 %v2175
    %v2926 = vunpack.c.h.b16 %v2175
    %v2927 = vunpack.c.l.b16 %v2176
    %v2928 = vunpack.c.h.b16 %v2176
    %v2929 = vunpack.c.l.b16 %v2177
    %v2930 = vunpack.c.h.b16 %v2177
    %v2931 = vunpack.c.l.b16 %v2178
    %v2932 = vunpack.c.h.b16 %v2178
    %v2933 = vunpack.c.l.b16 %v2179
    %v2934 = vunpack.c.h.b16 %v2179
    %v2935 = vunpack.c.l.b16 %v2180
    %v2936 = vunpack.c.h.b16 %v2180
    %v2937 = vunpack.c.l.b16 %v2181
    %v2938 = vunpack.c.h.b16 %v2181
    %v2939 = vunpack.c.l.b16 %v2182
    %v2940 = vunpack.c.h.b16 %v2182
    %v2941 = vunpack.c.l.b16 %v2183
    %v2942 = vunpack.c.h.b16 %v2183
    %v2943 = vunpack.c.l.b16 %v2184
    %v2944 = vunpack.c.h.b16 %v2184
    %v2945 = vunpack.c.l.b16 %v2185
    %v2946 = vunpack.c.h.b16 %v2185
    %v2947 = vunpack.c.l.b16 %v2186
    %v2948 = vunpack.c.h.b16 %v2186
    %v2949 = vunpack.c.l.b16 %v2187
    %v2950 = vunpack.c.h.b16 %v2187
    %v2951 = vunpack.c.l.b16 %v2188
    %v2952 = vunpack.c.h.b16 %v2188
    %v2953 = vunpack.c.l.b16 %v2189
    %v2954 = vunpack.c.h.b16 %v2189
    %v2955 = vunpack.c.l.b16 %v2190
    %v2956 = vunpack.c.h.b16 %v2190
    %v2957 = vunpack.c.l.b16 %v2191
    %v2958 = vunpack.c.h.b16 %v2191
    %v2959 = vunpack.c.l.b16 %v2192
    %v2960 = vunpack.c.h.b16 %v2192
    %v2961 = vunpack.c.l.b16 %v2193
    %v2962 = vunpack.c.h.b16 %v2193
    %v2963 = vunpack.c.l.b16 %v2194
    %v2964 = vunpack.c.h.b16 %v2194
    %v2965 = vunpack.c.l.b16 %v2195
    %v2966 = vunpack.c.h.b16 %v2195
    %v2967 = vunpack.c.l.b16 %v2196
    %v2968 = vunpack.c.h.b16 %v2196
    %v2969 = vunpack.c.l.b16 %v2197
    %v2970 = vunpack.c.h.b16 %v2197
    %v2971 = vunpack.c.l.b16 %v2198
    %v2972 = vunpack.c.h.b16 %v2198
    %v2973 = vunpack.c.l.b16 %v2199
    %v2974 = vunpack.c.h.b16 %v2199
    %v2975 = vunpack.c.l.b16 %v2200
    %v2976 = vunpack.c.h.b16 %v2200
    %v2977 = vunpack.c.l.b16 %v2201
    %v2978 = vunpack.c.h.b16 %v2201
    %v2979 = vunpack.c.l.b16 %v2202
    %v2980 = vunpack.c.h.b16 %v2202
    %v2981 = vunpack.c.l.b16 %v2203
    %v2982 = vunpack.c.h.b16 %v2203
    %v2983 = vunpack.c.l.b16 %v2204
    %v2984 = vunpack.c.h.b16 %v2204
    %v2985 = vunpack.c.l.b16 %v2205
    %v2986 = vunpack.c.h.b16 %v2205
    %v2987 = vunpack.c.l.b16 %v2206
    %v2988 = vunpack.c.h.b16 %v2206
    %v2989 = vunpack.c.l.b16 %v2207
    %v2990 = vunpack.c.h.b16 %v2207
    %v2991 = vunpack.c.l.b16 %v2208
    %v2992 = vunpack.c.h.b16 %v2208
    %v2993 = vunpack.c.l.b16 %v2209
    %v2994 = vunpack.c.h.b16 %v2209
    %v2995 = vunpack.c.l.b16 %v2210
    %v2996 = vunpack.c.h.b16 %v2210
    %v2997 = vunpack.c.l.b16 %v2211
    %v2998 = vunpack.c.h.b16 %v2211
    %v2999 = vunpack.c.l.b16 %v2212
    %v3000 = vunpack.c.h.b16 %v2212
    %v3001 = vunpack.c.l.b16 %v2213
    %v3002 = vunpack.c.h.b16 %v2213
    %v3003 = vunpack.c.l.b16 %v2214
    %v3004 = vunpack.c.h.b16 %v2214
    %v3005 = vunpack.c.l.b16 %v2215
    %v3006 = vunpack.c.h.b16 %v2215
    %v3007 = vunpack.c.l.b16 %v2216
    %v3008 = vunpack.c.h.b16 %v2216
    %v3009 = vunpack.c.l.b16 %v2217
    %v3010 = vunpack.c.h.b16 %v2217
    %v3011 = vunpack.c.l.b16 %v2218
    %v3012 = vunpack.c.h.b16 %v2218
    %v3013 = vunpack.c.l.b16 %v2219
    %v3014 = vunpack.c.h.b16 %v2219
    %v3015 = vunpack.c.l.b16 %v2220
    %v3016 = vunpack.c.h.b16 %v2220
    %v3017 = vunpack.c.l.b16 %v2221
    %v3018 = vunpack.c.h.b16 %v2221
    %v3019 = vunpack.c.l.b16 %v2222
    %v3020 = vunpack.c.h.b16 %v2222
    %v3021 = vunpack.c.l.b16 %v2223
    %v3022 = vunpack.c.h.b16 %v2223
    %v3023 = vunpack.c.l.b16 %v2224
    %v3024 = vunpack.c.h.b16 %v2224
    %v3025 = vpack.c.b16 %v2773, %v2769
    %v3026 = vpack.c.b16 %v2774, %v2770
    %v3027 = vpack.c.b16 %v2775, %v2771
    %v3028 = vpack.c.b16 %v2776, %v2772
    %v3029 = vpack.c.b16 %v2781, %v2777
    %v3030 = vpack.c.b16 %v2782, %v2778
    %v3031 = vpack.c.b16 %v2783, %v2779
    %v3032 = vpack.c.b16 %v2784, %v2780
    %v3033 = vpack.c.b16 %v2789, %v2785
    %v3034 = vpack.c.b16 %v2790, %v2786
    %v3035 = vpack.c.b16 %v2791, %v2787
    %v3036 = vpack.c.b16 %v2792, %v2788
    %v3037 = vpack.c.b16 %v2797, %v2793
    %v3038 = vpack.c.b16 %v2798, %v2794
    %v3039 = vpack.c.b16 %v2799, %v2795
    %v3040 = vpack.c.b16 %v2800, %v2796
    %v3041 = vpack.c.b16 %v2805, %v2801
    %v3042 = vpack.c.b16 %v2806, %v2802
    %v3043 = vpack.c.b16 %v2807, %v2803
    %v3044 = vpack.c.b16 %v2808, %v2804
    %v3045 = vpack.c.b16 %v2813, %v2809
    %v3046 = vpack.c.b16 %v2814, %v2810
    %v3047 = vpack.c.b16 %v2815, %v2811
    %v3048 = vpack.c.b16 %v2816, %v2812
    %v3049 = vpack.c.b16 %v2821, %v2817
    %v3050 = vpack.c.b16 %v2822, %v2818
    %v3051 = vpack.c.b16 %v2823, %v2819
    %v3052 = vpack.c.b16 %v2824, %v2820
    %v3053 = vpack.c.b16 %v2829, %v2825
    %v3054 = vpack.c.b16 %v2830, %v2826
    %v3055 = vpack.c.b16 %v2831, %v2827
    %v3056 = vpack.c.b16 %v2832, %v2828
    %v3057 = vpack.c.b16 %v2837, %v2833
    %v3058 = vpack.c.b16 %v2838, %v2834
    %v3059 = vpack.c.b16 %v2839, %v2835
    %v3060 = vpack.c.b16 %v2840, %v2836
    %v3061 = vpack.c.b16 %v2845, %v2841
    %v3062 = vpack.c.b16 %v2846, %v2842
    %v3063 = vpack.c.b16 %v2847, %v2843
    %v3064 = vpack.c.b16 %v2848, %v2844
    %v3065 = vpack.c.b16 %v2853, %v2849
    %v3066 = vpack.c.b16 %v2854, %v2850
    %v3067 = vpack.c.b16 %v2855, %v2851
    %v3068 = vpack.c.b16 %v2856, %v2852
    %v3069 = vpack.c.b16 %v2861, %v2857
    %v3070 = vpack.c.b16 %v2862, %v2858
    %v3071 = vpack.c.b16 %v2863, %v2859
    %v3072 = vpack.c.b16 %v2864, %v2860
    %v3073 = vpack.c.b16 %v2869, %v2865
    %v3074 = vpack.c.b16 %v2870, %v2866
    %v3075 = vpack.c.b16 %v2871, %v2867
    %v3076 = vpack.c.b16 %v2872, %v2868
    %v3077 = vpack.c.b16 %v2877, %v2873
    %v3078 = vpack.c.b16 %v2878, %v2874
    %v3079 = vpack.c.b16 %v2879, %v2875
    %v3080 = vpack.c.b16 %v2880, %v2876
    %v3081 = vpack.c.b16 %v2885, %v2881
    %v3082 = vpack.c.b16 %v2886, %v2882
    %v3083 = vpack.c.b16 %v2887, %v2883
    %v3084 = vpack.c.b16 %v2888, %v2884
    %v3085 = vpack.c.b16 %v2893, %v2889
    %v3086 = vpack.c.b16 %v2894, %v2890
    %v3087 = vpack.c.b16 %v2895, %v2891
    %v3088 = vpack.c.b16 %v2896, %v2892
    %v3089 = vpack.c.b16 %v2901, %v2897
    %v3090 = vpack.c.b16 %v2902, %v2898
    %v3091 = vpack.c.b16 %v2903, %v2899
    %v3092 = vpack.c.b16 %v2904, %v2900
    %v3093 = vpack.c.b16 %v2909, %v2905
    %v3094 = vpack.c.b16 %v2910, %v2906
    %v3095 = vpack.c.b16 %v2911, %v2907
    %v3096 = vpack.c.b16 %v2912, %v2908
    %v3097 = vpack.c.b16 %v2917, %v2913
    %v3098 = vpack.c.b16 %v2918, %v2914
    %v3099 = vpack.c.b16 %v2919, %v2915
    %v3100 = vpack.c.b16 %v2920, %v2916
    %v3101 = vpack.c.b16 %v2925, %v2921
    %v3102 = vpack.c.b16 %v2926, %v2922
    %v3103 = vpack.c.b16 %v2927, %v2923
    %v3104 = vpack.c.b16 %v2928, %v2924
    %v3105 = vpack.c.b16 %v2933, %v2929
    %v3106 = vpack.c.b16 %v2934, %v2930
    %v3107 = vpack.c.b16 %v2935, %v2931
    %v3108 = vpack.c.b16 %v2936, %v2932
    %v3109 = vpack.c.b16 %v2941, %v2937
    %v3110 = vpack.c.b16 %v2942, %v2938
    %v3111 = vpack.c.b16 %v2943, %v2939
    %v3112 = vpack.c.b16 %v2944, %v2940
    %v3113 = vpack.c.b16 %v2949, %v2945
    %v3114 = vpack.c.b16 %v2950, %v2946
    %v3115 = vpack.c.b16 %v2951, %v2947
    %v3116 = vpack.c.b16 %v2952, %v2948
    %v3117 = vpack.c.b16 %v2957, %v2953
    %v3118 = vpack.c.b16 %v2958, %v2954
    %v3119 = vpack.c.b16 %v2959, %v2955
    %v3120 = vpack.c.b16 %v2960, %v2956
    %v3121 = vpack.c.b16 %v2965, %v2961
    %v3122 = vpack.c.b16 %v2966, %v2962
    %v3123 = vpack.c.b16 %v2967, %v2963
    %v3124 = vpack.c.b16 %v2968, %v2964
    %v3125 = vpack.c.b16 %v2973, %v2969
    %v3126 = vpack.c.b16 %v2974, %v2970
    %v3127 = vpack.c.b16 %v2975, %v2971
    %v3128 = vpack.c.b16 %v2976, %v2972
    %v3129 = vpack.c.b16 %v2981, %v2977
    %v3130 = vpack.c.b16 %v2982, %v2978
    %v3131 = vpack.c.b16 %v2983, %v2979
    %v3132 = vpack.c.b16 %v2984, %v2980
    %v3133 = vpack.c.b16 %v2989, %v2985
    %v3134 = vpack.c.b16 %v2990, %v2986
    %v3135 = vpack.c.b16 %v2991, %v2987
    %v3136 = vpack.c.b16 %v2992, %v2988
    %v3137 = vpack.c.b16 %v2997, %v2993
    %v3138 = vpack.c.b16 %v2998, %v2994
    %v3139 = vpack.c.b16 %v2999, %v2995
    %v3140 = vpack.c.b16 %v3000, %v2996
    %v3141 = vpack.c.b16 %v3005, %v3001
    %v3142 = vpack.c.b16 %v3006, %v3002
    %v3143 = vpack.c.b16 %v3007, %v3003
    %v3144 = vpack.c.b16 %v3008, %v3004
    %v3145 = vpack.c.b16 %v3013, %v3009
    %v3146 = vpack.c.b16 %v3014, %v3010
    %v3147 = vpack.c.b16 %v3015, %v3011
    %v3148 = vpack.c.b16 %v3016, %v3012
    %v3149 = vpack.c.b16 %v3021, %v3017
    %v3150 = vpack.c.b16 %v3022, %v3018
    %v3151 = vpack.c.b16 %v3023, %v3019
    %v3152 = vpack.c.b16 %v3024, %v3020
    %3281 = vmatprep.subr.bf16.mxu0 0
    %3282 = vmatpush1.bf16.msra.mxu0 %v2232
    %3283 = vmatprep.subr.bf16.mxu0 0
    %3284 = vmatpush1.bf16.msra.mxu0 %v2231
    %3285 = vmatprep.subr.bf16.mxu0 0
    %3286 = vmatpush1.bf16.msra.mxu0 %v2230
    %3287 = vmatprep.subr.bf16.mxu0 0
    %3288 = vmatpush1.bf16.msra.mxu0 %v2229
    %3289 = vmatprep.subr.bf16.mxu0 0
    %3290 = vmatpush1.bf16.msra.mxu0 %v2228
    %3291 = vmatprep.subr.bf16.mxu0 0
    %3292 = vmatpush1.bf16.msra.mxu0 %v2227
    %3293 = vmatprep.subr.bf16.mxu0 0
    %3294 = vmatpush1.bf16.msra.mxu0 %v2226
    %3295 = vmatprep.subr.bf16.mxu0 0
    %3296 = vmatpush1.bf16.msra.mxu0 %v2225
    %3297 = vmatprep.subr.bf16.mxu0 0
    %3298 = vmatpush2.bf16.msra.mxu0 %v2240
    %3299 = vmatprep.subr.bf16.mxu0 0
    %3300 = vmatpush2.bf16.msra.mxu0 %v2239
    %3301 = vmatprep.subr.bf16.mxu0 0
    %3302 = vmatpush2.bf16.msra.mxu0 %v2238
    %3303 = vmatprep.subr.bf16.mxu0 0
    %3304 = vmatpush2.bf16.msra.mxu0 %v2237
    %3305 = vmatprep.subr.bf16.mxu0 0
    %3306 = vmatpush2.bf16.msra.mxu0 %v2236
    %3307 = vmatprep.subr.bf16.mxu0 0
    %3308 = vmatpush2.bf16.msra.mxu0 %v2235
    %3309 = vmatprep.subr.bf16.mxu0 0
    %3310 = vmatpush2.bf16.msra.mxu0 %v2234
    %3311 = vmatprep.subr.bf16.mxu0 0
    %3312 = vmatpush2.bf16.msra.mxu0 %v2233
    %3313 = vmatprep.mubr.bf16.mxu0 %v3026
    %3314 = vmatmul.mubr.bf16.gmra.mxu0 %v3025
    %v3315 = vpop.f32.mrf.mxu0
    %v3316 = vadd.f32 %v2324, %v3315
    %v3317 = vpop.f32.mrf.mxu0
    %v3318 = vpop.f32.mrf.mxu0
    %v3319 = vadd.f32 %v2329, %v3318
    %v3320 = vpop.f32.mrf.mxu0
    %3321 = vmatprep.mubr.bf16.mxu0 %v3030
    %3322 = vmatmul.mubr.bf16.gmra.mxu0 %v3029
    %v3323 = vpop.f32.mrf.mxu0
    %v3324 = vadd.f32 %v2334, %v3323
    %v3325 = vpop.f32.mrf.mxu0
    %v3326 = vpop.f32.mrf.mxu0
    %v3327 = vadd.f32 %v2339, %v3326
    %v3328 = vpop.f32.mrf.mxu0
    %3329 = vmatprep.mubr.bf16.mxu0 %v3034
    %3330 = vmatmul.mubr.bf16.gmra.mxu0 %v3033
    %v3331 = vpop.f32.mrf.mxu0
    %v3332 = vadd.f32 %v2344, %v3331
    %v3333 = vpop.f32.mrf.mxu0
    %v3334 = vpop.f32.mrf.mxu0
    %v3335 = vadd.f32 %v2349, %v3334
    %v3336 = vpop.f32.mrf.mxu0
    %3337 = vmatprep.mubr.bf16.mxu0 %v3038
    %3338 = vmatmul.mubr.bf16.gmra.mxu0 %v3037
    %v3339 = vpop.f32.mrf.mxu0
    %v3340 = vadd.f32 %v2354, %v3339
    %v3341 = vpop.f32.mrf.mxu0
    %v3342 = vpop.f32.mrf.mxu0
    %v3343 = vadd.f32 %v2359, %v3342
    %v3344 = vpop.f32.mrf.mxu0
    %3345 = vmatprep.mubr.bf16.mxu0 %v3042
    %3346 = vmatmul.mubr.bf16.gmra.mxu0 %v3041
    %v3347 = vpop.f32.mrf.mxu0
    %v3348 = vadd.f32 %v2364, %v3347
    %v3349 = vpop.f32.mrf.mxu0
    %v3350 = vpop.f32.mrf.mxu0
    %v3351 = vadd.f32 %v2369, %v3350
    %v3352 = vpop.f32.mrf.mxu0
    %3353 = vmatprep.mubr.bf16.mxu0 %v3046
    %3354 = vmatmul.mubr.bf16.gmra.mxu0 %v3045
    %v3355 = vpop.f32.mrf.mxu0
    %v3356 = vadd.f32 %v2374, %v3355
    %v3357 = vpop.f32.mrf.mxu0
    %v3358 = vpop.f32.mrf.mxu0
    %v3359 = vadd.f32 %v2379, %v3358
    %v3360 = vpop.f32.mrf.mxu0
    %3361 = vmatprep.mubr.bf16.mxu0 %v3050
    %3362 = vmatmul.mubr.bf16.gmra.mxu0 %v3049
    %v3363 = vpop.f32.mrf.mxu0
    %v3364 = vadd.f32 %v2384, %v3363
    %v3365 = vpop.f32.mrf.mxu0
    %v3366 = vpop.f32.mrf.mxu0
    %v3367 = vadd.f32 %v2389, %v3366
    %v3368 = vpop.f32.mrf.mxu0
    %3369 = vmatprep.mubr.bf16.mxu0 %v3054
    %3370 = vmatmul.mubr.bf16.gmra.mxu0 %v3053
    %v3371 = vpop.f32.mrf.mxu0
    %v3372 = vadd.f32 %v2394, %v3371
    %v3373 = vpop.f32.mrf.mxu0
    %v3374 = vpop.f32.mrf.mxu0
    %v3375 = vadd.f32 %v2399, %v3374
    %v3376 = vpop.f32.mrf.mxu0
    %3377 = vmatprep.mubr.bf16.mxu0 %v3058
    %3378 = vmatmul.mubr.bf16.gmra.mxu0 %v3057
    %v3379 = vpop.f32.mrf.mxu0
    %v3380 = vadd.f32 %v2404, %v3379
    %v3381 = vpop.f32.mrf.mxu0
    %v3382 = vpop.f32.mrf.mxu0
    %v3383 = vadd.f32 %v2409, %v3382
    %v3384 = vpop.f32.mrf.mxu0
    %3385 = vmatprep.mubr.bf16.mxu0 %v3062
    %3386 = vmatmul.mubr.bf16.gmra.mxu0 %v3061
    %v3387 = vpop.f32.mrf.mxu0
    %v3388 = vadd.f32 %v2414, %v3387
    %v3389 = vpop.f32.mrf.mxu0
    %v3390 = vpop.f32.mrf.mxu0
    %v3391 = vadd.f32 %v2419, %v3390
    %v3392 = vpop.f32.mrf.mxu0
    %3393 = vmatprep.mubr.bf16.mxu0 %v3066
    %3394 = vmatmul.mubr.bf16.gmra.mxu0 %v3065
    %v3395 = vpop.f32.mrf.mxu0
    %v3396 = vadd.f32 %v2424, %v3395
    %v3397 = vpop.f32.mrf.mxu0
    %v3398 = vpop.f32.mrf.mxu0
    %v3399 = vadd.f32 %v2429, %v3398
    %v3400 = vpop.f32.mrf.mxu0
    %3401 = vmatprep.mubr.bf16.mxu0 %v3070
    %3402 = vmatmul.mubr.bf16.gmra.mxu0 %v3069
    %v3403 = vpop.f32.mrf.mxu0
    %v3404 = vadd.f32 %v2434, %v3403
    %v3405 = vpop.f32.mrf.mxu0
    %v3406 = vpop.f32.mrf.mxu0
    %v3407 = vadd.f32 %v2439, %v3406
    %v3408 = vpop.f32.mrf.mxu0
    %3409 = vmatprep.mubr.bf16.mxu0 %v3074
    %3410 = vmatmul.mubr.bf16.gmra.mxu0 %v3073
    %v3411 = vpop.f32.mrf.mxu0
    %v3412 = vadd.f32 %v2444, %v3411
    %v3413 = vpop.f32.mrf.mxu0
    %v3414 = vpop.f32.mrf.mxu0
    %v3415 = vadd.f32 %v2449, %v3414
    %v3416 = vpop.f32.mrf.mxu0
    %3417 = vmatprep.mubr.bf16.mxu0 %v3078
    %3418 = vmatmul.mubr.bf16.gmra.mxu0 %v3077
    %v3419 = vpop.f32.mrf.mxu0
    %v3420 = vadd.f32 %v2454, %v3419
    %v3421 = vpop.f32.mrf.mxu0
    %v3422 = vpop.f32.mrf.mxu0
    %v3423 = vadd.f32 %v2459, %v3422
    %v3424 = vpop.f32.mrf.mxu0
    %3425 = vmatprep.mubr.bf16.mxu0 %v3082
    %3426 = vmatmul.mubr.bf16.gmra.mxu0 %v3081
    %v3427 = vpop.f32.mrf.mxu0
    %v3428 = vadd.f32 %v2464, %v3427
    %v3429 = vpop.f32.mrf.mxu0
    %v3430 = vpop.f32.mrf.mxu0
    %v3431 = vadd.f32 %v2469, %v3430
    %v3432 = vpop.f32.mrf.mxu0
    %3433 = vmatprep.mubr.bf16.mxu0 %v3086
    %3434 = vmatmul.mubr.bf16.gmra.mxu0 %v3085
    %v3435 = vpop.f32.mrf.mxu0
    %v3436 = vadd.f32 %v2474, %v3435
    %v3437 = vpop.f32.mrf.mxu0
    %v3438 = vpop.f32.mrf.mxu0
    %v3439 = vadd.f32 %v2479, %v3438
    %v3440 = vpop.f32.mrf.mxu0
    %3441 = vmatprep.mubr.bf16.mxu0 %v3090
    %3442 = vmatmul.mubr.bf16.gmra.mxu0 %v3089
    %v3443 = vpop.f32.mrf.mxu0
    %v3444 = vadd.f32 %v2484, %v3443
    %v3445 = vpop.f32.mrf.mxu0
    %v3446 = vpop.f32.mrf.mxu0
    %v3447 = vadd.f32 %v2489, %v3446
    %v3448 = vpop.f32.mrf.mxu0
    %3449 = vmatprep.mubr.bf16.mxu0 %v3094
    %3450 = vmatmul.mubr.bf16.gmra.mxu0 %v3093
    %v3451 = vpop.f32.mrf.mxu0
    %v3452 = vadd.f32 %v2494, %v3451
    %v3453 = vpop.f32.mrf.mxu0
    %v3454 = vpop.f32.mrf.mxu0
    %v3455 = vadd.f32 %v2499, %v3454
    %v3456 = vpop.f32.mrf.mxu0
    %3457 = vmatprep.mubr.bf16.mxu0 %v3098
    %3458 = vmatmul.mubr.bf16.gmra.mxu0 %v3097
    %v3459 = vpop.f32.mrf.mxu0
    %v3460 = vadd.f32 %v2504, %v3459
    %v3461 = vpop.f32.mrf.mxu0
    %v3462 = vpop.f32.mrf.mxu0
    %v3463 = vadd.f32 %v2509, %v3462
    %v3464 = vpop.f32.mrf.mxu0
    %3465 = vmatprep.mubr.bf16.mxu0 %v3102
    %3466 = vmatmul.mubr.bf16.gmra.mxu0 %v3101
    %v3467 = vpop.f32.mrf.mxu0
    %v3468 = vadd.f32 %v2514, %v3467
    %v3469 = vpop.f32.mrf.mxu0
    %v3470 = vpop.f32.mrf.mxu0
    %v3471 = vadd.f32 %v2519, %v3470
    %v3472 = vpop.f32.mrf.mxu0
    %3473 = vmatprep.mubr.bf16.mxu0 %v3106
    %3474 = vmatmul.mubr.bf16.gmra.mxu0 %v3105
    %v3475 = vpop.f32.mrf.mxu0
    %v3476 = vadd.f32 %v2524, %v3475
    %v3477 = vpop.f32.mrf.mxu0
    %v3478 = vpop.f32.mrf.mxu0
    %v3479 = vadd.f32 %v2529, %v3478
    %v3480 = vpop.f32.mrf.mxu0
    %3481 = vmatprep.mubr.bf16.mxu0 %v3110
    %3482 = vmatmul.mubr.bf16.gmra.mxu0 %v3109
    %v3483 = vpop.f32.mrf.mxu0
    %v3484 = vadd.f32 %v2534, %v3483
    %v3485 = vpop.f32.mrf.mxu0
    %v3486 = vpop.f32.mrf.mxu0
    %v3487 = vadd.f32 %v2539, %v3486
    %v3488 = vpop.f32.mrf.mxu0
    %3489 = vmatprep.mubr.bf16.mxu0 %v3114
    %3490 = vmatmul.mubr.bf16.gmra.mxu0 %v3113
    %v3491 = vpop.f32.mrf.mxu0
    %v3492 = vadd.f32 %v2544, %v3491
    %v3493 = vpop.f32.mrf.mxu0
    %v3494 = vpop.f32.mrf.mxu0
    %v3495 = vadd.f32 %v2549, %v3494
    %v3496 = vpop.f32.mrf.mxu0
    %3497 = vmatprep.mubr.bf16.mxu0 %v3118
    %3498 = vmatmul.mubr.bf16.gmra.mxu0 %v3117
    %v3499 = vpop.f32.mrf.mxu0
    %v3500 = vadd.f32 %v2554, %v3499
    %v3501 = vpop.f32.mrf.mxu0
    %v3502 = vpop.f32.mrf.mxu0
    %v3503 = vadd.f32 %v2559, %v3502
    %v3504 = vpop.f32.mrf.mxu0
    %3505 = vmatprep.mubr.bf16.mxu0 %v3122
    %3506 = vmatmul.mubr.bf16.gmra.mxu0 %v3121
    %v3507 = vpop.f32.mrf.mxu0
    %v3508 = vadd.f32 %v2564, %v3507
    %v3509 = vpop.f32.mrf.mxu0
    %v3510 = vpop.f32.mrf.mxu0
    %v3511 = vadd.f32 %v2569, %v3510
    %v3512 = vpop.f32.mrf.mxu0
    %3513 = vmatprep.mubr.bf16.mxu0 %v3126
    %3514 = vmatmul.mubr.bf16.gmra.mxu0 %v3125
    %v3515 = vpop.f32.mrf.mxu0
    %v3516 = vadd.f32 %v2574, %v3515
    %v3517 = vpop.f32.mrf.mxu0
    %v3518 = vpop.f32.mrf.mxu0
    %v3519 = vadd.f32 %v2579, %v3518
    %v3520 = vpop.f32.mrf.mxu0
    %3521 = vmatprep.mubr.bf16.mxu0 %v3130
    %3522 = vmatmul.mubr.bf16.gmra.mxu0 %v3129
    %v3523 = vpop.f32.mrf.mxu0
    %v3524 = vadd.f32 %v2584, %v3523
    %v3525 = vpop.f32.mrf.mxu0
    %v3526 = vpop.f32.mrf.mxu0
    %v3527 = vadd.f32 %v2589, %v3526
    %v3528 = vpop.f32.mrf.mxu0
    %3529 = vmatprep.mubr.bf16.mxu0 %v3134
    %3530 = vmatmul.mubr.bf16.gmra.mxu0 %v3133
    %v3531 = vpop.f32.mrf.mxu0
    %v3532 = vadd.f32 %v2594, %v3531
    %v3533 = vpop.f32.mrf.mxu0
    %v3534 = vpop.f32.mrf.mxu0
    %v3535 = vadd.f32 %v2599, %v3534
    %v3536 = vpop.f32.mrf.mxu0
    %3537 = vmatprep.mubr.bf16.mxu0 %v3138
    %3538 = vmatmul.mubr.bf16.gmra.mxu0 %v3137
    %v3539 = vpop.f32.mrf.mxu0
    %v3540 = vadd.f32 %v2604, %v3539
    %v3541 = vpop.f32.mrf.mxu0
    %v3542 = vpop.f32.mrf.mxu0
    %v3543 = vadd.f32 %v2609, %v3542
    %v3544 = vpop.f32.mrf.mxu0
    %3545 = vmatprep.mubr.bf16.mxu0 %v3142
    %3546 = vmatmul.mubr.bf16.gmra.mxu0 %v3141
    %v3547 = vpop.f32.mrf.mxu0
    %v3548 = vadd.f32 %v2614, %v3547
    %v3549 = vpop.f32.mrf.mxu0
    %v3550 = vpop.f32.mrf.mxu0
    %v3551 = vadd.f32 %v2619, %v3550
    %v3552 = vpop.f32.mrf.mxu0
    %3553 = vmatprep.mubr.bf16.mxu0 %v3146
    %3554 = vmatmul.mubr.bf16.gmra.mxu0 %v3145
    %v3555 = vpop.f32.mrf.mxu0
    %v3556 = vadd.f32 %v2624, %v3555
    %v3557 = vpop.f32.mrf.mxu0
    %v3558 = vpop.f32.mrf.mxu0
    %v3559 = vadd.f32 %v2629, %v3558
    %v3560 = vpop.f32.mrf.mxu0
    %3561 = vmatprep.mubr.bf16.mxu0 %v3150
    %3562 = vmatmul.mubr.bf16.gmra.mxu0 %v3149
    %v3563 = vpop.f32.mrf.mxu0
    %v3564 = vadd.f32 %v2634, %v3563
    %v3565 = vpop.f32.mrf.mxu0
    %v3566 = vpop.f32.mrf.mxu0
    %v3567 = vadd.f32 %v2639, %v3566
    %v3568 = vpop.f32.mrf.mxu0
    %3569 = vdwg.mxu0
    %3570 = vmatprep.subr.bf16.mxu0 0
    %3571 = vmatpush1.bf16.msra.mxu0 %v2248
    %3572 = vmatprep.subr.bf16.mxu0 0
    %3573 = vmatpush1.bf16.msra.mxu0 %v2247
    %3574 = vmatprep.subr.bf16.mxu0 0
    %3575 = vmatpush1.bf16.msra.mxu0 %v2246
    %3576 = vmatprep.subr.bf16.mxu0 0
    %3577 = vmatpush1.bf16.msra.mxu0 %v2245
    %3578 = vmatprep.subr.bf16.mxu0 0
    %3579 = vmatpush1.bf16.msra.mxu0 %v2244
    %3580 = vmatprep.subr.bf16.mxu0 0
    %3581 = vmatpush1.bf16.msra.mxu0 %v2243
    %3582 = vmatprep.subr.bf16.mxu0 0
    %3583 = vmatpush1.bf16.msra.mxu0 %v2242
    %3584 = vmatprep.subr.bf16.mxu0 0
    %3585 = vmatpush1.bf16.msra.mxu0 %v2241
    %3586 = vmatprep.subr.bf16.mxu0 0
    %3587 = vmatpush2.bf16.msra.mxu0 %v2256
    %3588 = vmatprep.subr.bf16.mxu0 0
    %3589 = vmatpush2.bf16.msra.mxu0 %v2255
    %3590 = vmatprep.subr.bf16.mxu0 0
    %3591 = vmatpush2.bf16.msra.mxu0 %v2254
    %3592 = vmatprep.subr.bf16.mxu0 0
    %3593 = vmatpush2.bf16.msra.mxu0 %v2253
    %3594 = vmatprep.subr.bf16.mxu0 0
    %3595 = vmatpush2.bf16.msra.mxu0 %v2252
    %3596 = vmatprep.subr.bf16.mxu0 0
    %3597 = vmatpush2.bf16.msra.mxu0 %v2251
    %3598 = vmatprep.subr.bf16.mxu0 0
    %3599 = vmatpush2.bf16.msra.mxu0 %v2250
    %3600 = vmatprep.subr.bf16.mxu0 0
    %3601 = vmatpush2.bf16.msra.mxu0 %v2249
    %3602 = vmatprep.mubr.bf16.mxu0 %v3028
    %3603 = vmatmul.mubr.bf16.gmra.mxu0 %v3027
    %v3604 = vpop.f32.mrf.mxu0
    %v3605 = vadd.f32 %v3316, %v3604
    %v3606 = vpop.f32.mrf.mxu0
    %v3607 = vpop.f32.mrf.mxu0
    %v3608 = vadd.f32 %v3319, %v3607
    %v3609 = vpop.f32.mrf.mxu0
    %3610 = vmatprep.mubr.bf16.mxu0 %v3032
    %3611 = vmatmul.mubr.bf16.gmra.mxu0 %v3031
    %v3612 = vpop.f32.mrf.mxu0
    %v3613 = vadd.f32 %v3324, %v3612
    %v3614 = vpop.f32.mrf.mxu0
    %v3615 = vpop.f32.mrf.mxu0
    %v3616 = vadd.f32 %v3327, %v3615
    %v3617 = vpop.f32.mrf.mxu0
    %3618 = vmatprep.mubr.bf16.mxu0 %v3036
    %3619 = vmatmul.mubr.bf16.gmra.mxu0 %v3035
    %v3620 = vpop.f32.mrf.mxu0
    %v3621 = vadd.f32 %v3332, %v3620
    %v3622 = vpop.f32.mrf.mxu0
    %v3623 = vpop.f32.mrf.mxu0
    %v3624 = vadd.f32 %v3335, %v3623
    %v3625 = vpop.f32.mrf.mxu0
    %3626 = vmatprep.mubr.bf16.mxu0 %v3040
    %3627 = vmatmul.mubr.bf16.gmra.mxu0 %v3039
    %v3628 = vpop.f32.mrf.mxu0
    %v3629 = vadd.f32 %v3340, %v3628
    %v3630 = vpop.f32.mrf.mxu0
    %v3631 = vpop.f32.mrf.mxu0
    %v3632 = vadd.f32 %v3343, %v3631
    %v3633 = vpop.f32.mrf.mxu0
    %3634 = vmatprep.mubr.bf16.mxu0 %v3044
    %3635 = vmatmul.mubr.bf16.gmra.mxu0 %v3043
    %v3636 = vpop.f32.mrf.mxu0
    %v3637 = vadd.f32 %v3348, %v3636
    %v3638 = vpop.f32.mrf.mxu0
    %v3639 = vpop.f32.mrf.mxu0
    %v3640 = vadd.f32 %v3351, %v3639
    %v3641 = vpop.f32.mrf.mxu0
    %3642 = vmatprep.mubr.bf16.mxu0 %v3048
    %3643 = vmatmul.mubr.bf16.gmra.mxu0 %v3047
    %v3644 = vpop.f32.mrf.mxu0
    %v3645 = vadd.f32 %v3356, %v3644
    %v3646 = vpop.f32.mrf.mxu0
    %v3647 = vpop.f32.mrf.mxu0
    %v3648 = vadd.f32 %v3359, %v3647
    %v3649 = vpop.f32.mrf.mxu0
    %3650 = vmatprep.mubr.bf16.mxu0 %v3052
    %3651 = vmatmul.mubr.bf16.gmra.mxu0 %v3051
    %v3652 = vpop.f32.mrf.mxu0
    %v3653 = vadd.f32 %v3364, %v3652
    %v3654 = vpop.f32.mrf.mxu0
    %v3655 = vpop.f32.mrf.mxu0
    %v3656 = vadd.f32 %v3367, %v3655
    %v3657 = vpop.f32.mrf.mxu0
    %3658 = vmatprep.mubr.bf16.mxu0 %v3056
    %3659 = vmatmul.mubr.bf16.gmra.mxu0 %v3055
    %v3660 = vpop.f32.mrf.mxu0
    %v3661 = vadd.f32 %v3372, %v3660
    %v3662 = vpop.f32.mrf.mxu0
    %v3663 = vpop.f32.mrf.mxu0
    %v3664 = vadd.f32 %v3375, %v3663
    %v3665 = vpop.f32.mrf.mxu0
    %3666 = vmatprep.mubr.bf16.mxu0 %v3060
    %3667 = vmatmul.mubr.bf16.gmra.mxu0 %v3059
    %v3668 = vpop.f32.mrf.mxu0
    %v3669 = vadd.f32 %v3380, %v3668
    %v3670 = vpop.f32.mrf.mxu0
    %v3671 = vpop.f32.mrf.mxu0
    %v3672 = vadd.f32 %v3383, %v3671
    %v3673 = vpop.f32.mrf.mxu0
    %3674 = vmatprep.mubr.bf16.mxu0 %v3064
    %3675 = vmatmul.mubr.bf16.gmra.mxu0 %v3063
    %v3676 = vpop.f32.mrf.mxu0
    %v3677 = vadd.f32 %v3388, %v3676
    %v3678 = vpop.f32.mrf.mxu0
    %v3679 = vpop.f32.mrf.mxu0
    %v3680 = vadd.f32 %v3391, %v3679
    %v3681 = vpop.f32.mrf.mxu0
    %3682 = vmatprep.mubr.bf16.mxu0 %v3068
    %3683 = vmatmul.mubr.bf16.gmra.mxu0 %v3067
    %v3684 = vpop.f32.mrf.mxu0
    %v3685 = vadd.f32 %v3396, %v3684
    %v3686 = vpop.f32.mrf.mxu0
    %v3687 = vpop.f32.mrf.mxu0
    %v3688 = vadd.f32 %v3399, %v3687
    %v3689 = vpop.f32.mrf.mxu0
    %3690 = vmatprep.mubr.bf16.mxu0 %v3072
    %3691 = vmatmul.mubr.bf16.gmra.mxu0 %v3071
    %v3692 = vpop.f32.mrf.mxu0
    %v3693 = vadd.f32 %v3404, %v3692
    %v3694 = vpop.f32.mrf.mxu0
    %v3695 = vpop.f32.mrf.mxu0
    %v3696 = vadd.f32 %v3407, %v3695
    %v3697 = vpop.f32.mrf.mxu0
    %3698 = vmatprep.mubr.bf16.mxu0 %v3076
    %3699 = vmatmul.mubr.bf16.gmra.mxu0 %v3075
    %v3700 = vpop.f32.mrf.mxu0
    %v3701 = vadd.f32 %v3412, %v3700
    %v3702 = vpop.f32.mrf.mxu0
    %v3703 = vpop.f32.mrf.mxu0
    %v3704 = vadd.f32 %v3415, %v3703
    %v3705 = vpop.f32.mrf.mxu0
    %3706 = vmatprep.mubr.bf16.mxu0 %v3080
    %3707 = vmatmul.mubr.bf16.gmra.mxu0 %v3079
    %v3708 = vpop.f32.mrf.mxu0
    %v3709 = vadd.f32 %v3420, %v3708
    %v3710 = vpop.f32.mrf.mxu0
    %v3711 = vpop.f32.mrf.mxu0
    %v3712 = vadd.f32 %v3423, %v3711
    %v3713 = vpop.f32.mrf.mxu0
    %3714 = vmatprep.mubr.bf16.mxu0 %v3084
    %3715 = vmatmul.mubr.bf16.gmra.mxu0 %v3083
    %v3716 = vpop.f32.mrf.mxu0
    %v3717 = vadd.f32 %v3428, %v3716
    %v3718 = vpop.f32.mrf.mxu0
    %v3719 = vpop.f32.mrf.mxu0
    %v3720 = vadd.f32 %v3431, %v3719
    %v3721 = vpop.f32.mrf.mxu0
    %3722 = vmatprep.mubr.bf16.mxu0 %v3088
    %3723 = vmatmul.mubr.bf16.gmra.mxu0 %v3087
    %v3724 = vpop.f32.mrf.mxu0
    %v3725 = vadd.f32 %v3436, %v3724
    %v3726 = vpop.f32.mrf.mxu0
    %v3727 = vpop.f32.mrf.mxu0
    %v3728 = vadd.f32 %v3439, %v3727
    %v3729 = vpop.f32.mrf.mxu0
    %3730 = vmatprep.mubr.bf16.mxu0 %v3092
    %3731 = vmatmul.mubr.bf16.gmra.mxu0 %v3091
    %v3732 = vpop.f32.mrf.mxu0
    %v3733 = vadd.f32 %v3444, %v3732
    %v3734 = vpop.f32.mrf.mxu0
    %v3735 = vpop.f32.mrf.mxu0
    %v3736 = vadd.f32 %v3447, %v3735
    %v3737 = vpop.f32.mrf.mxu0
    %3738 = vmatprep.mubr.bf16.mxu0 %v3096
    %3739 = vmatmul.mubr.bf16.gmra.mxu0 %v3095
    %v3740 = vpop.f32.mrf.mxu0
    %v3741 = vadd.f32 %v3452, %v3740
    %v3742 = vpop.f32.mrf.mxu0
    %v3743 = vpop.f32.mrf.mxu0
    %v3744 = vadd.f32 %v3455, %v3743
    %v3745 = vpop.f32.mrf.mxu0
    %3746 = vmatprep.mubr.bf16.mxu0 %v3100
    %3747 = vmatmul.mubr.bf16.gmra.mxu0 %v3099
    %v3748 = vpop.f32.mrf.mxu0
    %v3749 = vadd.f32 %v3460, %v3748
    %v3750 = vpop.f32.mrf.mxu0
    %v3751 = vpop.f32.mrf.mxu0
    %v3752 = vadd.f32 %v3463, %v3751
    %v3753 = vpop.f32.mrf.mxu0
    %3754 = vmatprep.mubr.bf16.mxu0 %v3104
    %3755 = vmatmul.mubr.bf16.gmra.mxu0 %v3103
    %v3756 = vpop.f32.mrf.mxu0
    %v3757 = vadd.f32 %v3468, %v3756
    %v3758 = vpop.f32.mrf.mxu0
    %v3759 = vpop.f32.mrf.mxu0
    %v3760 = vadd.f32 %v3471, %v3759
    %v3761 = vpop.f32.mrf.mxu0
    %3762 = vmatprep.mubr.bf16.mxu0 %v3108
    %3763 = vmatmul.mubr.bf16.gmra.mxu0 %v3107
    %v3764 = vpop.f32.mrf.mxu0
    %v3765 = vadd.f32 %v3476, %v3764
    %v3766 = vpop.f32.mrf.mxu0
    %v3767 = vpop.f32.mrf.mxu0
    %v3768 = vadd.f32 %v3479, %v3767
    %v3769 = vpop.f32.mrf.mxu0
    %3770 = vmatprep.mubr.bf16.mxu0 %v3112
    %3771 = vmatmul.mubr.bf16.gmra.mxu0 %v3111
    %v3772 = vpop.f32.mrf.mxu0
    %v3773 = vadd.f32 %v3484, %v3772
    %v3774 = vpop.f32.mrf.mxu0
    %v3775 = vpop.f32.mrf.mxu0
    %v3776 = vadd.f32 %v3487, %v3775
    %v3777 = vpop.f32.mrf.mxu0
    %3778 = vmatprep.mubr.bf16.mxu0 %v3116
    %3779 = vmatmul.mubr.bf16.gmra.mxu0 %v3115
    %v3780 = vpop.f32.mrf.mxu0
    %v3781 = vadd.f32 %v3492, %v3780
    %v3782 = vpop.f32.mrf.mxu0
    %v3783 = vpop.f32.mrf.mxu0
    %v3784 = vadd.f32 %v3495, %v3783
    %v3785 = vpop.f32.mrf.mxu0
    %3786 = vmatprep.mubr.bf16.mxu0 %v3120
    %3787 = vmatmul.mubr.bf16.gmra.mxu0 %v3119
    %v3788 = vpop.f32.mrf.mxu0
    %v3789 = vadd.f32 %v3500, %v3788
    %v3790 = vpop.f32.mrf.mxu0
    %v3791 = vpop.f32.mrf.mxu0
    %v3792 = vadd.f32 %v3503, %v3791
    %v3793 = vpop.f32.mrf.mxu0
    %3794 = vmatprep.mubr.bf16.mxu0 %v3124
    %3795 = vmatmul.mubr.bf16.gmra.mxu0 %v3123
    %v3796 = vpop.f32.mrf.mxu0
    %v3797 = vadd.f32 %v3508, %v3796
    %v3798 = vpop.f32.mrf.mxu0
    %v3799 = vpop.f32.mrf.mxu0
    %v3800 = vadd.f32 %v3511, %v3799
    %v3801 = vpop.f32.mrf.mxu0
    %3802 = vmatprep.mubr.bf16.mxu0 %v3128
    %3803 = vmatmul.mubr.bf16.gmra.mxu0 %v3127
    %v3804 = vpop.f32.mrf.mxu0
    %v3805 = vadd.f32 %v3516, %v3804
    %v3806 = vpop.f32.mrf.mxu0
    %v3807 = vpop.f32.mrf.mxu0
    %v3808 = vadd.f32 %v3519, %v3807
    %v3809 = vpop.f32.mrf.mxu0
    %3810 = vmatprep.mubr.bf16.mxu0 %v3132
    %3811 = vmatmul.mubr.bf16.gmra.mxu0 %v3131
    %v3812 = vpop.f32.mrf.mxu0
    %v3813 = vadd.f32 %v3524, %v3812
    %v3814 = vpop.f32.mrf.mxu0
    %v3815 = vpop.f32.mrf.mxu0
    %v3816 = vadd.f32 %v3527, %v3815
    %v3817 = vpop.f32.mrf.mxu0
    %3818 = vmatprep.mubr.bf16.mxu0 %v3136
    %3819 = vmatmul.mubr.bf16.gmra.mxu0 %v3135
    %v3820 = vpop.f32.mrf.mxu0
    %v3821 = vadd.f32 %v3532, %v3820
    %v3822 = vpop.f32.mrf.mxu0
    %v3823 = vpop.f32.mrf.mxu0
    %v3824 = vadd.f32 %v3535, %v3823
    %v3825 = vpop.f32.mrf.mxu0
    %3826 = vmatprep.mubr.bf16.mxu0 %v3140
    %3827 = vmatmul.mubr.bf16.gmra.mxu0 %v3139
    %v3828 = vpop.f32.mrf.mxu0
    %v3829 = vadd.f32 %v3540, %v3828
    %v3830 = vpop.f32.mrf.mxu0
    %v3831 = vpop.f32.mrf.mxu0
    %v3832 = vadd.f32 %v3543, %v3831
    %v3833 = vpop.f32.mrf.mxu0
    %3834 = vmatprep.mubr.bf16.mxu0 %v3144
    %3835 = vmatmul.mubr.bf16.gmra.mxu0 %v3143
    %v3836 = vpop.f32.mrf.mxu0
    %v3837 = vadd.f32 %v3548, %v3836
    %v3838 = vpop.f32.mrf.mxu0
    %v3839 = vpop.f32.mrf.mxu0
    %v3840 = vadd.f32 %v3551, %v3839
    %v3841 = vpop.f32.mrf.mxu0
    %3842 = vmatprep.mubr.bf16.mxu0 %v3148
    %3843 = vmatmul.mubr.bf16.gmra.mxu0 %v3147
    %v3844 = vpop.f32.mrf.mxu0
    %v3845 = vadd.f32 %v3556, %v3844
    %v3846 = vpop.f32.mrf.mxu0
    %v3847 = vpop.f32.mrf.mxu0
    %v3848 = vadd.f32 %v3559, %v3847
    %v3849 = vpop.f32.mrf.mxu0
    %3850 = vmatprep.mubr.bf16.mxu0 %v3152
    %3851 = vmatmul.mubr.bf16.gmra.mxu0 %v3151
    %v3852 = vpop.f32.mrf.mxu0
    %v3853 = vadd.f32 %v3564, %v3852
    %v3854 = vpop.f32.mrf.mxu0
    %v3855 = vpop.f32.mrf.mxu0
    %v3856 = vadd.f32 %v3567, %v3855
    %v3857 = vpop.f32.mrf.mxu0
    %3858 = vdwg.mxu0
    %v3859 = vmax.f32 %v3605, 0.0
    %v3860 = vmax.f32 %v3608, 0.0
    %v3861 = vmax.f32 %v3613, 0.0
    %v3862 = vmax.f32 %v3616, 0.0
    %v3863 = vmax.f32 %v3621, 0.0
    %v3864 = vmax.f32 %v3624, 0.0
    %v3865 = vmax.f32 %v3629, 0.0
    %v3866 = vmax.f32 %v3632, 0.0
    %v3867 = vmax.f32 %v3637, 0.0
    %v3868 = vmax.f32 %v3640, 0.0
    %v3869 = vmax.f32 %v3645, 0.0
    %v3870 = vmax.f32 %v3648, 0.0
    %v3871 = vmax.f32 %v3653, 0.0
    %v3872 = vmax.f32 %v3656, 0.0
    %v3873 = vmax.f32 %v3661, 0.0
    %v3874 = vmax.f32 %v3664, 0.0
    %v3875 = vmax.f32 %v3669, 0.0
    %v3876 = vmax.f32 %v3672, 0.0
    %v3877 = vmax.f32 %v3677, 0.0
    %v3878 = vmax.f32 %v3680, 0.0
    %v3879 = vmax.f32 %v3685, 0.0
    %v3880 = vmax.f32 %v3688, 0.0
    %v3881 = vmax.f32 %v3693, 0.0
    %v3882 = vmax.f32 %v3696, 0.0
    %v3883 = vmax.f32 %v3701, 0.0
    %v3884 = vmax.f32 %v3704, 0.0
    %v3885 = vmax.f32 %v3709, 0.0
    %v3886 = vmax.f32 %v3712, 0.0
    %v3887 = vmax.f32 %v3717, 0.0
    %v3888 = vmax.f32 %v3720, 0.0
    %v3889 = vmax.f32 %v3725, 0.0
    %v3890 = vmax.f32 %v3728, 0.0
    %v3891 = vmax.f32 %v3733, 0.0
    %v3892 = vmax.f32 %v3736, 0.0
    %v3893 = vmax.f32 %v3741, 0.0
    %v3894 = vmax.f32 %v3744, 0.0
    %v3895 = vmax.f32 %v3749, 0.0
    %v3896 = vmax.f32 %v3752, 0.0
    %v3897 = vmax.f32 %v3757, 0.0
    %v3898 = vmax.f32 %v3760, 0.0
    %v3899 = vmax.f32 %v3765, 0.0
    %v3900 = vmax.f32 %v3768, 0.0
    %v3901 = vmax.f32 %v3773, 0.0
    %v3902 = vmax.f32 %v3776, 0.0
    %v3903 = vmax.f32 %v3781, 0.0
    %v3904 = vmax.f32 %v3784, 0.0
    %v3905 = vmax.f32 %v3789, 0.0
    %v3906 = vmax.f32 %v3792, 0.0
    %v3907 = vmax.f32 %v3797, 0.0
    %v3908 = vmax.f32 %v3800, 0.0
    %v3909 = vmax.f32 %v3805, 0.0
    %v3910 = vmax.f32 %v3808, 0.0
    %v3911 = vmax.f32 %v3813, 0.0
    %v3912 = vmax.f32 %v3816, 0.0
    %v3913 = vmax.f32 %v3821, 0.0
    %v3914 = vmax.f32 %v3824, 0.0
    %v3915 = vmax.f32 %v3829, 0.0
    %v3916 = vmax.f32 %v3832, 0.0
    %v3917 = vmax.f32 %v3837, 0.0
    %v3918 = vmax.f32 %v3840, 0.0
    %v3919 = vmax.f32 %v3845, 0.0
    %v3920 = vmax.f32 %v3848, 0.0
    %v3921 = vmax.f32 %v3853, 0.0
    %v3922 = vmax.f32 %v3856, 0.0
    %v3923 = vld [vmem:[%s6] sm:$0xff]
    %v3924 = vld [vmem:[%s6 + $0x8] sm:$0xff]
    %v3925 = vld [vmem:[%s6 + $0x10] sm:$0xff]
    %v3926 = vld [vmem:[%s6 + $0x18] sm:$0xff]
    %v3927 = vld [vmem:[%s6 + $0x20] sm:$0xff]
    %v3928 = vld [vmem:[%s6 + $0x28] sm:$0xff]
    %v3929 = vld [vmem:[%s6 + $0x30] sm:$0xff]
    %v3930 = vld [vmem:[%s6 + $0x38] sm:$0xff]
    %v3931 = vld [vmem:[%s6 + $0x40] sm:$0xff]
    %v3932 = vld [vmem:[%s6 + $0x48] sm:$0xff]
    %v3933 = vld [vmem:[%s6 + $0x50] sm:$0xff]
    %v3934 = vld [vmem:[%s6 + $0x58] sm:$0xff]
    %v3935 = vld [vmem:[%s6 + $0x60] sm:$0xff]
    %v3936 = vld [vmem:[%s6 + $0x68] sm:$0xff]
    %v3937 = vld [vmem:[%s6 + $0x70] sm:$0xff]
    %v3938 = vld [vmem:[%s6 + $0x78] sm:$0xff]
    %v3939 = vld [vmem:[%s6 + $0x80] sm:$0xff]
    %v3940 = vld [vmem:[%s6 + $0x88] sm:$0xff]
    %v3941 = vld [vmem:[%s6 + $0x90] sm:$0xff]
    %v3942 = vld [vmem:[%s6 + $0x98] sm:$0xff]
    %v3943 = vld [vmem:[%s6 + $0xa0] sm:$0xff]
    %v3944 = vld [vmem:[%s6 + $0xa8] sm:$0xff]
    %v3945 = vld [vmem:[%s6 + $0xb0] sm:$0xff]
    %v3946 = vld [vmem:[%s6 + $0xb8] sm:$0xff]
    %v3947 = vld [vmem:[%s6 + $0xc0] sm:$0xff]
    %v3948 = vld [vmem:[%s6 + $0xc8] sm:$0xff]
    %v3949 = vld [vmem:[%s6 + $0xd0] sm:$0xff]
    %v3950 = vld [vmem:[%s6 + $0xd8] sm:$0xff]
    %v3951 = vld [vmem:[%s6 + $0xe0] sm:$0xff]
    %v3952 = vld [vmem:[%s6 + $0xe8] sm:$0xff]
    %v3953 = vld [vmem:[%s6 + $0xf0] sm:$0xff]
    %v3954 = vld [vmem:[%s6 + $0xf8] sm:$0xff]
    %v3955 = vld [vmem:[%s6 + $0x100] sm:$0xff]
    %v3956 = vld [vmem:[%s6 + $0x108] sm:$0xff]
    %v3957 = vld [vmem:[%s6 + $0x110] sm:$0xff]
    %v3958 = vld [vmem:[%s6 + $0x118] sm:$0xff]
    %v3959 = vld [vmem:[%s6 + $0x120] sm:$0xff]
    %v3960 = vld [vmem:[%s6 + $0x128] sm:$0xff]
    %v3961 = vld [vmem:[%s6 + $0x130] sm:$0xff]
    %v3962 = vld [vmem:[%s6 + $0x138] sm:$0xff]
    %v3963 = vld [vmem:[%s6 + $0x140] sm:$0xff]
    %v3964 = vld [vmem:[%s6 + $0x148] sm:$0xff]
    %v3965 = vld [vmem:[%s6 + $0x150] sm:$0xff]
    %v3966 = vld [vmem:[%s6 + $0x158] sm:$0xff]
    %v3967 = vld [vmem:[%s6 + $0x160] sm:$0xff]
    %v3968 = vld [vmem:[%s6 + $0x168] sm:$0xff]
    %v3969 = vld [vmem:[%s6 + $0x170] sm:$0xff]
    %v3970 = vld [vmem:[%s6 + $0x178] sm:$0xff]
    %v3971 = vld [vmem:[%s6 + $0x180] sm:$0xff]
    %v3972 = vld [vmem:[%s6 + $0x188] sm:$0xff]
    %v3973 = vld [vmem:[%s6 + $0x190] sm:$0xff]
    %v3974 = vld [vmem:[%s6 + $0x198] sm:$0xff]
    %v3975 = vld [vmem:[%s6 + $0x1a0] sm:$0xff]
    %v3976 = vld [vmem:[%s6 + $0x1a8] sm:$0xff]
    %v3977 = vld [vmem:[%s6 + $0x1b0] sm:$0xff]
    %v3978 = vld [vmem:[%s6 + $0x1b8] sm:$0xff]
    %v3979 = vld [vmem:[%s6 + $0x1c0] sm:$0xff]
    %v3980 = vld [vmem:[%s6 + $0x1c8] sm:$0xff]
    %v3981 = vld [vmem:[%s6 + $0x1d0] sm:$0xff]
    %v3982 = vld [vmem:[%s6 + $0x1d8] sm:$0xff]
    %v3983 = vld [vmem:[%s6 + $0x1e0] sm:$0xff]
    %v3984 = vld [vmem:[%s6 + $0x1e8] sm:$0xff]
    %v3985 = vld [vmem:[%s6 + $0x1f0] sm:$0xff]
    %v3986 = vld [vmem:[%s6 + $0x1f8] sm:$0xff]
    %v3987 = vpack.c.bf16 %v3860, %v3859
    %v3988 = vpack.c.bf16 %v3862, %v3861
    %v3989 = vpack.c.bf16 %v3864, %v3863
    %v3990 = vpack.c.bf16 %v3866, %v3865
    %v3991 = vpack.c.bf16 %v3868, %v3867
    %v3992 = vpack.c.bf16 %v3870, %v3869
    %v3993 = vpack.c.bf16 %v3872, %v3871
    %v3994 = vpack.c.bf16 %v3874, %v3873
    %v3995 = vpack.c.bf16 %v3876, %v3875
    %v3996 = vpack.c.bf16 %v3878, %v3877
    %v3997 = vpack.c.bf16 %v3880, %v3879
    %v3998 = vpack.c.bf16 %v3882, %v3881
    %v3999 = vpack.c.bf16 %v3884, %v3883
    %v4000 = vpack.c.bf16 %v3886, %v3885
    %v4001 = vpack.c.bf16 %v3888, %v3887
    %v4002 = vpack.c.bf16 %v3890, %v3889
    %v4003 = vpack.c.bf16 %v3892, %v3891
    %v4004 = vpack.c.bf16 %v3894, %v3893
    %v4005 = vpack.c.bf16 %v3896, %v3895
    %v4006 = vpack.c.bf16 %v3898, %v3897
    %v4007 = vpack.c.bf16 %v3900, %v3899
    %v4008 = vpack.c.bf16 %v3902, %v3901
    %v4009 = vpack.c.bf16 %v3904, %v3903
    %v4010 = vpack.c.bf16 %v3906, %v3905
    %v4011 = vpack.c.bf16 %v3908, %v3907
    %v4012 = vpack.c.bf16 %v3910, %v3909
    %v4013 = vpack.c.bf16 %v3912, %v3911
    %v4014 = vpack.c.bf16 %v3914, %v3913
    %v4015 = vpack.c.bf16 %v3916, %v3915
    %v4016 = vpack.c.bf16 %v3918, %v3917
    %v4017 = vpack.c.bf16 %v3920, %v3919
    %v4018 = vpack.c.bf16 %v3922, %v3921
    %v4019 = vld [vmem:[%s7] sm:$0xff]
    %v4020 = vld [vmem:[%s7 + $0x8] sm:$0xff]
    %v4021 = vld [vmem:[%s7 + $0x10] sm:$0xff]
    %v4022 = vld [vmem:[%s7 + $0x18] sm:$0xff]
    %v4023 = vld [vmem:[%s7 + $0x20] sm:$0xff]
    %v4024 = vld [vmem:[%s7 + $0x28] sm:$0xff]
    %v4025 = vld [vmem:[%s7 + $0x30] sm:$0xff]
    %v4026 = vld [vmem:[%s7 + $0x38] sm:$0xff]
    %v4027 = vld [vmem:[%s7 + $0x40] sm:$0xff]
    %v4028 = vld [vmem:[%s7 + $0x48] sm:$0xff]
    %v4029 = vld [vmem:[%s7 + $0x50] sm:$0xff]
    %v4030 = vld [vmem:[%s7 + $0x58] sm:$0xff]
    %v4031 = vld [vmem:[%s7 + $0x60] sm:$0xff]
    %v4032 = vld [vmem:[%s7 + $0x68] sm:$0xff]
    %v4033 = vld [vmem:[%s7 + $0x70] sm:$0xff]
    %v4034 = vld [vmem:[%s7 + $0x78] sm:$0xff]
    %v4035 = vld [vmem:[%s7 + $0x80] sm:$0xff]
    %v4036 = vld [vmem:[%s7 + $0x88] sm:$0xff]
    %v4037 = vld [vmem:[%s7 + $0x90] sm:$0xff]
    %v4038 = vld [vmem:[%s7 + $0x98] sm:$0xff]
    %v4039 = vld [vmem:[%s7 + $0xa0] sm:$0xff]
    %v4040 = vld [vmem:[%s7 + $0xa8] sm:$0xff]
    %v4041 = vld [vmem:[%s7 + $0xb0] sm:$0xff]
    %v4042 = vld [vmem:[%s7 + $0xb8] sm:$0xff]
    %v4043 = vld [vmem:[%s7 + $0xc0] sm:$0xff]
    %v4044 = vld [vmem:[%s7 + $0xc8] sm:$0xff]
    %v4045 = vld [vmem:[%s7 + $0xd0] sm:$0xff]
    %v4046 = vld [vmem:[%s7 + $0xd8] sm:$0xff]
    %v4047 = vld [vmem:[%s7 + $0xe0] sm:$0xff]
    %v4048 = vld [vmem:[%s7 + $0xe8] sm:$0xff]
    %v4049 = vld [vmem:[%s7 + $0xf0] sm:$0xff]
    %v4050 = vld [vmem:[%s7 + $0xf8] sm:$0xff]
    %4052 = vset.pattern.permute.xlu0 0
    %4053 = vperm.xlu0 %4052, %v4019
    %v4054 = vpop.permute.xlu0 %4053
    %4057 = vset.pattern.permute.xlu0 0
    %4058 = vperm.xlu0 %4057, %v4020
    %v4059 = vpop.permute.xlu0 %4058
    %4062 = vset.pattern.permute.xlu0 0
    %4063 = vperm.xlu0 %4062, %v4021
    %v4064 = vpop.permute.xlu0 %4063
    %4067 = vset.pattern.permute.xlu0 0
    %4068 = vperm.xlu0 %4067, %v4022
    %v4069 = vpop.permute.xlu0 %4068
    %4072 = vset.pattern.permute.xlu0 0
    %4073 = vperm.xlu0 %4072, %v4023
    %v4074 = vpop.permute.xlu0 %4073
    %4077 = vset.pattern.permute.xlu0 0
    %4078 = vperm.xlu0 %4077, %v4024
    %v4079 = vpop.permute.xlu0 %4078
    %4082 = vset.pattern.permute.xlu0 0
    %4083 = vperm.xlu0 %4082, %v4025
    %v4084 = vpop.permute.xlu0 %4083
    %4087 = vset.pattern.permute.xlu0 0
    %4088 = vperm.xlu0 %4087, %v4026
    %v4089 = vpop.permute.xlu0 %4088
    %4092 = vset.pattern.permute.xlu0 0
    %4093 = vperm.xlu0 %4092, %v4027
    %v4094 = vpop.permute.xlu0 %4093
    %4097 = vset.pattern.permute.xlu0 0
    %4098 = vperm.xlu0 %4097, %v4028
    %v4099 = vpop.permute.xlu0 %4098
    %4102 = vset.pattern.permute.xlu0 0
    %4103 = vperm.xlu0 %4102, %v4029
    %v4104 = vpop.permute.xlu0 %4103
    %4107 = vset.pattern.permute.xlu0 0
    %4108 = vperm.xlu0 %4107, %v4030
    %v4109 = vpop.permute.xlu0 %4108
    %4112 = vset.pattern.permute.xlu0 0
    %4113 = vperm.xlu0 %4112, %v4031
    %v4114 = vpop.permute.xlu0 %4113
    %4117 = vset.pattern.permute.xlu0 0
    %4118 = vperm.xlu0 %4117, %v4032
    %v4119 = vpop.permute.xlu0 %4118
    %4122 = vset.pattern.permute.xlu0 0
    %4123 = vperm.xlu0 %4122, %v4033
    %v4124 = vpop.permute.xlu0 %4123
    %4127 = vset.pattern.permute.xlu0 0
    %4128 = vperm.xlu0 %4127, %v4034
    %v4129 = vpop.permute.xlu0 %4128
    %4132 = vset.pattern.permute.xlu0 0
    %4133 = vperm.xlu0 %4132, %v4035
    %v4134 = vpop.permute.xlu0 %4133
    %4137 = vset.pattern.permute.xlu0 0
    %4138 = vperm.xlu0 %4137, %v4036
    %v4139 = vpop.permute.xlu0 %4138
    %4142 = vset.pattern.permute.xlu0 0
    %4143 = vperm.xlu0 %4142, %v4037
    %v4144 = vpop.permute.xlu0 %4143
    %4147 = vset.pattern.permute.xlu0 0
    %4148 = vperm.xlu0 %4147, %v4038
    %v4149 = vpop.permute.xlu0 %4148
    %4152 = vset.pattern.permute.xlu0 0
    %4153 = vperm.xlu0 %4152, %v4039
    %v4154 = vpop.permute.xlu0 %4153
    %4157 = vset.pattern.permute.xlu0 0
    %4158 = vperm.xlu0 %4157, %v4040
    %v4159 = vpop.permute.xlu0 %4158
    %4162 = vset.pattern.permute.xlu0 0
    %4163 = vperm.xlu0 %4162, %v4041
    %v4164 = vpop.permute.xlu0 %4163
    %4167 = vset.pattern.permute.xlu0 0
    %4168 = vperm.xlu0 %4167, %v4042
    %v4169 = vpop.permute.xlu0 %4168
    %4172 = vset.pattern.permute.xlu0 0
    %4173 = vperm.xlu0 %4172, %v4043
    %v4174 = vpop.permute.xlu0 %4173
    %4177 = vset.pattern.permute.xlu0 0
    %4178 = vperm.xlu0 %4177, %v4044
    %v4179 = vpop.permute.xlu0 %4178
    %4182 = vset.pattern.permute.xlu0 0
    %4183 = vperm.xlu0 %4182, %v4045
    %v4184 = vpop.permute.xlu0 %4183
    %4187 = vset.pattern.permute.xlu0 0
    %4188 = vperm.xlu0 %4187, %v4046
    %v4189 = vpop.permute.xlu0 %4188
    %4192 = vset.pattern.permute.xlu0 0
    %4193 = vperm.xlu0 %4192, %v4047
    %v4194 = vpop.permute.xlu0 %4193
    %4197 = vset.pattern.permute.xlu0 0
    %4198 = vperm.xlu0 %4197, %v4048
    %v4199 = vpop.permute.xlu0 %4198
    %4202 = vset.pattern.permute.xlu0 0
    %4203 = vperm.xlu0 %4202, %v4049
    %v4204 = vpop.permute.xlu0 %4203
    %4207 = vset.pattern.permute.xlu0 0
    %4208 = vperm.xlu0 %4207, %v4050
    %v4209 = vpop.permute.xlu0 %4208
    %v4275 = vunpack.c.l.b16 %v3923
    %v4276 = vunpack.c.h.b16 %v3923
    %v4277 = vunpack.c.l.b16 %v3924
    %v4278 = vunpack.c.h.b16 %v3924
    %v4279 = vunpack.c.l.b16 %v3925
    %v4280 = vunpack.c.h.b16 %v3925
    %v4281 = vunpack.c.l.b16 %v3926
    %v4282 = vunpack.c.h.b16 %v3926
    %v4283 = vunpack.c.l.b16 %v3927
    %v4284 = vunpack.c.h.b16 %v3927
    %v4285 = vunpack.c.l.b16 %v3928
    %v4286 = vunpack.c.h.b16 %v3928
    %v4287 = vunpack.c.l.b16 %v3929
    %v4288 = vunpack.c.h.b16 %v3929
    %v4289 = vunpack.c.l.b16 %v3930
    %v4290 = vunpack.c.h.b16 %v3930
    %v4291 = vunpack.c.l.b16 %v3931
    %v4292 = vunpack.c.h.b16 %v3931
    %v4293 = vunpack.c.l.b16 %v3932
    %v4294 = vunpack.c.h.b16 %v3932
    %v4295 = vunpack.c.l.b16 %v3933
    %v4296 = vunpack.c.h.b16 %v3933
    %v4297 = vunpack.c.l.b16 %v3934
    %v4298 = vunpack.c.h.b16 %v3934
    %v4299 = vunpack.c.l.b16 %v3935
    %v4300 = vunpack.c.h.b16 %v3935
    %v4301 = vunpack.c.l.b16 %v3936
    %v4302 = vunpack.c.h.b16 %v3936
    %v4303 = vunpack.c.l.b16 %v3937
    %v4304 = vunpack.c.h.b16 %v3937
    %v4305 = vunpack.c.l.b16 %v3938
    %v4306 = vunpack.c.h.b16 %v3938
    %v4307 = vunpack.c.l.b16 %v3939
    %v4308 = vunpack.c.h.b16 %v3939
    %v4309 = vunpack.c.l.b16 %v3940
    %v4310 = vunpack.c.h.b16 %v3940
    %v4311 = vunpack.c.l.b16 %v3941
    %v4312 = vunpack.c.h.b16 %v3941
    %v4313 = vunpack.c.l.b16 %v3942
    %v4314 = vunpack.c.h.b16 %v3942
    %v4315 = vunpack.c.l.b16 %v3943
    %v4316 = vunpack.c.h.b16 %v3943
    %v4317 = vunpack.c.l.b16 %v3944
    %v4318 = vunpack.c.h.b16 %v3944
    %v4319 = vunpack.c.l.b16 %v3945
    %v4320 = vunpack.c.h.b16 %v3945
    %v4321 = vunpack.c.l.b16 %v3946
    %v4322 = vunpack.c.h.b16 %v3946
    %v4323 = vunpack.c.l.b16 %v3947
    %v4324 = vunpack.c.h.b16 %v3947
    %v4325 = vunpack.c.l.b16 %v3948
    %v4326 = vunpack.c.h.b16 %v3948
    %v4327 = vunpack.c.l.b16 %v3949
    %v4328 = vunpack.c.h.b16 %v3949
    %v4329 = vunpack.c.l.b16 %v3950
    %v4330 = vunpack.c.h.b16 %v3950
    %v4331 = vunpack.c.l.b16 %v3951
    %v4332 = vunpack.c.h.b16 %v3951
    %v4333 = vunpack.c.l.b16 %v3952
    %v4334 = vunpack.c.h.b16 %v3952
    %v4335 = vunpack.c.l.b16 %v3953
    %v4336 = vunpack.c.h.b16 %v3953
    %v4337 = vunpack.c.l.b16 %v3954
    %v4338 = vunpack.c.h.b16 %v3954
    %v4339 = vunpack.c.l.b16 %v3955
    %v4340 = vunpack.c.h.b16 %v3955
    %v4341 = vunpack.c.l.b16 %v3956
    %v4342 = vunpack.c.h.b16 %v3956
    %v4343 = vunpack.c.l.b16 %v3957
    %v4344 = vunpack.c.h.b16 %v3957
    %v4345 = vunpack.c.l.b16 %v3958
    %v4346 = vunpack.c.h.b16 %v3958
    %v4347 = vunpack.c.l.b16 %v3959
    %v4348 = vunpack.c.h.b16 %v3959
    %v4349 = vunpack.c.l.b16 %v3960
    %v4350 = vunpack.c.h.b16 %v3960
    %v4351 = vunpack.c.l.b16 %v3961
    %v4352 = vunpack.c.h.b16 %v3961
    %v4353 = vunpack.c.l.b16 %v3962
    %v4354 = vunpack.c.h.b16 %v3962
    %v4355 = vunpack.c.l.b16 %v3963
    %v4356 = vunpack.c.h.b16 %v3963
    %v4357 = vunpack.c.l.b16 %v3964
    %v4358 = vunpack.c.h.b16 %v3964
    %v4359 = vunpack.c.l.b16 %v3965
    %v4360 = vunpack.c.h.b16 %v3965
    %v4361 = vunpack.c.l.b16 %v3966
    %v4362 = vunpack.c.h.b16 %v3966
    %v4363 = vunpack.c.l.b16 %v3967
    %v4364 = vunpack.c.h.b16 %v3967
    %v4365 = vunpack.c.l.b16 %v3968
    %v4366 = vunpack.c.h.b16 %v3968
    %v4367 = vunpack.c.l.b16 %v3969
    %v4368 = vunpack.c.h.b16 %v3969
    %v4369 = vunpack.c.l.b16 %v3970
    %v4370 = vunpack.c.h.b16 %v3970
    %v4371 = vunpack.c.l.b16 %v3971
    %v4372 = vunpack.c.h.b16 %v3971
    %v4373 = vunpack.c.l.b16 %v3972
    %v4374 = vunpack.c.h.b16 %v3972
    %v4375 = vunpack.c.l.b16 %v3973
    %v4376 = vunpack.c.h.b16 %v3973
    %v4377 = vunpack.c.l.b16 %v3974
    %v4378 = vunpack.c.h.b16 %v3974
    %v4379 = vunpack.c.l.b16 %v3975
    %v4380 = vunpack.c.h.b16 %v3975
    %v4381 = vunpack.c.l.b16 %v3976
    %v4382 = vunpack.c.h.b16 %v3976
    %v4383 = vunpack.c.l.b16 %v3977
    %v4384 = vunpack.c.h.b16 %v3977
    %v4385 = vunpack.c.l.b16 %v3978
    %v4386 = vunpack.c.h.b16 %v3978
    %v4387 = vunpack.c.l.b16 %v3979
    %v4388 = vunpack.c.h.b16 %v3979
    %v4389 = vunpack.c.l.b16 %v3980
    %v4390 = vunpack.c.h.b16 %v3980
    %v4391 = vunpack.c.l.b16 %v3981
    %v4392 = vunpack.c.h.b16 %v3981
    %v4393 = vunpack.c.l.b16 %v3982
    %v4394 = vunpack.c.h.b16 %v3982
    %v4395 = vunpack.c.l.b16 %v3983
    %v4396 = vunpack.c.h.b16 %v3983
    %v4397 = vunpack.c.l.b16 %v3984
    %v4398 = vunpack.c.h.b16 %v3984
    %v4399 = vunpack.c.l.b16 %v3985
    %v4400 = vunpack.c.h.b16 %v3985
    %v4401 = vunpack.c.l.b16 %v3986
    %v4402 = vunpack.c.h.b16 %v3986
    %v4403 = vpack.c.b16 %v4279, %v4275
    %v4404 = vpack.c.b16 %v4280, %v4276
    %v4405 = vpack.c.b16 %v4281, %v4277
    %v4406 = vpack.c.b16 %v4282, %v4278
    %v4407 = vpack.c.b16 %v4287, %v4283
    %v4408 = vpack.c.b16 %v4288, %v4284
    %v4409 = vpack.c.b16 %v4289, %v4285
    %v4410 = vpack.c.b16 %v4290, %v4286
    %v4411 = vpack.c.b16 %v4295, %v4291
    %v4412 = vpack.c.b16 %v4296, %v4292
    %v4413 = vpack.c.b16 %v4297, %v4293
    %v4414 = vpack.c.b16 %v4298, %v4294
    %v4415 = vpack.c.b16 %v4303, %v4299
    %v4416 = vpack.c.b16 %v4304, %v4300
    %v4417 = vpack.c.b16 %v4305, %v4301
    %v4418 = vpack.c.b16 %v4306, %v4302
    %v4419 = vpack.c.b16 %v4311, %v4307
    %v4420 = vpack.c.b16 %v4312, %v4308
    %v4421 = vpack.c.b16 %v4313, %v4309
    %v4422 = vpack.c.b16 %v4314, %v4310
    %v4423 = vpack.c.b16 %v4319, %v4315
    %v4424 = vpack.c.b16 %v4320, %v4316
    %v4425 = vpack.c.b16 %v4321, %v4317
    %v4426 = vpack.c.b16 %v4322, %v4318
    %v4427 = vpack.c.b16 %v4327, %v4323
    %v4428 = vpack.c.b16 %v4328, %v4324
    %v4429 = vpack.c.b16 %v4329, %v4325
    %v4430 = vpack.c.b16 %v4330, %v4326
    %v4431 = vpack.c.b16 %v4335, %v4331
    %v4432 = vpack.c.b16 %v4336, %v4332
    %v4433 = vpack.c.b16 %v4337, %v4333
    %v4434 = vpack.c.b16 %v4338, %v4334
    %v4435 = vpack.c.b16 %v4343, %v4339
    %v4436 = vpack.c.b16 %v4344, %v4340
    %v4437 = vpack.c.b16 %v4345, %v4341
    %v4438 = vpack.c.b16 %v4346, %v4342
    %v4439 = vpack.c.b16 %v4351, %v4347
    %v4440 = vpack.c.b16 %v4352, %v4348
    %v4441 = vpack.c.b16 %v4353, %v4349
    %v4442 = vpack.c.b16 %v4354, %v4350
    %v4443 = vpack.c.b16 %v4359, %v4355
    %v4444 = vpack.c.b16 %v4360, %v4356
    %v4445 = vpack.c.b16 %v4361, %v4357
    %v4446 = vpack.c.b16 %v4362, %v4358
    %v4447 = vpack.c.b16 %v4367, %v4363
    %v4448 = vpack.c.b16 %v4368, %v4364
    %v4449 = vpack.c.b16 %v4369, %v4365
    %v4450 = vpack.c.b16 %v4370, %v4366
    %v4451 = vpack.c.b16 %v4375, %v4371
    %v4452 = vpack.c.b16 %v4376, %v4372
    %v4453 = vpack.c.b16 %v4377, %v4373
    %v4454 = vpack.c.b16 %v4378, %v4374
    %v4455 = vpack.c.b16 %v4383, %v4379
    %v4456 = vpack.c.b16 %v4384, %v4380
    %v4457 = vpack.c.b16 %v4385, %v4381
    %v4458 = vpack.c.b16 %v4386, %v4382
    %v4459 = vpack.c.b16 %v4391, %v4387
    %v4460 = vpack.c.b16 %v4392, %v4388
    %v4461 = vpack.c.b16 %v4393, %v4389
    %v4462 = vpack.c.b16 %v4394, %v4390
    %v4463 = vpack.c.b16 %v4399, %v4395
    %v4464 = vpack.c.b16 %v4400, %v4396
    %v4465 = vpack.c.b16 %v4401, %v4397
    %v4466 = vpack.c.b16 %v4402, %v4398
    %4531 = vmatprep.subr.bf16.mxu0 0
    %4532 = vmatpush1.bf16.msra.mxu0 %v3994
    %4533 = vmatprep.subr.bf16.mxu0 0
    %4534 = vmatpush1.bf16.msra.mxu0 %v3993
    %4535 = vmatprep.subr.bf16.mxu0 0
    %4536 = vmatpush1.bf16.msra.mxu0 %v3992
    %4537 = vmatprep.subr.bf16.mxu0 0
    %4538 = vmatpush1.bf16.msra.mxu0 %v3991
    %4539 = vmatprep.subr.bf16.mxu0 0
    %4540 = vmatpush1.bf16.msra.mxu0 %v3990
    %4541 = vmatprep.subr.bf16.mxu0 0
    %4542 = vmatpush1.bf16.msra.mxu0 %v3989
    %4543 = vmatprep.subr.bf16.mxu0 0
    %4544 = vmatpush1.bf16.msra.mxu0 %v3988
    %4545 = vmatprep.subr.bf16.mxu0 0
    %4546 = vmatpush1.bf16.msra.mxu0 %v3987
    %4547 = vmatprep.subr.bf16.mxu0 0
    %4548 = vmatpush2.bf16.msra.mxu0 %v4002
    %4549 = vmatprep.subr.bf16.mxu0 0
    %4550 = vmatpush2.bf16.msra.mxu0 %v4001
    %4551 = vmatprep.subr.bf16.mxu0 0
    %4552 = vmatpush2.bf16.msra.mxu0 %v4000
    %4553 = vmatprep.subr.bf16.mxu0 0
    %4554 = vmatpush2.bf16.msra.mxu0 %v3999
    %4555 = vmatprep.subr.bf16.mxu0 0
    %4556 = vmatpush2.bf16.msra.mxu0 %v3998
    %4557 = vmatprep.subr.bf16.mxu0 0
    %4558 = vmatpush2.bf16.msra.mxu0 %v3997
    %4559 = vmatprep.subr.bf16.mxu0 0
    %4560 = vmatpush2.bf16.msra.mxu0 %v3996
    %4561 = vmatprep.subr.bf16.mxu0 0
    %4562 = vmatpush2.bf16.msra.mxu0 %v3995
    %4563 = vmatprep.mubr.bf16.mxu0 %v4404
    %4564 = vmatmul.mubr.bf16.gmra.mxu0 %v4403
    %v4565 = vpop.f32.mrf.mxu0
    %v4566 = vadd.f32 %v4054, %v4565
    %v4567 = vpop.f32.mrf.mxu0
    %v4568 = vpop.f32.mrf.mxu0
    %v4569 = vadd.f32 %v4059, %v4568
    %v4570 = vpop.f32.mrf.mxu0
    %4571 = vmatprep.mubr.bf16.mxu0 %v4408
    %4572 = vmatmul.mubr.bf16.gmra.mxu0 %v4407
    %v4573 = vpop.f32.mrf.mxu0
    %v4574 = vadd.f32 %v4064, %v4573
    %v4575 = vpop.f32.mrf.mxu0
    %v4576 = vpop.f32.mrf.mxu0
    %v4577 = vadd.f32 %v4069, %v4576
    %v4578 = vpop.f32.mrf.mxu0
    %4579 = vmatprep.mubr.bf16.mxu0 %v4412
    %4580 = vmatmul.mubr.bf16.gmra.mxu0 %v4411
    %v4581 = vpop.f32.mrf.mxu0
    %v4582 = vadd.f32 %v4074, %v4581
    %v4583 = vpop.f32.mrf.mxu0
    %v4584 = vpop.f32.mrf.mxu0
    %v4585 = vadd.f32 %v4079, %v4584
    %v4586 = vpop.f32.mrf.mxu0
    %4587 = vmatprep.mubr.bf16.mxu0 %v4416
    %4588 = vmatmul.mubr.bf16.gmra.mxu0 %v4415
    %v4589 = vpop.f32.mrf.mxu0
    %v4590 = vadd.f32 %v4084, %v4589
    %v4591 = vpop.f32.mrf.mxu0
    %v4592 = vpop.f32.mrf.mxu0
    %v4593 = vadd.f32 %v4089, %v4592
    %v4594 = vpop.f32.mrf.mxu0
    %4595 = vmatprep.mubr.bf16.mxu0 %v4420
    %4596 = vmatmul.mubr.bf16.gmra.mxu0 %v4419
    %v4597 = vpop.f32.mrf.mxu0
    %v4598 = vadd.f32 %v4094, %v4597
    %v4599 = vpop.f32.mrf.mxu0
    %v4600 = vpop.f32.mrf.mxu0
    %v4601 = vadd.f32 %v4099, %v4600
    %v4602 = vpop.f32.mrf.mxu0
    %4603 = vmatprep.mubr.bf16.mxu0 %v4424
    %4604 = vmatmul.mubr.bf16.gmra.mxu0 %v4423
    %v4605 = vpop.f32.mrf.mxu0
    %v4606 = vadd.f32 %v4104, %v4605
    %v4607 = vpop.f32.mrf.mxu0
    %v4608 = vpop.f32.mrf.mxu0
    %v4609 = vadd.f32 %v4109, %v4608
    %v4610 = vpop.f32.mrf.mxu0
    %4611 = vmatprep.mubr.bf16.mxu0 %v4428
    %4612 = vmatmul.mubr.bf16.gmra.mxu0 %v4427
    %v4613 = vpop.f32.mrf.mxu0
    %v4614 = vadd.f32 %v4114, %v4613
    %v4615 = vpop.f32.mrf.mxu0
    %v4616 = vpop.f32.mrf.mxu0
    %v4617 = vadd.f32 %v4119, %v4616
    %v4618 = vpop.f32.mrf.mxu0
    %4619 = vmatprep.mubr.bf16.mxu0 %v4432
    %4620 = vmatmul.mubr.bf16.gmra.mxu0 %v4431
    %v4621 = vpop.f32.mrf.mxu0
    %v4622 = vadd.f32 %v4124, %v4621
    %v4623 = vpop.f32.mrf.mxu0
    %v4624 = vpop.f32.mrf.mxu0
    %v4625 = vadd.f32 %v4129, %v4624
    %v4626 = vpop.f32.mrf.mxu0
    %4627 = vmatprep.mubr.bf16.mxu0 %v4436
    %4628 = vmatmul.mubr.bf16.gmra.mxu0 %v4435
    %v4629 = vpop.f32.mrf.mxu0
    %v4630 = vadd.f32 %v4134, %v4629
    %v4631 = vpop.f32.mrf.mxu0
    %v4632 = vpop.f32.mrf.mxu0
    %v4633 = vadd.f32 %v4139, %v4632
    %v4634 = vpop.f32.mrf.mxu0
    %4635 = vmatprep.mubr.bf16.mxu0 %v4440
    %4636 = vmatmul.mubr.bf16.gmra.mxu0 %v4439
    %v4637 = vpop.f32.mrf.mxu0
    %v4638 = vadd.f32 %v4144, %v4637
    %v4639 = vpop.f32.mrf.mxu0
    %v4640 = vpop.f32.mrf.mxu0
    %v4641 = vadd.f32 %v4149, %v4640
    %v4642 = vpop.f32.mrf.mxu0
    %4643 = vmatprep.mubr.bf16.mxu0 %v4444
    %4644 = vmatmul.mubr.bf16.gmra.mxu0 %v4443
    %v4645 = vpop.f32.mrf.mxu0
    %v4646 = vadd.f32 %v4154, %v4645
    %v4647 = vpop.f32.mrf.mxu0
    %v4648 = vpop.f32.mrf.mxu0
    %v4649 = vadd.f32 %v4159, %v4648
    %v4650 = vpop.f32.mrf.mxu0
    %4651 = vmatprep.mubr.bf16.mxu0 %v4448
    %4652 = vmatmul.mubr.bf16.gmra.mxu0 %v4447
    %v4653 = vpop.f32.mrf.mxu0
    %v4654 = vadd.f32 %v4164, %v4653
    %v4655 = vpop.f32.mrf.mxu0
    %v4656 = vpop.f32.mrf.mxu0
    %v4657 = vadd.f32 %v4169, %v4656
    %v4658 = vpop.f32.mrf.mxu0
    %4659 = vmatprep.mubr.bf16.mxu0 %v4452
    %4660 = vmatmul.mubr.bf16.gmra.mxu0 %v4451
    %v4661 = vpop.f32.mrf.mxu0
    %v4662 = vadd.f32 %v4174, %v4661
    %v4663 = vpop.f32.mrf.mxu0
    %v4664 = vpop.f32.mrf.mxu0
    %v4665 = vadd.f32 %v4179, %v4664
    %v4666 = vpop.f32.mrf.mxu0
    %4667 = vmatprep.mubr.bf16.mxu0 %v4456
    %4668 = vmatmul.mubr.bf16.gmra.mxu0 %v4455
    %v4669 = vpop.f32.mrf.mxu0
    %v4670 = vadd.f32 %v4184, %v4669
    %v4671 = vpop.f32.mrf.mxu0
    %v4672 = vpop.f32.mrf.mxu0
    %v4673 = vadd.f32 %v4189, %v4672
    %v4674 = vpop.f32.mrf.mxu0
    %4675 = vmatprep.mubr.bf16.mxu0 %v4460
    %4676 = vmatmul.mubr.bf16.gmra.mxu0 %v4459
    %v4677 = vpop.f32.mrf.mxu0
    %v4678 = vadd.f32 %v4194, %v4677
    %v4679 = vpop.f32.mrf.mxu0
    %v4680 = vpop.f32.mrf.mxu0
    %v4681 = vadd.f32 %v4199, %v4680
    %v4682 = vpop.f32.mrf.mxu0
    %4683 = vmatprep.mubr.bf16.mxu0 %v4464
    %4684 = vmatmul.mubr.bf16.gmra.mxu0 %v4463
    %v4685 = vpop.f32.mrf.mxu0
    %v4686 = vadd.f32 %v4204, %v4685
    %v4687 = vpop.f32.mrf.mxu0
    %v4688 = vpop.f32.mrf.mxu0
    %v4689 = vadd.f32 %v4209, %v4688
    %v4690 = vpop.f32.mrf.mxu0
    %4691 = vdwg.mxu0
    %4692 = vmatprep.subr.bf16.mxu0 0
    %4693 = vmatpush1.bf16.msra.mxu0 %v4010
    %4694 = vmatprep.subr.bf16.mxu0 0
    %4695 = vmatpush1.bf16.msra.mxu0 %v4009
    %4696 = vmatprep.subr.bf16.mxu0 0
    %4697 = vmatpush1.bf16.msra.mxu0 %v4008
    %4698 = vmatprep.subr.bf16.mxu0 0
    %4699 = vmatpush1.bf16.msra.mxu0 %v4007
    %4700 = vmatprep.subr.bf16.mxu0 0
    %4701 = vmatpush1.bf16.msra.mxu0 %v4006
    %4702 = vmatprep.subr.bf16.mxu0 0
    %4703 = vmatpush1.bf16.msra.mxu0 %v4005
    %4704 = vmatprep.subr.bf16.mxu0 0
    %4705 = vmatpush1.bf16.msra.mxu0 %v4004
    %4706 = vmatprep.subr.bf16.mxu0 0
    %4707 = vmatpush1.bf16.msra.mxu0 %v4003
    %4708 = vmatprep.subr.bf16.mxu0 0
    %4709 = vmatpush2.bf16.msra.mxu0 %v4018
    %4710 = vmatprep.subr.bf16.mxu0 0
    %4711 = vmatpush2.bf16.msra.mxu0 %v4017
    %4712 = vmatprep.subr.bf16.mxu0 0
    %4713 = vmatpush2.bf16.msra.mxu0 %v4016
    %4714 = vmatprep.subr.bf16.mxu0 0
    %4715 = vmatpush2.bf16.msra.mxu0 %v4015
    %4716 = vmatprep.subr.bf16.mxu0 0
    %4717 = vmatpush2.bf16.msra.mxu0 %v4014
    %4718 = vmatprep.subr.bf16.mxu0 0
    %4719 = vmatpush2.bf16.msra.mxu0 %v4013
    %4720 = vmatprep.subr.bf16.mxu0 0
    %4721 = vmatpush2.bf16.msra.mxu0 %v4012
    %4722 = vmatprep.subr.bf16.mxu0 0
    %4723 = vmatpush2.bf16.msra.mxu0 %v4011
    %4724 = vmatprep.mubr.bf16.mxu0 %v4406
    %4725 = vmatmul.mubr.bf16.gmra.mxu0 %v4405
    %v4726 = vpop.f32.mrf.mxu0
    %v4727 = vadd.f32 %v4566, %v4726
    %v4728 = vpop.f32.mrf.mxu0
    %v4729 = vpop.f32.mrf.mxu0
    %v4730 = vadd.f32 %v4569, %v4729
    %v4731 = vpop.f32.mrf.mxu0
    %4732 = vmatprep.mubr.bf16.mxu0 %v4410
    %4733 = vmatmul.mubr.bf16.gmra.mxu0 %v4409
    %v4734 = vpop.f32.mrf.mxu0
    %v4735 = vadd.f32 %v4574, %v4734
    %v4736 = vpop.f32.mrf.mxu0
    %v4737 = vpop.f32.mrf.mxu0
    %v4738 = vadd.f32 %v4577, %v4737
    %v4739 = vpop.f32.mrf.mxu0
    %4740 = vmatprep.mubr.bf16.mxu0 %v4414
    %4741 = vmatmul.mubr.bf16.gmra.mxu0 %v4413
    %v4742 = vpop.f32.mrf.mxu0
    %v4743 = vadd.f32 %v4582, %v4742
    %v4744 = vpop.f32.mrf.mxu0
    %v4745 = vpop.f32.mrf.mxu0
    %v4746 = vadd.f32 %v4585, %v4745
    %v4747 = vpop.f32.mrf.mxu0
    %4748 = vmatprep.mubr.bf16.mxu0 %v4418
    %4749 = vmatmul.mubr.bf16.gmra.mxu0 %v4417
    %v4750 = vpop.f32.mrf.mxu0
    %v4751 = vadd.f32 %v4590, %v4750
    %v4752 = vpop.f32.mrf.mxu0
    %v4753 = vpop.f32.mrf.mxu0
    %v4754 = vadd.f32 %v4593, %v4753
    %v4755 = vpop.f32.mrf.mxu0
    %4756 = vmatprep.mubr.bf16.mxu0 %v4422
    %4757 = vmatmul.mubr.bf16.gmra.mxu0 %v4421
    %v4758 = vpop.f32.mrf.mxu0
    %v4759 = vadd.f32 %v4598, %v4758
    %v4760 = vpop.f32.mrf.mxu0
    %v4761 = vpop.f32.mrf.mxu0
    %v4762 = vadd.f32 %v4601, %v4761
    %v4763 = vpop.f32.mrf.mxu0
    %4764 = vmatprep.mubr.bf16.mxu0 %v4426
    %4765 = vmatmul.mubr.bf16.gmra.mxu0 %v4425
    %v4766 = vpop.f32.mrf.mxu0
    %v4767 = vadd.f32 %v4606, %v4766
    %v4768 = vpop.f32.mrf.mxu0
    %v4769 = vpop.f32.mrf.mxu0
    %v4770 = vadd.f32 %v4609, %v4769
    %v4771 = vpop.f32.mrf.mxu0
    %4772 = vmatprep.mubr.bf16.mxu0 %v4430
    %4773 = vmatmul.mubr.bf16.gmra.mxu0 %v4429
    %v4774 = vpop.f32.mrf.mxu0
    %v4775 = vadd.f32 %v4614, %v4774
    %v4776 = vpop.f32.mrf.mxu0
    %v4777 = vpop.f32.mrf.mxu0
    %v4778 = vadd.f32 %v4617, %v4777
    %v4779 = vpop.f32.mrf.mxu0
    %4780 = vmatprep.mubr.bf16.mxu0 %v4434
    %4781 = vmatmul.mubr.bf16.gmra.mxu0 %v4433
    %v4782 = vpop.f32.mrf.mxu0
    %v4783 = vadd.f32 %v4622, %v4782
    %v4784 = vpop.f32.mrf.mxu0
    %v4785 = vpop.f32.mrf.mxu0
    %v4786 = vadd.f32 %v4625, %v4785
    %v4787 = vpop.f32.mrf.mxu0
    %4788 = vmatprep.mubr.bf16.mxu0 %v4438
    %4789 = vmatmul.mubr.bf16.gmra.mxu0 %v4437
    %v4790 = vpop.f32.mrf.mxu0
    %v4791 = vadd.f32 %v4630, %v4790
    %v4792 = vpop.f32.mrf.mxu0
    %v4793 = vpop.f32.mrf.mxu0
    %v4794 = vadd.f32 %v4633, %v4793
    %v4795 = vpop.f32.mrf.mxu0
    %4796 = vmatprep.mubr.bf16.mxu0 %v4442
    %4797 = vmatmul.mubr.bf16.gmra.mxu0 %v4441
    %v4798 = vpop.f32.mrf.mxu0
    %v4799 = vadd.f32 %v4638, %v4798
    %v4800 = vpop.f32.mrf.mxu0
    %v4801 = vpop.f32.mrf.mxu0
    %v4802 = vadd.f32 %v4641, %v4801
    %v4803 = vpop.f32.mrf.mxu0
    %4804 = vmatprep.mubr.bf16.mxu0 %v4446
    %4805 = vmatmul.mubr.bf16.gmra.mxu0 %v4445
    %v4806 = vpop.f32.mrf.mxu0
    %v4807 = vadd.f32 %v4646, %v4806
    %v4808 = vpop.f32.mrf.mxu0
    %v4809 = vpop.f32.mrf.mxu0
    %v4810 = vadd.f32 %v4649, %v4809
    %v4811 = vpop.f32.mrf.mxu0
    %4812 = vmatprep.mubr.bf16.mxu0 %v4450
    %4813 = vmatmul.mubr.bf16.gmra.mxu0 %v4449
    %v4814 = vpop.f32.mrf.mxu0
    %v4815 = vadd.f32 %v4654, %v4814
    %v4816 = vpop.f32.mrf.mxu0
    %v4817 = vpop.f32.mrf.mxu0
    %v4818 = vadd.f32 %v4657, %v4817
    %v4819 = vpop.f32.mrf.mxu0
    %4820 = vmatprep.mubr.bf16.mxu0 %v4454
    %4821 = vmatmul.mubr.bf16.gmra.mxu0 %v4453
    %v4822 = vpop.f32.mrf.mxu0
    %v4823 = vadd.f32 %v4662, %v4822
    %v4824 = vpop.f32.mrf.mxu0
    %v4825 = vpop.f32.mrf.mxu0
    %v4826 = vadd.f32 %v4665, %v4825
    %v4827 = vpop.f32.mrf.mxu0
    %4828 = vmatprep.mubr.bf16.mxu0 %v4458
    %4829 = vmatmul.mubr.bf16.gmra.mxu0 %v4457
    %v4830 = vpop.f32.mrf.mxu0
    %v4831 = vadd.f32 %v4670, %v4830
    %v4832 = vpop.f32.mrf.mxu0
    %v4833 = vpop.f32.mrf.mxu0
    %v4834 = vadd.f32 %v4673, %v4833
    %v4835 = vpop.f32.mrf.mxu0
    %4836 = vmatprep.mubr.bf16.mxu0 %v4462
    %4837 = vmatmul.mubr.bf16.gmra.mxu0 %v4461
    %v4838 = vpop.f32.mrf.mxu0
    %v4839 = vadd.f32 %v4678, %v4838
    %v4840 = vpop.f32.mrf.mxu0
    %v4841 = vpop.f32.mrf.mxu0
    %v4842 = vadd.f32 %v4681, %v4841
    %v4843 = vpop.f32.mrf.mxu0
    %4844 = vmatprep.mubr.bf16.mxu0 %v4466
    %4845 = vmatmul.mubr.bf16.gmra.mxu0 %v4465
    %v4846 = vpop.f32.mrf.mxu0
    %v4847 = vadd.f32 %v4686, %v4846
    %v4848 = vpop.f32.mrf.mxu0
    %v4849 = vpop.f32.mrf.mxu0
    %v4850 = vadd.f32 %v4689, %v4849
    %v4851 = vpop.f32.mrf.mxu0
    %4852 = vdwg.mxu0
    %v4853 = vxor.u32 %v4727, 2147483648
    %v4854 = vxor.u32 %v4730, 2147483648
    %v4855 = vxor.u32 %v4735, 2147483648
    %v4856 = vxor.u32 %v4738, 2147483648
    %v4857 = vxor.u32 %v4743, 2147483648
    %v4858 = vxor.u32 %v4746, 2147483648
    %v4859 = vxor.u32 %v4751, 2147483648
    %v4860 = vxor.u32 %v4754, 2147483648
    %v4861 = vxor.u32 %v4759, 2147483648
    %v4862 = vxor.u32 %v4762, 2147483648
    %v4863 = vxor.u32 %v4767, 2147483648
    %v4864 = vxor.u32 %v4770, 2147483648
    %v4865 = vxor.u32 %v4775, 2147483648
    %v4866 = vxor.u32 %v4778, 2147483648
    %v4867 = vxor.u32 %v4783, 2147483648
    %v4868 = vxor.u32 %v4786, 2147483648
    %v4869 = vxor.u32 %v4791, 2147483648
    %v4870 = vxor.u32 %v4794, 2147483648
    %v4871 = vxor.u32 %v4799, 2147483648
    %v4872 = vxor.u32 %v4802, 2147483648
    %v4873 = vxor.u32 %v4807, 2147483648
    %v4874 = vxor.u32 %v4810, 2147483648
    %v4875 = vxor.u32 %v4815, 2147483648
    %v4876 = vxor.u32 %v4818, 2147483648
    %v4877 = vxor.u32 %v4823, 2147483648
    %v4878 = vxor.u32 %v4826, 2147483648
    %v4879 = vxor.u32 %v4831, 2147483648
    %v4880 = vxor.u32 %v4834, 2147483648
    %v4881 = vxor.u32 %v4839, 2147483648
    %v4882 = vxor.u32 %v4842, 2147483648
    %v4883 = vxor.u32 %v4847, 2147483648
    %v4884 = vxor.u32 %v4850, 2147483648
    %v4885 = vmul.f32 %v4853, 1.442695
    %v4886 = vpow.pop %v4885
    %v4887 = vmul.f32 %v4854, 1.442695
    %v4888 = vpow.pop %v4887
    %v4889 = vmul.f32 %v4855, 1.442695
    %v4890 = vpow.pop %v4889
    %v4891 = vmul.f32 %v4856, 1.442695
    %v4892 = vpow.pop %v4891
    %v4893 = vmul.f32 %v4857, 1.442695
    %v4894 = vpow.pop %v4893
    %v4895 = vmul.f32 %v4858, 1.442695
    %v4896 = vpow.pop %v4895
    %v4897 = vmul.f32 %v4859, 1.442695
    %v4898 = vpow.pop %v4897
    %v4899 = vmul.f32 %v4860, 1.442695
    %v4900 = vpow.pop %v4899
    %v4901 = vmul.f32 %v4861, 1.442695
    %v4902 = vpow.pop %v4901
    %v4903 = vmul.f32 %v4862, 1.442695
    %v4904 = vpow.pop %v4903
    %v4905 = vmul.f32 %v4863, 1.442695
    %v4906 = vpow.pop %v4905
    %v4907 = vmul.f32 %v4864, 1.442695
    %v4908 = vpow.pop %v4907
    %v4909 = vmul.f32 %v4865, 1.442695
    %v4910 = vpow.pop %v4909
    %v4911 = vmul.f32 %v4866, 1.442695
    %v4912 = vpow.pop %v4911
    %v4913 = vmul.f32 %v4867, 1.442695
    %v4914 = vpow.pop %v4913
    %v4915 = vmul.f32 %v4868, 1.442695
    %v4916 = vpow.pop %v4915
    %v4917 = vmul.f32 %v4869, 1.442695
    %v4918 = vpow.pop %v4917
    %v4919 = vmul.f32 %v4870, 1.442695
    %v4920 = vpow.pop %v4919
    %v4921 = vmul.f32 %v4871, 1.442695
    %v4922 = vpow.pop %v4921
    %v4923 = vmul.f32 %v4872, 1.442695
    %v4924 = vpow.pop %v4923
    %v4925 = vmul.f32 %v4873, 1.442695
    %v4926 = vpow.pop %v4925
    %v4927 = vmul.f32 %v4874, 1.442695
    %v4928 = vpow.pop %v4927
    %v4929 = vmul.f32 %v4875, 1.442695
    %v4930 = vpow.pop %v4929
    %v4931 = vmul.f32 %v4876, 1.442695
    %v4932 = vpow.pop %v4931
    %v4933 = vmul.f32 %v4877, 1.442695
    %v4934 = vpow.pop %v4933
    %v4935 = vmul.f32 %v4878, 1.442695
    %v4936 = vpow.pop %v4935
    %v4937 = vmul.f32 %v4879, 1.442695
    %v4938 = vpow.pop %v4937
    %v4939 = vmul.f32 %v4880, 1.442695
    %v4940 = vpow.pop %v4939
    %v4941 = vmul.f32 %v4881, 1.442695
    %v4942 = vpow.pop %v4941
    %v4943 = vmul.f32 %v4882, 1.442695
    %v4944 = vpow.pop %v4943
    %v4945 = vmul.f32 %v4883, 1.442695
    %v4946 = vpow.pop %v4945
    %v4947 = vmul.f32 %v4884, 1.442695
    %v4948 = vpow.pop %v4947
    %v4949 = vadd.f32 %v4886, 1.0
    %v4950 = vadd.f32 %v4888, 1.0
    %v4951 = vadd.f32 %v4890, 1.0
    %v4952 = vadd.f32 %v4892, 1.0
    %v4953 = vadd.f32 %v4894, 1.0
    %v4954 = vadd.f32 %v4896, 1.0
    %v4955 = vadd.f32 %v4898, 1.0
    %v4956 = vadd.f32 %v4900, 1.0
    %v4957 = vadd.f32 %v4902, 1.0
    %v4958 = vadd.f32 %v4904, 1.0
    %v4959 = vadd.f32 %v4906, 1.0
    %v4960 = vadd.f32 %v4908, 1.0
    %v4961 = vadd.f32 %v4910, 1.0
    %v4962 = vadd.f32 %v4912, 1.0
    %v4963 = vadd.f32 %v4914, 1.0
    %v4964 = vadd.f32 %v4916, 1.0
    %v4965 = vadd.f32 %v4918, 1.0
    %v4966 = vadd.f32 %v4920, 1.0
    %v4967 = vadd.f32 %v4922, 1.0
    %v4968 = vadd.f32 %v4924, 1.0
    %v4969 = vadd.f32 %v4926, 1.0
    %v4970 = vadd.f32 %v4928, 1.0
    %v4971 = vadd.f32 %v4930, 1.0
    %v4972 = vadd.f32 %v4932, 1.0
    %v4973 = vadd.f32 %v4934, 1.0
    %v4974 = vadd.f32 %v4936, 1.0
    %v4975 = vadd.f32 %v4938, 1.0
    %v4976 = vadd.f32 %v4940, 1.0
    %v4977 = vadd.f32 %v4942, 1.0
    %v4978 = vadd.f32 %v4944, 1.0
    %v4979 = vadd.f32 %v4946, 1.0
    %v4980 = vadd.f32 %v4948, 1.0
    %v4981 = vrcp.pop %v4949
    %v4982 = vmul.f32 1.0, %v4981
    %v4983 = vrcp.pop %v4950
    %v4984 = vmul.f32 1.0, %v4983
    %v4985 = vrcp.pop %v4951
    %v4986 = vmul.f32 1.0, %v4985
    %v4987 = vrcp.pop %v4952
    %v4988 = vmul.f32 1.0, %v4987
    %v4989 = vrcp.pop %v4953
    %v4990 = vmul.f32 1.0, %v4989
    %v4991 = vrcp.pop %v4954
    %v4992 = vmul.f32 1.0, %v4991
    %v4993 = vrcp.pop %v4955
    %v4994 = vmul.f32 1.0, %v4993
    %v4995 = vrcp.pop %v4956
    %v4996 = vmul.f32 1.0, %v4995
    %v4997 = vrcp.pop %v4957
    %v4998 = vmul.f32 1.0, %v4997
    %v4999 = vrcp.pop %v4958
    %v5000 = vmul.f32 1.0, %v4999
    %v5001 = vrcp.pop %v4959
    %v5002 = vmul.f32 1.0, %v5001
    %v5003 = vrcp.pop %v4960
    %v5004 = vmul.f32 1.0, %v5003
    %v5005 = vrcp.pop %v4961
    %v5006 = vmul.f32 1.0, %v5005
    %v5007 = vrcp.pop %v4962
    %v5008 = vmul.f32 1.0, %v5007
    %v5009 = vrcp.pop %v4963
    %v5010 = vmul.f32 1.0, %v5009
    %v5011 = vrcp.pop %v4964
    %v5012 = vmul.f32 1.0, %v5011
    %v5013 = vrcp.pop %v4965
    %v5014 = vmul.f32 1.0, %v5013
    %v5015 = vrcp.pop %v4966
    %v5016 = vmul.f32 1.0, %v5015
    %v5017 = vrcp.pop %v4967
    %v5018 = vmul.f32 1.0, %v5017
    %v5019 = vrcp.pop %v4968
    %v5020 = vmul.f32 1.0, %v5019
    %v5021 = vrcp.pop %v4969
    %v5022 = vmul.f32 1.0, %v5021
    %v5023 = vrcp.pop %v4970
    %v5024 = vmul.f32 1.0, %v5023
    %v5025 = vrcp.pop %v4971
    %v5026 = vmul.f32 1.0, %v5025
    %v5027 = vrcp.pop %v4972
    %v5028 = vmul.f32 1.0, %v5027
    %v5029 = vrcp.pop %v4973
    %v5030 = vmul.f32 1.0, %v5029
    %v5031 = vrcp.pop %v4974
    %v5032 = vmul.f32 1.0, %v5031
    %v5033 = vrcp.pop %v4975
    %v5034 = vmul.f32 1.0, %v5033
    %v5035 = vrcp.pop %v4976
    %v5036 = vmul.f32 1.0, %v5035
    %v5037 = vrcp.pop %v4977
    %v5038 = vmul.f32 1.0, %v5037
    %v5039 = vrcp.pop %v4978
    %v5040 = vmul.f32 1.0, %v5039
    %v5041 = vrcp.pop %v4979
    %v5042 = vmul.f32 1.0, %v5041
    %v5043 = vrcp.pop %v4980
    %v5044 = vmul.f32 1.0, %v5043
    %v5045 = vadd.f32 %v4982, -0.8
    %v5046 = vadd.f32 %v4984, -0.8
    %v5047 = vadd.f32 %v4986, -0.8
    %v5048 = vadd.f32 %v4988, -0.8
    %v5049 = vadd.f32 %v4990, -0.8
    %v5050 = vadd.f32 %v4992, -0.8
    %v5051 = vadd.f32 %v4994, -0.8
    %v5052 = vadd.f32 %v4996, -0.8
    %v5053 = vadd.f32 %v4998, -0.8
    %v5054 = vadd.f32 %v5000, -0.8
    %v5055 = vadd.f32 %v5002, -0.8
    %v5056 = vadd.f32 %v5004, -0.8
    %v5057 = vmul.f32 %v5006, 2.0
    %v5058 = vmul.f32 %v5008, 2.0
    %v5059 = vmul.f32 %v5010, 2.0
    %v5060 = vmul.f32 %v5012, 2.0
    %v5061 = vadd.f32 %v5057, -1.0
    %v5062 = vadd.f32 %v5058, -1.0
    %v5063 = vadd.f32 %v5059, -1.0
    %v5064 = vadd.f32 %v5060, -1.0
    %v5065 = vmul.f32 %v5014, 2.0
    %v5066 = vmul.f32 %v5016, 2.0
    %v5067 = vmul.f32 %v5018, 2.0
    %v5068 = vmul.f32 %v5020, 2.0
    %v5069 = vadd.f32 %v5065, -1.0
    %v5070 = vadd.f32 %v5066, -1.0
    %v5071 = vadd.f32 %v5067, -1.0
    %v5072 = vadd.f32 %v5068, -1.0
    %v5073 = vmul.f32 %v5022, 2.0
    %v5074 = vmul.f32 %v5024, 2.0
    %v5075 = vmul.f32 %v5026, 2.0
    %v5076 = vmul.f32 %v5028, 2.0
    %v5077 = vadd.f32 %v5073, -1.0
    %v5078 = vadd.f32 %v5074, -1.0
    %v5079 = vadd.f32 %v5075, -1.0
    %v5080 = vadd.f32 %v5076, -1.0
    %v5081 = vmul.f32 %v5030, 0.1
    %v5082 = vmul.f32 %v5032, 0.1
    %v5083 = vmul.f32 %v5034, 0.1
    %v5084 = vmul.f32 %v5036, 0.1
    %v5085 = vadd.f32 %v5081, 0.1
    %v5086 = vadd.f32 %v5082, 0.1
    %v5087 = vadd.f32 %v5083, 0.1
    %v5088 = vadd.f32 %v5084, 0.1
    %v5089 = vmul.f32 %v5038, 0.1
    %v5090 = vmul.f32 %v5040, 0.1
    %v5091 = vmul.f32 %v5042, 0.1
    %v5092 = vmul.f32 %v5044, 0.1
    %v5093 = vadd.f32 %v5089, 0.1
    %v5094 = vadd.f32 %v5090, 0.1
    %v5095 = vadd.f32 %v5091, 0.1
    %v5096 = vadd.f32 %v5092, 0.1
    %v5097 = vlaneseq
    %v5098 = vand.u32 %v5097, 127
    %vm5099 = vcmp.eq.s32.totalorder %v5098, 0
    %5101 = vset.pattern.permute.xlu0 0
    %5102 = vperm.xlu0 %5101, %v5045
    %v5103 = vpop.permute.xlu0 %5102
    %5106 = vset.pattern.permute.xlu0 0
    %5107 = vperm.xlu0 %5106, %v5046
    %v5108 = vpop.permute.xlu0 %5107
    %5111 = vset.pattern.permute.xlu0 0
    %5112 = vperm.xlu0 %5111, %v5047
    %v5113 = vpop.permute.xlu0 %5112
    %5116 = vset.pattern.permute.xlu0 0
    %5117 = vperm.xlu0 %5116, %v5048
    %v5118 = vpop.permute.xlu0 %5117
    %v5120 = vsel %vm5099, %v5103, 0.0
    %v5121 = vsel %vm5099, %v5108, 0.0
    %v5122 = vsel %vm5099, %v5113, 0.0
    %v5123 = vsel %vm5099, %v5118, 0.0
    %vm5124 = vcmp.eq.s32.totalorder %v5098, 1
    %5126 = vset.pattern.permute.xlu0 0
    %5127 = vperm.xlu0 %5126, %v5049
    %v5128 = vpop.permute.xlu0 %5127
    %5131 = vset.pattern.permute.xlu0 0
    %5132 = vperm.xlu0 %5131, %v5050
    %v5133 = vpop.permute.xlu0 %5132
    %5136 = vset.pattern.permute.xlu0 0
    %5137 = vperm.xlu0 %5136, %v5051
    %v5138 = vpop.permute.xlu0 %5137
    %5141 = vset.pattern.permute.xlu0 0
    %5142 = vperm.xlu0 %5141, %v5052
    %v5143 = vpop.permute.xlu0 %5142
    %v5145 = vsel %vm5124, %v5128, %v5120
    %v5146 = vsel %vm5124, %v5133, %v5121
    %v5147 = vsel %vm5124, %v5138, %v5122
    %v5148 = vsel %vm5124, %v5143, %v5123
    %vm5149 = vcmp.eq.s32.totalorder %v5098, 2
    %5151 = vset.pattern.permute.xlu0 0
    %5152 = vperm.xlu0 %5151, %v5053
    %v5153 = vpop.permute.xlu0 %5152
    %5156 = vset.pattern.permute.xlu0 0
    %5157 = vperm.xlu0 %5156, %v5054
    %v5158 = vpop.permute.xlu0 %5157
    %5161 = vset.pattern.permute.xlu0 0
    %5162 = vperm.xlu0 %5161, %v5055
    %v5163 = vpop.permute.xlu0 %5162
    %5166 = vset.pattern.permute.xlu0 0
    %5167 = vperm.xlu0 %5166, %v5056
    %v5168 = vpop.permute.xlu0 %5167
    %v5170 = vsel %vm5149, %v5153, %v5145
    %v5171 = vsel %vm5149, %v5158, %v5146
    %v5172 = vsel %vm5149, %v5163, %v5147
    %v5173 = vsel %vm5149, %v5168, %v5148
    %vm5174 = vcmp.eq.s32.totalorder %v5098, 3
    %5176 = vset.pattern.permute.xlu0 0
    %5177 = vperm.xlu0 %5176, %v5061
    %v5178 = vpop.permute.xlu0 %5177
    %5181 = vset.pattern.permute.xlu0 0
    %5182 = vperm.xlu0 %5181, %v5062
    %v5183 = vpop.permute.xlu0 %5182
    %5186 = vset.pattern.permute.xlu0 0
    %5187 = vperm.xlu0 %5186, %v5063
    %v5188 = vpop.permute.xlu0 %5187
    %5191 = vset.pattern.permute.xlu0 0
    %5192 = vperm.xlu0 %5191, %v5064
    %v5193 = vpop.permute.xlu0 %5192
    %v5195 = vsel %vm5174, %v5178, %v5170
    %v5196 = vsel %vm5174, %v5183, %v5171
    %v5197 = vsel %vm5174, %v5188, %v5172
    %v5198 = vsel %vm5174, %v5193, %v5173
    %vm5199 = vcmp.eq.s32.totalorder %v5098, 4
    %5201 = vset.pattern.permute.xlu0 0
    %5202 = vperm.xlu0 %5201, %v5069
    %v5203 = vpop.permute.xlu0 %5202
    %5206 = vset.pattern.permute.xlu0 0
    %5207 = vperm.xlu0 %5206, %v5070
    %v5208 = vpop.permute.xlu0 %5207
    %5211 = vset.pattern.permute.xlu0 0
    %5212 = vperm.xlu0 %5211, %v5071
    %v5213 = vpop.permute.xlu0 %5212
    %5216 = vset.pattern.permute.xlu0 0
    %5217 = vperm.xlu0 %5216, %v5072
    %v5218 = vpop.permute.xlu0 %5217
    %v5220 = vsel %vm5199, %v5203, %v5195
    %v5221 = vsel %vm5199, %v5208, %v5196
    %v5222 = vsel %vm5199, %v5213, %v5197
    %v5223 = vsel %vm5199, %v5218, %v5198
    %vm5224 = vcmp.eq.s32.totalorder %v5098, 5
    %5226 = vset.pattern.permute.xlu0 0
    %5227 = vperm.xlu0 %5226, %v5077
    %v5228 = vpop.permute.xlu0 %5227
    %5231 = vset.pattern.permute.xlu0 0
    %5232 = vperm.xlu0 %5231, %v5078
    %v5233 = vpop.permute.xlu0 %5232
    %5236 = vset.pattern.permute.xlu0 0
    %5237 = vperm.xlu0 %5236, %v5079
    %v5238 = vpop.permute.xlu0 %5237
    %5241 = vset.pattern.permute.xlu0 0
    %5242 = vperm.xlu0 %5241, %v5080
    %v5243 = vpop.permute.xlu0 %5242
    %v5245 = vsel %vm5224, %v5228, %v5220
    %v5246 = vsel %vm5224, %v5233, %v5221
    %v5247 = vsel %vm5224, %v5238, %v5222
    %v5248 = vsel %vm5224, %v5243, %v5223
    %vm5249 = vcmp.eq.s32.totalorder %v5098, 6
    %5251 = vset.pattern.permute.xlu0 0
    %5252 = vperm.xlu0 %5251, %v5085
    %v5253 = vpop.permute.xlu0 %5252
    %5256 = vset.pattern.permute.xlu0 0
    %5257 = vperm.xlu0 %5256, %v5086
    %v5258 = vpop.permute.xlu0 %5257
    %5261 = vset.pattern.permute.xlu0 0
    %5262 = vperm.xlu0 %5261, %v5087
    %v5263 = vpop.permute.xlu0 %5262
    %5266 = vset.pattern.permute.xlu0 0
    %5267 = vperm.xlu0 %5266, %v5088
    %v5268 = vpop.permute.xlu0 %5267
    %v5270 = vsel %vm5249, %v5253, %v5245
    %v5271 = vsel %vm5249, %v5258, %v5246
    %v5272 = vsel %vm5249, %v5263, %v5247
    %v5273 = vsel %vm5249, %v5268, %v5248
    %vm5274 = vcmp.eq.s32.totalorder %v5098, 7
    %5276 = vset.pattern.permute.xlu0 0
    %5277 = vperm.xlu0 %5276, %v5093
    %v5278 = vpop.permute.xlu0 %5277
    %5281 = vset.pattern.permute.xlu0 0
    %5282 = vperm.xlu0 %5281, %v5094
    %v5283 = vpop.permute.xlu0 %5282
    %5286 = vset.pattern.permute.xlu0 0
    %5287 = vperm.xlu0 %5286, %v5095
    %v5288 = vpop.permute.xlu0 %5287
    %5291 = vset.pattern.permute.xlu0 0
    %5292 = vperm.xlu0 %5291, %v5096
    %v5293 = vpop.permute.xlu0 %5292
    %v5295 = vsel %vm5274, %v5278, %v5270
    %v5296 = vsel %vm5274, %v5283, %v5271
    %v5297 = vsel %vm5274, %v5288, %v5272
    %v5298 = vsel %vm5274, %v5293, %v5273
    %vm5299 = vcmask 64512
    %5300 = vst.msk [vmem:[%s9] sm:$0xff] %vm5299, %v5295
    %5301 = vst.msk [vmem:[%s9 + $0x8] sm:$0xff] %vm5299, %v5296
    %5302 = vst.msk [vmem:[%s9 + $0x10] sm:$0xff] %vm5299, %v5297
    %5303 = vst.msk [vmem:[%s9 + $0x18] sm:$0xff] %vm5299, %v5298
    %v5304 = vld [vmem:[%s1] sm:$0x1]
    %v5305 = vld [vmem:[%s1 + $0x1] sm:$0x1]
    %v5306 = vld [vmem:[%s1 + $0x2] sm:$0x1]
    %v5307 = vmul.f32 %v5061, %v5061
    %v5308 = vmul.f32 %v5062, %v5062
    %v5309 = vmul.f32 %v5063, %v5063
    %v5310 = vmul.f32 %v5064, %v5064
    %v5311 = vmul.f32 %v5069, %v5069
    %v5312 = vmul.f32 %v5070, %v5070
    %v5313 = vmul.f32 %v5071, %v5071
    %v5314 = vmul.f32 %v5072, %v5072
    %v5315 = vadd.f32 %v5307, %v5311
    %v5316 = vadd.f32 %v5308, %v5312
    %v5317 = vadd.f32 %v5309, %v5313
    %v5318 = vadd.f32 %v5310, %v5314
    %v5319 = vmul.f32 %v5077, %v5077
    %v5320 = vmul.f32 %v5078, %v5078
    %v5321 = vmul.f32 %v5079, %v5079
    %v5322 = vmul.f32 %v5080, %v5080
    %v5323 = vadd.f32 %v5315, %v5319
    %v5324 = vadd.f32 %v5316, %v5320
    %v5325 = vadd.f32 %v5317, %v5321
    %v5326 = vadd.f32 %v5318, %v5322
    %v5327 = vadd.f32 %v5323, 1e-12
    %v5328 = vadd.f32 %v5324, 1e-12
    %v5329 = vadd.f32 %v5325, 1e-12
    %v5330 = vadd.f32 %v5326, 1e-12
    %v5331 = vrsqrt.pop %v5327
    %v5332 = vrsqrt.pop %v5328
    %v5333 = vrsqrt.pop %v5329
    %v5334 = vrsqrt.pop %v5330
    %v5335 = vmul.f32 %v5061, %v5331
    %v5336 = vmul.f32 %v5062, %v5332
    %v5337 = vmul.f32 %v5063, %v5333
    %v5338 = vmul.f32 %v5064, %v5334
    %v5339 = vmul.f32 %v5069, %v5331
    %v5340 = vmul.f32 %v5070, %v5332
    %v5341 = vmul.f32 %v5071, %v5333
    %v5342 = vmul.f32 %v5072, %v5334
    %v5343 = vmul.f32 %v5077, %v5331
    %v5344 = vmul.f32 %v5078, %v5332
    %v5345 = vmul.f32 %v5079, %v5333
    %v5346 = vmul.f32 %v5080, %v5334
    %v5347 = vlaneseq
    %v5348 = vshrl.u32 %v5347, 7
    %v5349 = vsub.s32 0, %v5348
    %v5350 = vrot.slane %v5304, %v5349
    %v5351 = vsub.f32 %v5350, %v5103
    %v5352 = vsub.f32 %v5350, %v5108
    %v5353 = vsub.f32 %v5350, %v5113
    %v5354 = vsub.f32 %v5350, %v5118
    %v5355 = vlaneseq
    %v5356 = vshrl.u32 %v5355, 7
    %v5357 = vsub.s32 0, %v5356
    %v5358 = vrot.slane %v5305, %v5357
    %v5359 = vsub.f32 %v5358, %v5128
    %v5360 = vsub.f32 %v5358, %v5133
    %v5361 = vsub.f32 %v5358, %v5138
    %v5362 = vsub.f32 %v5358, %v5143
    %v5363 = vlaneseq
    %v5364 = vshrl.u32 %v5363, 7
    %v5365 = vsub.s32 0, %v5364
    %v5366 = vrot.slane %v5306, %v5365
    %v5367 = vsub.f32 %v5366, %v5153
    %v5368 = vsub.f32 %v5366, %v5158
    %v5369 = vsub.f32 %v5366, %v5163
    %v5370 = vsub.f32 %v5366, %v5168
    %5372 = vset.pattern.permute.xlu0 0
    %5373 = vperm.xlu0 %5372, %v5335
    %v5374 = vpop.permute.xlu0 %5373
    %5377 = vset.pattern.permute.xlu0 0
    %5378 = vperm.xlu0 %5377, %v5336
    %v5379 = vpop.permute.xlu0 %5378
    %5382 = vset.pattern.permute.xlu0 0
    %5383 = vperm.xlu0 %5382, %v5337
    %v5384 = vpop.permute.xlu0 %5383
    %5387 = vset.pattern.permute.xlu0 0
    %5388 = vperm.xlu0 %5387, %v5338
    %v5389 = vpop.permute.xlu0 %5388
    %v5391 = vmul.f32 %v5351, %v5374
    %v5392 = vmul.f32 %v5352, %v5379
    %v5393 = vmul.f32 %v5353, %v5384
    %v5394 = vmul.f32 %v5354, %v5389
    %5396 = vset.pattern.permute.xlu0 0
    %5397 = vperm.xlu0 %5396, %v5339
    %v5398 = vpop.permute.xlu0 %5397
    %5401 = vset.pattern.permute.xlu0 0
    %5402 = vperm.xlu0 %5401, %v5340
    %v5403 = vpop.permute.xlu0 %5402
    %5406 = vset.pattern.permute.xlu0 0
    %5407 = vperm.xlu0 %5406, %v5341
    %v5408 = vpop.permute.xlu0 %5407
    %5411 = vset.pattern.permute.xlu0 0
    %5412 = vperm.xlu0 %5411, %v5342
    %v5413 = vpop.permute.xlu0 %5412
    %v5415 = vmul.f32 %v5359, %v5398
    %v5416 = vmul.f32 %v5360, %v5403
    %v5417 = vmul.f32 %v5361, %v5408
    %v5418 = vmul.f32 %v5362, %v5413
    %v5419 = vadd.f32 %v5391, %v5415
    %v5420 = vadd.f32 %v5392, %v5416
    %v5421 = vadd.f32 %v5393, %v5417
    %v5422 = vadd.f32 %v5394, %v5418
    %5424 = vset.pattern.permute.xlu0 0
    %5425 = vperm.xlu0 %5424, %v5343
    %v5426 = vpop.permute.xlu0 %5425
    %5429 = vset.pattern.permute.xlu0 0
    %5430 = vperm.xlu0 %5429, %v5344
    %v5431 = vpop.permute.xlu0 %5430
    %5434 = vset.pattern.permute.xlu0 0
    %5435 = vperm.xlu0 %5434, %v5345
    %v5436 = vpop.permute.xlu0 %5435
    %5439 = vset.pattern.permute.xlu0 0
    %5440 = vperm.xlu0 %5439, %v5346
    %v5441 = vpop.permute.xlu0 %5440
    %v5443 = vmul.f32 %v5367, %v5426
    %v5444 = vmul.f32 %v5368, %v5431
    %v5445 = vmul.f32 %v5369, %v5436
    %v5446 = vmul.f32 %v5370, %v5441
    %v5447 = vadd.f32 %v5419, %v5443
    %v5448 = vadd.f32 %v5420, %v5444
    %v5449 = vadd.f32 %v5421, %v5445
    %v5450 = vadd.f32 %v5422, %v5446
    %v5451 = vmul.f32 %v5447, %v5374
    %v5452 = vmul.f32 %v5448, %v5379
    %v5453 = vmul.f32 %v5449, %v5384
    %v5454 = vmul.f32 %v5450, %v5389
    %v5455 = vsub.f32 %v5351, %v5451
    %v5456 = vsub.f32 %v5352, %v5452
    %v5457 = vsub.f32 %v5353, %v5453
    %v5458 = vsub.f32 %v5354, %v5454
    %v5459 = vmul.f32 %v5447, %v5398
    %v5460 = vmul.f32 %v5448, %v5403
    %v5461 = vmul.f32 %v5449, %v5408
    %v5462 = vmul.f32 %v5450, %v5413
    %v5463 = vsub.f32 %v5359, %v5459
    %v5464 = vsub.f32 %v5360, %v5460
    %v5465 = vsub.f32 %v5361, %v5461
    %v5466 = vsub.f32 %v5362, %v5462
    %v5467 = vmul.f32 %v5447, %v5426
    %v5468 = vmul.f32 %v5448, %v5431
    %v5469 = vmul.f32 %v5449, %v5436
    %v5470 = vmul.f32 %v5450, %v5441
    %v5471 = vsub.f32 %v5367, %v5467
    %v5472 = vsub.f32 %v5368, %v5468
    %v5473 = vsub.f32 %v5369, %v5469
    %v5474 = vsub.f32 %v5370, %v5470
    %v5475 = vmul.f32 %v5455, %v5455
    %v5476 = vmul.f32 %v5456, %v5456
    %v5477 = vmul.f32 %v5457, %v5457
    %v5478 = vmul.f32 %v5458, %v5458
    %v5479 = vmul.f32 %v5463, %v5463
    %v5480 = vmul.f32 %v5464, %v5464
    %v5481 = vmul.f32 %v5465, %v5465
    %v5482 = vmul.f32 %v5466, %v5466
    %v5483 = vadd.f32 %v5475, %v5479
    %v5484 = vadd.f32 %v5476, %v5480
    %v5485 = vadd.f32 %v5477, %v5481
    %v5486 = vadd.f32 %v5478, %v5482
    %v5487 = vmul.f32 %v5471, %v5471
    %v5488 = vmul.f32 %v5472, %v5472
    %v5489 = vmul.f32 %v5473, %v5473
    %v5490 = vmul.f32 %v5474, %v5474
    %v5491 = vadd.f32 %v5483, %v5487
    %v5492 = vadd.f32 %v5484, %v5488
    %v5493 = vadd.f32 %v5485, %v5489
    %v5494 = vadd.f32 %v5486, %v5490
    %v5495 = vadd.f32 %v5491, 1e-12
    %v5496 = vadd.f32 %v5492, 1e-12
    %v5497 = vadd.f32 %v5493, 1e-12
    %v5498 = vadd.f32 %v5494, 1e-12
    %v5499 = vrsqrt.pop %v5495
    %v5500 = vrsqrt.pop %v5496
    %v5501 = vrsqrt.pop %v5497
    %v5502 = vrsqrt.pop %v5498
    %v5503 = vmul.f32 %v5491, %v5499
    %v5504 = vmul.f32 %v5492, %v5500
    %v5505 = vmul.f32 %v5493, %v5501
    %v5506 = vmul.f32 %v5494, %v5502
    %v5507 = vsub.f32 %v5503, %v5253
    %v5508 = vsub.f32 %v5504, %v5258
    %v5509 = vsub.f32 %v5505, %v5263
    %v5510 = vsub.f32 %v5506, %v5268
    %v5511 = vand.u32 2147483647, %v5447
    %v5512 = vand.u32 2147483647, %v5448
    %v5513 = vand.u32 2147483647, %v5449
    %v5514 = vand.u32 2147483647, %v5450
    %v5515 = vmul.f32 %v5093, 0.5
    %v5516 = vmul.f32 %v5094, 0.5
    %v5517 = vmul.f32 %v5095, 0.5
    %v5518 = vmul.f32 %v5096, 0.5
    %5520 = vset.pattern.permute.xlu0 0
    %5521 = vperm.xlu0 %5520, %v5515
    %v5522 = vpop.permute.xlu0 %5521
    %5525 = vset.pattern.permute.xlu0 0
    %5526 = vperm.xlu0 %5525, %v5516
    %v5527 = vpop.permute.xlu0 %5526
    %5530 = vset.pattern.permute.xlu0 0
    %5531 = vperm.xlu0 %5530, %v5517
    %v5532 = vpop.permute.xlu0 %5531
    %5535 = vset.pattern.permute.xlu0 0
    %5536 = vperm.xlu0 %5535, %v5518
    %v5537 = vpop.permute.xlu0 %5536
    %v5539 = vsub.f32 %v5511, %v5522
    %v5540 = vsub.f32 %v5512, %v5527
    %v5541 = vsub.f32 %v5513, %v5532
    %v5542 = vsub.f32 %v5514, %v5537
    %v5543 = vmax.f32 %v5507, %v5539
    %v5544 = vmax.f32 %v5508, %v5540
    %v5545 = vmax.f32 %v5509, %v5541
    %v5546 = vmax.f32 %v5510, %v5542
    %5547 = vst [vmem:[#allocation5] sm:$0xff] %v5543
    %5548 = vst [vmem:[#allocation5 + $0x8] sm:$0xff] %v5544
    %5549 = vst [vmem:[#allocation5 + $0x10] sm:$0xff] %v5545
    %5550 = vst [vmem:[#allocation5 + $0x18] sm:$0xff] %v5546
    // Predicated region
    $region38: #{cylinder_net_forward.1} parent=1 // pred_check
      _
    $region39: #{cylinder_net_forward.1} parent=1 // pred_check_branch
      %5552 = sbr.rel (0) target = $region41
    $region40: #{cylinder_net_forward.1} parent=1 // pred_region
      %s5554 = ssub.s32 512, 512
      %5555 = vsyncadd [#allocation4], %s5554
      %s5556 = sshll.u32 [#allocation5], 4
      %s5557 = int_to_ptr.vmem [resolvable:$true] %s5556
      %5562 = dma.vmem_to_hbm [thread:$0]  %s5557, 512, %s8, [#allocation4], 128, 128, 8
    $region41: #{cylinder_net_forward.1} parent=1 // pred_fallthru
      _
    // Predicated region
    $region42: #{cylinder_net_forward.1} parent=1 // pred_check
      _
    $region43: #{cylinder_net_forward.1} parent=1 // pred_check_branch
      %5564 = sbr.rel (0) target = $region45
    $region44: #{cylinder_net_forward.1} parent=1 // pred_region
      _
    $region45: #{cylinder_net_forward.1} parent=1 // pred_fallthru
      _
    // Predicated region
    $region46: #{cylinder_net_forward.1} parent=1 // pred_check
      _
    $region47: #{cylinder_net_forward.1} parent=1 // pred_check_branch
      %5566 = sbr.rel (0) target = $region49
    $region48: #{cylinder_net_forward.1} parent=1 // pred_region
      %5567 = dma.done [#allocation4], 512
    $region49: #{cylinder_net_forward.1} parent=1 // pred_fallthru
      _
    // Predicated region
    $region50: #{cylinder_net_forward.1} parent=1 // pred_check
      _
    $region51: #{cylinder_net_forward.1} parent=1 // pred_check_branch
      %5569 = sbr.rel (0) target = $region53
    $region52: #{cylinder_net_forward.1} parent=1 // pred_region
      _
    $region53: #{cylinder_net_forward.1} parent=1 // pred_fallthru
      _
    %5570 = vsyncpa [#allocation3], 1
    %5571 = vsyncpa [#allocation4], 1

</llo_original>
